<compile_context>
chip_gen: v5e
topology: v5e:2x2
jax: 0.10.0
libtpu: 0.0.40
codegen_flags: <defaults>
</compile_context>

<pallas_src>
import functools

import numpy as np
import jax
import jax.numpy as jnp
from jax import lax
from jax.experimental import pallas as pl
from jax.experimental.pallas import tpu as pltpu


def _round_up(x, m):
    return (x + m - 1) // m * m


def _fold_bn(gamma, beta, mean, var, eps=1e-5):
    scale = gamma / jnp.sqrt(var + eps)
    return scale, beta - mean * scale


def _make_layer_kernel(act, slope):
    def kernel(w_ref, x_ref, s_ref, b_ref, o_ref):
        # bf16 operands, f32 MXU accumulation; epilogue in f32, cast on store.
        acc = jnp.dot(w_ref[...], x_ref[...], preferred_element_type=jnp.float32)
        y = acc * s_ref[...] + b_ref[...]          # [Np,1] broadcast along lanes
        if act == "leaky":
            y = jnp.where(y > 0, y, slope * y)
        else:  # "tanh"
            y = jnp.tanh(y)
        o_ref[...] = y.astype(o_ref.dtype)
    return kernel


def _subpixel_weight(w_pt):
    """PyTorch ConvT weight [Ci, Co, 4, 4] -> sub-pixel matmul weight [4*Co, 4*Ci].

    A[(ry, rx, co), (a, b, ci)] = w_pt[ci, co, 3 - ry - 2a, 3 - rx - 2b]
    so that out[2*iy+ry, 2*ix+rx] = sum_{a,b,ci} xpad[iy+ry+a, ix+rx+b, ci] * A[...].
    """
    Ci, Co = w_pt.shape[0], w_pt.shape[1]
    wf = w_pt[:, :, ::-1, ::-1]                       # wf[ci,co,j,l] = w[ci,co,3-j,3-l]
    wf = wf.reshape(Ci, Co, 2, 2, 2, 2)               # (ci, co, a, ry, b, rx)
    return jnp.transpose(wf, (3, 5, 1, 2, 4, 0)).reshape(4 * Co, 4 * Ci)


def _conv_transpose_layer(y_nchw, w_pt, scale, bias, *, act, slope, out_dtype):
    """ConvTranspose2d(4,2,1,bias=False) + per-channel scale/bias + activation.

    y_nchw: [B, Ci, H, W].  w_pt: PyTorch layout [Ci, Co, 4, 4].
    Returns [B, Co, 2H, 2W] in `out_dtype`.
    """
    B, Ci, H, W = y_nchw.shape
    Co = w_pt.shape[1]
    U, V = H + 1, W + 1
    M = B * U * V

    # ---- XLA layout plumbing: shared 2x2 patch matrix, transposed (pixels on lanes).
    yp = jnp.pad(y_nchw.astype(jnp.bfloat16), ((0, 0), (0, 0), (1, 1), (1, 1)))
    taps = jnp.stack([yp[:, :, a:a + U, b:b + V]
                      for a in range(2) for b in range(2)], axis=0)     # [4,B,Ci,U,V]
    xT = jnp.transpose(taps, (0, 2, 1, 3, 4)).reshape(4 * Ci, M)        # [(a,b,ci),(b,u,v)]

    A = _subpixel_weight(w_pt).astype(jnp.bfloat16)                     # [4Co, 4Ci]
    s4 = jnp.tile(scale.astype(jnp.float32), 4).reshape(4 * Co, 1)      # (ry,rx,co) order
    b4 = jnp.tile(bias.astype(jnp.float32), 4).reshape(4 * Co, 1)

    # Zero-pad tiny dims to friendly multiples (does not change the math).
    K, N = 4 * Ci, 4 * Co
    Kp, Np = _round_up(K, 16), _round_up(N, 16)
    # Few, large grid steps: 2 for the big late layers (v7x megacore), else 1.
    steps = 2 if M >= 2048 else 1
    TM = _round_up((M + steps - 1) // steps, 128)
    Mp = TM * steps

    xT = jnp.pad(xT, ((0, Kp - K), (0, Mp - M)))
    A = jnp.pad(A, ((0, Np - N), (0, Kp - K)))
    s4 = jnp.pad(s4, ((0, Np - N), (0, 0)))
    b4 = jnp.pad(b4, ((0, Np - N), (0, 0)))

    flops = 2 * Np * Kp * Mp
    transcendentals = Np * Mp if act == "tanh" else 0
    bytes_accessed = (Kp * Mp * 2 + Np * Kp * 2 + 2 * Np * 4
                      + Np * Mp * jnp.dtype(out_dtype).itemsize)

    yT = pl.pallas_call(
        _make_layer_kernel(act, slope),
        out_shape=jax.ShapeDtypeStruct((Np, Mp), out_dtype),
        grid=(steps,),
        in_specs=[
            pl.BlockSpec((Np, Kp), lambda i: (0, 0)),   # weights: resident
            pl.BlockSpec((Kp, TM), lambda i: (0, i)),   # patch columns: pipelined
            pl.BlockSpec((Np, 1), lambda i: (0, 0)),    # bn scale: resident
            pl.BlockSpec((Np, 1), lambda i: (0, 0)),    # bn bias: resident
        ],
        out_specs=pl.BlockSpec((Np, TM), lambda i: (0, i)),   # lane-dense (pixels on lanes)
        compiler_params=pltpu.CompilerParams(
            dimension_semantics=("parallel",)),
        cost_estimate=pl.CostEstimate(flops=flops,
                                      transcendentals=transcendentals,
                                      bytes_accessed=bytes_accessed),
    )(A, xT, s4, b4)

    # ---- shifted pixel-shuffle back to NCHW: out[2iy+ry, 2ix+rx] = Y[ry,rx, iy+ry, ix+rx].
    Yr = yT[:N, :M].reshape(2, 2, Co, B, U, V)              # (ry, rx, co, b, u, v)
    rows = []
    for ry in range(2):
        cols = [Yr[ry, rx, :, :, ry:ry + H, rx:rx + W] for rx in range(2)]  # [Co,B,H,W]
        rows.append(jnp.stack(cols, axis=-1))               # [Co, B, H, W, 2(rx)]
    z = jnp.stack(rows, axis=3)                              # [Co, B, H, 2(ry), W, 2(rx)]
    z = z.reshape(Co, B, 2 * H, 2 * W)
    return jnp.transpose(z, (1, 0, 2, 3))                    # NCHW


def generator_conv_forward(x_nchw, params, slope):
    """Eval-mode forward of GeneratorConv.  x: [B, in_size, H, W] -> [B, 3, 128H, 128W]."""
    (w1, bn1), (w2, bn2), (w3, bn3), (w4, bn4), (w5, bn5), w6 = params
    y = x_nchw

    # Six ConvT + BN + leaky_relu stages; stage 6 reuses l6's weights and bn5.
    for w, bn in [(w1, bn1), (w2, bn2), (w3, bn3), (w4, bn4), (w5, bn5), (w6, bn5)]:
        s, b = _fold_bn(*bn)
        y = _conv_transpose_layer(y, w, s, b, act="leaky", slope=slope,
                                  out_dtype=jnp.bfloat16)
        # dropout: identity in eval mode (see TODO at top)

    # Final head: l6 applied again, no batch norm, tanh.
    ones = jnp.ones((w6.shape[1],), jnp.float32)
    zeros = jnp.zeros((w6.shape[1],), jnp.float32)
    y = _conv_transpose_layer(y, w6, ones, zeros, act="tanh", slope=slope,
                              out_dtype=jnp.float32)
    return y                                                  # already NCHW


# ----------------------------- reference (pure JAX) -----------------------------

def reference_forward(x_nchw, params, slope):
    (w1, bn1), (w2, bn2), (w3, bn3), (w4, bn4), (w5, bn5), w6 = params

    def convT(x, w):
        # ConvTranspose2d(4,2,1) == dilate-by-2, pad 2, correlate with flipped kernel.
        rhs = jnp.transpose(w[:, :, ::-1, ::-1], (1, 0, 2, 3))     # OIHW
        return lax.conv_general_dilated(
            x.astype(jnp.bfloat16), rhs.astype(jnp.bfloat16),
            window_strides=(1, 1), padding=((2, 2), (2, 2)),
            lhs_dilation=(2, 2),
            dimension_numbers=("NCHW", "OIHW", "NCHW"),
            preferred_element_type=jnp.float32)

    def bn_lrelu(x, bn):
        s, b = _fold_bn(*bn)
        x = x * s[None, :, None, None] + b[None, :, None, None]
        return jnp.where(x > 0, x, slope * x)

    y = x_nchw.astype(jnp.float32)
    for w, bn in [(w1, bn1), (w2, bn2), (w3, bn3), (w4, bn4), (w5, bn5), (w6, bn5)]:
        y = bn_lrelu(convT(y, w), bn)
    return jnp.tanh(convT(y, w6))


# --------------------------------- params init ----------------------------------

def init_params(key, in_size, ch):
    cis = [in_size, ch * 8, ch * 4, ch * 3, ch, 3]
    cos = [ch * 8, ch * 4, ch * 3, ch, 3, 3]
    params = []
    for i, (ci, co) in enumerate(zip(cis, cos)):
        k = jax.random.fold_in(key, i)
        kw, kg, kb, km, kv = jax.random.split(k, 5)
        bound = 1.2 / np.sqrt(ci)
        w = jax.random.uniform(kw, (ci, co, 4, 4), jnp.float32, -bound, bound)
        if i < 5:
            gamma = jax.random.uniform(kg, (co,), jnp.float32, 0.8, 1.2)
            beta = jax.random.uniform(kb, (co,), jnp.float32, -0.2, 0.2)
            mean = 0.1 * jax.random.normal(km, (co,), jnp.float32)
            var = jax.random.uniform(kv, (co,), jnp.float32, 0.8, 1.2)
            params.append((w, (gamma, beta, mean, var)))
        else:
            params.append(w)     # l6 has no dedicated BN (reuses bn5 once, then tanh)
    return tuple(params)


if __name__ == "__main__":
    key = jax.random.PRNGKey(0)

    B, in_size, ch = 2, 8, 4
    H = W = 1                    # latent spatial size; 7 transposed convs -> 128x128
    slope = 0.2
    dropout_rate = 0.3           # inactive (eval mode)

    kx, kp = jax.random.split(key)
    x = jax.random.normal(kx, (B, in_size, H, W), jnp.float32)
    params = init_params(kp, in_size, ch)

    fwd = jax.jit(functools.partial(generator_conv_forward, slope=slope))
    out = jax.block_until_ready(fwd(x, params))

    ref = jax.block_until_ready(reference_forward(x, params, slope))

    assert out.shape == (B, 3, 128 * H, 128 * W)
    np.testing.assert_allclose(np.asarray(out), np.asarray(ref), rtol=2e-2, atol=2e-2)

    print("KERNEL_OK")
</pallas_src>

<mosaic_0001>
module attributes {stable_mosaic.version = 11 : i64} {
  func.func @kernel(%arg0: i32, %arg1: memref<128x32xbf16, #tpu.memory_space<vmem>>, %arg2: memref<32x128xbf16, #tpu.memory_space<vmem>>, %arg3: memref<128x1xf32, #tpu.memory_space<vmem>>, %arg4: memref<128x1xf32, #tpu.memory_space<vmem>>, %arg5: memref<128x128xbf16, #tpu.memory_space<vmem>>) attributes {dimension_semantics = [#tpu.dimension_semantics<parallel>], iteration_bounds = array<i64: 1>, scalar_prefetch = 0 : i64, scratch_operands = 0 : i64, tpu.core_type = #tpu.core_type<tc>, window_params = [{pipeline_mode = #tpu.pipeline_mode<synchronous>, transform_indices = @transform_0, window_bounds = array<i64: 128, 32>}, {transform_indices = @transform_1, window_bounds = array<i64: 32, 128>}, {pipeline_mode = #tpu.pipeline_mode<synchronous>, transform_indices = @transform_2, window_bounds = array<i64: 128, 1>}, {pipeline_mode = #tpu.pipeline_mode<synchronous>, transform_indices = @transform_3, window_bounds = array<i64: 128, 1>}, {transform_indices = @transform_4, window_bounds = array<i64: 128, 128>}]} {
    %c0 = arith.constant 0 : index
    %c0_0 = arith.constant 0 : index
    %0 = vector.load %arg1[%c0, %c0_0] : memref<128x32xbf16, #tpu.memory_space<vmem>>, vector<128x32xbf16>
    %c0_1 = arith.constant 0 : index
    %c0_2 = arith.constant 0 : index
    %1 = vector.load %arg2[%c0_1, %c0_2] : memref<32x128xbf16, #tpu.memory_space<vmem>>, vector<32x128xbf16>
    %cst = arith.constant dense<0.000000e+00> : vector<128x128xf32>
    %2 = tpu.matmul %0, %1, %cst {dimension_numbers = #tpu.dot_dimension_numbers<[1], [0], [0], [1], [0, 0, 1, 1], [], []>} : vector<128x32xbf16>, vector<32x128xbf16>, vector<128x128xf32> -> vector<128x128xf32>
    %c0_3 = arith.constant 0 : index
    %c0_4 = arith.constant 0 : index
    %3 = vector.load %arg3[%c0_3, %c0_4] : memref<128x1xf32, #tpu.memory_space<vmem>>, vector<128x1xf32>
    %4 = vector.broadcast %3 : vector<128x1xf32> to vector<128x128xf32>
    %5 = arith.mulf %2, %4 : vector<128x128xf32>
    %c0_5 = arith.constant 0 : index
    %c0_6 = arith.constant 0 : index
    %6 = vector.load %arg4[%c0_5, %c0_6] : memref<128x1xf32, #tpu.memory_space<vmem>>, vector<128x1xf32>
    %7 = vector.broadcast %6 : vector<128x1xf32> to vector<128x128xf32>
    %8 = arith.addf %5, %7 : vector<128x128xf32>
    %cst_7 = arith.constant 0.000000e+00 : f32
    %9 = vector.broadcast %cst_7 : f32 to vector<128x128xf32>
    %10 = arith.cmpf ogt, %8, %9 : vector<128x128xf32>
    %cst_8 = arith.constant 2.000000e-01 : f32
    %11 = vector.broadcast %cst_8 : f32 to vector<128x128xf32>
    %12 = arith.mulf %11, %8 : vector<128x128xf32>
    %13 = arith.select %10, %8, %12 : vector<128x128xi1>, vector<128x128xf32>
    %14 = arith.truncf %13 : vector<128x128xf32> to vector<128x128xbf16>
    %c0_9 = arith.constant 0 : index
    %c0_10 = arith.constant 0 : index
    %15 = vector.load %arg5[%c0_9, %c0_10] : memref<128x128xbf16, #tpu.memory_space<vmem>>, vector<128x128xbf16>
    tpu.vector_store %arg5[%c0_9, %c0_10], %14 {strides = array<i32>} : memref<128x128xbf16, #tpu.memory_space<vmem>>, vector<128x128xbf16>,
    return
  }
  func.func @transform_0(%arg0: i32) -> (i32, i32) {
    %c0_i32 = arith.constant 0 : i32
    %c0_i32_0 = arith.constant 0 : i32
    %c0_i32_1 = arith.constant 0 : i32
    return %c0_i32, %c0_i32_0 : i32, i32
  }
  func.func @transform_1(%arg0: i32) -> (i32, i32) {
    %c0_i32 = arith.constant 0 : i32
    %c0_i32_0 = arith.constant 0 : i32
    return %c0_i32, %arg0 : i32, i32
  }
  func.func @transform_2(%arg0: i32) -> (i32, i32) {
    %c0_i32 = arith.constant 0 : i32
    %c0_i32_0 = arith.constant 0 : i32
    %c0_i32_1 = arith.constant 0 : i32
    return %c0_i32, %c0_i32_0 : i32, i32
  }
  func.func @transform_3(%arg0: i32) -> (i32, i32) {
    %c0_i32 = arith.constant 0 : i32
    %c0_i32_0 = arith.constant 0 : i32
    %c0_i32_1 = arith.constant 0 : i32
    return %c0_i32, %c0_i32_0 : i32, i32
  }
  func.func @transform_4(%arg0: i32) -> (i32, i32) {
    %c0_i32 = arith.constant 0 : i32
    %c0_i32_0 = arith.constant 0 : i32
    return %c0_i32, %arg0 : i32, i32
  }
}

module attributes {stable_mosaic.version = 11 : i64} {
  func.func @kernel(%arg0: i32, %arg1: memref<64x128xbf16, #tpu.memory_space<vmem>>, %arg2: memref<128x128xbf16, #tpu.memory_space<vmem>>, %arg3: memref<64x1xf32, #tpu.memory_space<vmem>>, %arg4: memref<64x1xf32, #tpu.memory_space<vmem>>, %arg5: memref<64x128xbf16, #tpu.memory_space<vmem>>) attributes {dimension_semantics = [#tpu.dimension_semantics<parallel>], iteration_bounds = array<i64: 1>, scalar_prefetch = 0 : i64, scratch_operands = 0 : i64, tpu.core_type = #tpu.core_type<tc>, window_params = [{pipeline_mode = #tpu.pipeline_mode<synchronous>, transform_indices = @transform_0, window_bounds = array<i64: 64, 128>}, {transform_indices = @transform_1, window_bounds = array<i64: 128, 128>}, {pipeline_mode = #tpu.pipeline_mode<synchronous>, transform_indices = @transform_2, window_bounds = array<i64: 64, 1>}, {pipeline_mode = #tpu.pipeline_mode<synchronous>, transform_indices = @transform_3, window_bounds = array<i64: 64, 1>}, {transform_indices = @transform_4, window_bounds = array<i64: 64, 128>}]} {
    %c0 = arith.constant 0 : index
    %c0_0 = arith.constant 0 : index
    %0 = vector.load %arg1[%c0, %c0_0] : memref<64x128xbf16, #tpu.memory_space<vmem>>, vector<64x128xbf16>
    %c0_1 = arith.constant 0 : index
    %c0_2 = arith.constant 0 : index
    %1 = vector.load %arg2[%c0_1, %c0_2] : memref<128x128xbf16, #tpu.memory_space<vmem>>, vector<128x128xbf16>
    %cst = arith.constant dense<0.000000e+00> : vector<64x128xf32>
    %2 = tpu.matmul %0, %1, %cst {dimension_numbers = #tpu.dot_dimension_numbers<[1], [0], [0], [1], [0, 0, 1, 1], [], []>} : vector<64x128xbf16>, vector<128x128xbf16>, vector<64x128xf32> -> vector<64x128xf32>
    %c0_3 = arith.constant 0 : index
    %c0_4 = arith.constant 0 : index
    %3 = vector.load %arg3[%c0_3, %c0_4] : memref<64x1xf32, #tpu.memory_space<vmem>>, vector<64x1xf32>
    %4 = vector.broadcast %3 : vector<64x1xf32> to vector<64x128xf32>
    %5 = arith.mulf %2, %4 : vector<64x128xf32>
    %c0_5 = arith.constant 0 : index
    %c0_6 = arith.constant 0 : index
    %6 = vector.load %arg4[%c0_5, %c0_6] : memref<64x1xf32, #tpu.memory_space<vmem>>, vector<64x1xf32>
    %7 = vector.broadcast %6 : vector<64x1xf32> to vector<64x128xf32>
    %8 = arith.addf %5, %7 : vector<64x128xf32>
    %cst_7 = arith.constant 0.000000e+00 : f32
    %9 = vector.broadcast %cst_7 : f32 to vector<64x128xf32>
    %10 = arith.cmpf ogt, %8, %9 : vector<64x128xf32>
    %cst_8 = arith.constant 2.000000e-01 : f32
    %11 = vector.broadcast %cst_8 : f32 to vector<64x128xf32>
    %12 = arith.mulf %11, %8 : vector<64x128xf32>
    %13 = arith.select %10, %8, %12 : vector<64x128xi1>, vector<64x128xf32>
    %14 = arith.truncf %13 : vector<64x128xf32> to vector<64x128xbf16>
    %c0_9 = arith.constant 0 : index
    %c0_10 = arith.constant 0 : index
    %15 = vector.load %arg5[%c0_9, %c0_10] : memref<64x128xbf16, #tpu.memory_space<vmem>>, vector<64x128xbf16>
    tpu.vector_store %arg5[%c0_9, %c0_10], %14 {strides = array<i32>} : memref<64x128xbf16, #tpu.memory_space<vmem>>, vector<64x128xbf16>,
    return
  }
  func.func @transform_0(%arg0: i32) -> (i32, i32) {
    %c0_i32 = arith.constant 0 : i32
    %c0_i32_0 = arith.constant 0 : i32
    %c0_i32_1 = arith.constant 0 : i32
    return %c0_i32, %c0_i32_0 : i32, i32
  }
  func.func @transform_1(%arg0: i32) -> (i32, i32) {
    %c0_i32 = arith.constant 0 : i32
    %c0_i32_0 = arith.constant 0 : i32
    return %c0_i32, %arg0 : i32, i32
  }
  func.func @transform_2(%arg0: i32) -> (i32, i32) {
    %c0_i32 = arith.constant 0 : i32
    %c0_i32_0 = arith.constant 0 : i32
    %c0_i32_1 = arith.constant 0 : i32
    return %c0_i32, %c0_i32_0 : i32, i32
  }
  func.func @transform_3(%arg0: i32) -> (i32, i32) {
    %c0_i32 = arith.constant 0 : i32
    %c0_i32_0 = arith.constant 0 : i32
    %c0_i32_1 = arith.constant 0 : i32
    return %c0_i32, %c0_i32_0 : i32, i32
  }
  func.func @transform_4(%arg0: i32) -> (i32, i32) {
    %c0_i32 = arith.constant 0 : i32
    %c0_i32_0 = arith.constant 0 : i32
    return %c0_i32, %arg0 : i32, i32
  }
}

module attributes {stable_mosaic.version = 11 : i64} {
  func.func @kernel(%arg0: i32, %arg1: memref<48x64xbf16, #tpu.memory_space<vmem>>, %arg2: memref<64x128xbf16, #tpu.memory_space<vmem>>, %arg3: memref<48x1xf32, #tpu.memory_space<vmem>>, %arg4: memref<48x1xf32, #tpu.memory_space<vmem>>, %arg5: memref<48x128xbf16, #tpu.memory_space<vmem>>) attributes {dimension_semantics = [#tpu.dimension_semantics<parallel>], iteration_bounds = array<i64: 1>, scalar_prefetch = 0 : i64, scratch_operands = 0 : i64, tpu.core_type = #tpu.core_type<tc>, window_params = [{pipeline_mode = #tpu.pipeline_mode<synchronous>, transform_indices = @transform_0, window_bounds = array<i64: 48, 64>}, {transform_indices = @transform_1, window_bounds = array<i64: 64, 128>}, {pipeline_mode = #tpu.pipeline_mode<synchronous>, transform_indices = @transform_2, window_bounds = array<i64: 48, 1>}, {pipeline_mode = #tpu.pipeline_mode<synchronous>, transform_indices = @transform_3, window_bounds = array<i64: 48, 1>}, {transform_indices = @transform_4, window_bounds = array<i64: 48, 128>}]} {
    %c0 = arith.constant 0 : index
    %c0_0 = arith.constant 0 : index
    %0 = vector.load %arg1[%c0, %c0_0] : memref<48x64xbf16, #tpu.memory_space<vmem>>, vector<48x64xbf16>
    %c0_1 = arith.constant 0 : index
    %c0_2 = arith.constant 0 : index
    %1 = vector.load %arg2[%c0_1, %c0_2] : memref<64x128xbf16, #tpu.memory_space<vmem>>, vector<64x128xbf16>
    %cst = arith.constant dense<0.000000e+00> : vector<48x128xf32>
    %2 = tpu.matmul %0, %1, %cst {dimension_numbers = #tpu.dot_dimension_numbers<[1], [0], [0], [1], [0, 0, 1, 1], [], []>} : vector<48x64xbf16>, vector<64x128xbf16>, vector<48x128xf32> -> vector<48x128xf32>
    %c0_3 = arith.constant 0 : index
    %c0_4 = arith.constant 0 : index
    %3 = vector.load %arg3[%c0_3, %c0_4] : memref<48x1xf32, #tpu.memory_space<vmem>>, vector<48x1xf32>
    %4 = vector.broadcast %3 : vector<48x1xf32> to vector<48x128xf32>
    %5 = arith.mulf %2, %4 : vector<48x128xf32>
    %c0_5 = arith.constant 0 : index
    %c0_6 = arith.constant 0 : index
    %6 = vector.load %arg4[%c0_5, %c0_6] : memref<48x1xf32, #tpu.memory_space<vmem>>, vector<48x1xf32>
    %7 = vector.broadcast %6 : vector<48x1xf32> to vector<48x128xf32>
    %8 = arith.addf %5, %7 : vector<48x128xf32>
    %cst_7 = arith.constant 0.000000e+00 : f32
    %9 = vector.broadcast %cst_7 : f32 to vector<48x128xf32>
    %10 = arith.cmpf ogt, %8, %9 : vector<48x128xf32>
    %cst_8 = arith.constant 2.000000e-01 : f32
    %11 = vector.broadcast %cst_8 : f32 to vector<48x128xf32>
    %12 = arith.mulf %11, %8 : vector<48x128xf32>
    %13 = arith.select %10, %8, %12 : vector<48x128xi1>, vector<48x128xf32>
    %14 = arith.truncf %13 : vector<48x128xf32> to vector<48x128xbf16>
    %c0_9 = arith.constant 0 : index
    %c0_10 = arith.constant 0 : index
    %15 = vector.load %arg5[%c0_9, %c0_10] : memref<48x128xbf16, #tpu.memory_space<vmem>>, vector<48x128xbf16>
    tpu.vector_store %arg5[%c0_9, %c0_10], %14 {strides = array<i32>} : memref<48x128xbf16, #tpu.memory_space<vmem>>, vector<48x128xbf16>,
    return
  }
  func.func @transform_0(%arg0: i32) -> (i32, i32) {
    %c0_i32 = arith.constant 0 : i32
    %c0_i32_0 = arith.constant 0 : i32
    %c0_i32_1 = arith.constant 0 : i32
    return %c0_i32, %c0_i32_0 : i32, i32
  }
  func.func @transform_1(%arg0: i32) -> (i32, i32) {
    %c0_i32 = arith.constant 0 : i32
    %c0_i32_0 = arith.constant 0 : i32
    return %c0_i32, %arg0 : i32, i32
  }
  func.func @transform_2(%arg0: i32) -> (i32, i32) {
    %c0_i32 = arith.constant 0 : i32
    %c0_i32_0 = arith.constant 0 : i32
    %c0_i32_1 = arith.constant 0 : i32
    return %c0_i32, %c0_i32_0 : i32, i32
  }
  func.func @transform_3(%arg0: i32) -> (i32, i32) {
    %c0_i32 = arith.constant 0 : i32
    %c0_i32_0 = arith.constant 0 : i32
    %c0_i32_1 = arith.constant 0 : i32
    return %c0_i32, %c0_i32_0 : i32, i32
  }
  func.func @transform_4(%arg0: i32) -> (i32, i32) {
    %c0_i32 = arith.constant 0 : i32
    %c0_i32_0 = arith.constant 0 : i32
    return %c0_i32, %arg0 : i32, i32
  }
}

module attributes {stable_mosaic.version = 11 : i64} {
  func.func @kernel(%arg0: i32, %arg1: memref<16x48xbf16, #tpu.memory_space<vmem>>, %arg2: memref<48x256xbf16, #tpu.memory_space<vmem>>, %arg3: memref<16x1xf32, #tpu.memory_space<vmem>>, %arg4: memref<16x1xf32, #tpu.memory_space<vmem>>, %arg5: memref<16x256xbf16, #tpu.memory_space<vmem>>) attributes {dimension_semantics = [#tpu.dimension_semantics<parallel>], iteration_bounds = array<i64: 1>, scalar_prefetch = 0 : i64, scratch_operands = 0 : i64, tpu.core_type = #tpu.core_type<tc>, window_params = [{pipeline_mode = #tpu.pipeline_mode<synchronous>, transform_indices = @transform_0, window_bounds = array<i64: 16, 48>}, {transform_indices = @transform_1, window_bounds = array<i64: 48, 256>}, {pipeline_mode = #tpu.pipeline_mode<synchronous>, transform_indices = @transform_2, window_bounds = array<i64: 16, 1>}, {pipeline_mode = #tpu.pipeline_mode<synchronous>, transform_indices = @transform_3, window_bounds = array<i64: 16, 1>}, {transform_indices = @transform_4, window_bounds = array<i64: 16, 256>}]} {
    %c0 = arith.constant 0 : index
    %c0_0 = arith.constant 0 : index
    %0 = vector.load %arg1[%c0, %c0_0] : memref<16x48xbf16, #tpu.memory_space<vmem>>, vector<16x48xbf16>
    %c0_1 = arith.constant 0 : index
    %c0_2 = arith.constant 0 : index
    %1 = vector.load %arg2[%c0_1, %c0_2] : memref<48x256xbf16, #tpu.memory_space<vmem>>, vector<48x256xbf16>
    %cst = arith.constant dense<0.000000e+00> : vector<16x256xf32>
    %2 = tpu.matmul %0, %1, %cst {dimension_numbers = #tpu.dot_dimension_numbers<[1], [0], [0], [1], [0, 0, 1, 1], [], []>} : vector<16x48xbf16>, vector<48x256xbf16>, vector<16x256xf32> -> vector<16x256xf32>
    %c0_3 = arith.constant 0 : index
    %c0_4 = arith.constant 0 : index
    %3 = vector.load %arg3[%c0_3, %c0_4] : memref<16x1xf32, #tpu.memory_space<vmem>>, vector<16x1xf32>
    %4 = vector.broadcast %3 : vector<16x1xf32> to vector<16x256xf32>
    %5 = arith.mulf %2, %4 : vector<16x256xf32>
    %c0_5 = arith.constant 0 : index
    %c0_6 = arith.constant 0 : index
    %6 = vector.load %arg4[%c0_5, %c0_6] : memref<16x1xf32, #tpu.memory_space<vmem>>, vector<16x1xf32>
    %7 = vector.broadcast %6 : vector<16x1xf32> to vector<16x256xf32>
    %8 = arith.addf %5, %7 : vector<16x256xf32>
    %cst_7 = arith.constant 0.000000e+00 : f32
    %9 = vector.broadcast %cst_7 : f32 to vector<16x256xf32>
    %10 = arith.cmpf ogt, %8, %9 : vector<16x256xf32>
    %cst_8 = arith.constant 2.000000e-01 : f32
    %11 = vector.broadcast %cst_8 : f32 to vector<16x256xf32>
    %12 = arith.mulf %11, %8 : vector<16x256xf32>
    %13 = arith.select %10, %8, %12 : vector<16x256xi1>, vector<16x256xf32>
    %14 = arith.truncf %13 : vector<16x256xf32> to vector<16x256xbf16>
    %c0_9 = arith.constant 0 : index
    %c0_10 = arith.constant 0 : index
    %15 = vector.load %arg5[%c0_9, %c0_10] : memref<16x256xbf16, #tpu.memory_space<vmem>>, vector<16x256xbf16>
    tpu.vector_store %arg5[%c0_9, %c0_10], %14 {strides = array<i32>} : memref<16x256xbf16, #tpu.memory_space<vmem>>, vector<16x256xbf16>,
    return
  }
  func.func @transform_0(%arg0: i32) -> (i32, i32) {
    %c0_i32 = arith.constant 0 : i32
    %c0_i32_0 = arith.constant 0 : i32
    %c0_i32_1 = arith.constant 0 : i32
    return %c0_i32, %c0_i32_0 : i32, i32
  }
  func.func @transform_1(%arg0: i32) -> (i32, i32) {
    %c0_i32 = arith.constant 0 : i32
    %c0_i32_0 = arith.constant 0 : i32
    return %c0_i32, %arg0 : i32, i32
  }
  func.func @transform_2(%arg0: i32) -> (i32, i32) {
    %c0_i32 = arith.constant 0 : i32
    %c0_i32_0 = arith.constant 0 : i32
    %c0_i32_1 = arith.constant 0 : i32
    return %c0_i32, %c0_i32_0 : i32, i32
  }
  func.func @transform_3(%arg0: i32) -> (i32, i32) {
    %c0_i32 = arith.constant 0 : i32
    %c0_i32_0 = arith.constant 0 : i32
    %c0_i32_1 = arith.constant 0 : i32
    return %c0_i32, %c0_i32_0 : i32, i32
  }
  func.func @transform_4(%arg0: i32) -> (i32, i32) {
    %c0_i32 = arith.constant 0 : i32
    %c0_i32_0 = arith.constant 0 : i32
    return %c0_i32, %arg0 : i32, i32
  }
}

module attributes {stable_mosaic.version = 11 : i64} {
  func.func @kernel(%arg0: i32, %arg1: memref<16x16xbf16, #tpu.memory_space<vmem>>, %arg2: memref<16x640xbf16, #tpu.memory_space<vmem>>, %arg3: memref<16x1xf32, #tpu.memory_space<vmem>>, %arg4: memref<16x1xf32, #tpu.memory_space<vmem>>, %arg5: memref<16x640xbf16, #tpu.memory_space<vmem>>) attributes {dimension_semantics = [#tpu.dimension_semantics<parallel>], iteration_bounds = array<i64: 1>, scalar_prefetch = 0 : i64, scratch_operands = 0 : i64, tpu.core_type = #tpu.core_type<tc>, window_params = [{pipeline_mode = #tpu.pipeline_mode<synchronous>, transform_indices = @transform_0, window_bounds = array<i64: 16, 16>}, {transform_indices = @transform_1, window_bounds = array<i64: 16, 640>}, {pipeline_mode = #tpu.pipeline_mode<synchronous>, transform_indices = @transform_2, window_bounds = array<i64: 16, 1>}, {pipeline_mode = #tpu.pipeline_mode<synchronous>, transform_indices = @transform_3, window_bounds = array<i64: 16, 1>}, {transform_indices = @transform_4, window_bounds = array<i64: 16, 640>}]} {
    %c0 = arith.constant 0 : index
    %c0_0 = arith.constant 0 : index
    %0 = vector.load %arg1[%c0, %c0_0] : memref<16x16xbf16, #tpu.memory_space<vmem>>, vector<16x16xbf16>
    %c0_1 = arith.constant 0 : index
    %c0_2 = arith.constant 0 : index
    %1 = vector.load %arg2[%c0_1, %c0_2] : memref<16x640xbf16, #tpu.memory_space<vmem>>, vector<16x640xbf16>
    %cst = arith.constant dense<0.000000e+00> : vector<16x640xf32>
    %2 = tpu.matmul %0, %1, %cst {dimension_numbers = #tpu.dot_dimension_numbers<[1], [0], [0], [1], [0, 0, 1, 1], [], []>} : vector<16x16xbf16>, vector<16x640xbf16>, vector<16x640xf32> -> vector<16x640xf32>
    %c0_3 = arith.constant 0 : index
    %c0_4 = arith.constant 0 : index
    %3 = vector.load %arg3[%c0_3, %c0_4] : memref<16x1xf32, #tpu.memory_space<vmem>>, vector<16x1xf32>
    %4 = vector.broadcast %3 : vector<16x1xf32> to vector<16x640xf32>
    %5 = arith.mulf %2, %4 : vector<16x640xf32>
    %c0_5 = arith.constant 0 : index
    %c0_6 = arith.constant 0 : index
    %6 = vector.load %arg4[%c0_5, %c0_6] : memref<16x1xf32, #tpu.memory_space<vmem>>, vector<16x1xf32>
    %7 = vector.broadcast %6 : vector<16x1xf32> to vector<16x640xf32>
    %8 = arith.addf %5, %7 : vector<16x640xf32>
    %cst_7 = arith.constant 0.000000e+00 : f32
    %9 = vector.broadcast %cst_7 : f32 to vector<16x640xf32>
    %10 = arith.cmpf ogt, %8, %9 : vector<16x640xf32>
    %cst_8 = arith.constant 2.000000e-01 : f32
    %11 = vector.broadcast %cst_8 : f32 to vector<16x640xf32>
    %12 = arith.mulf %11, %8 : vector<16x640xf32>
    %13 = arith.select %10, %8, %12 : vector<16x640xi1>, vector<16x640xf32>
    %14 = arith.truncf %13 : vector<16x640xf32> to vector<16x640xbf16>
    %c0_9 = arith.constant 0 : index
    %c0_10 = arith.constant 0 : index
    %15 = vector.load %arg5[%c0_9, %c0_10] : memref<16x640xbf16, #tpu.memory_space<vmem>>, vector<16x640xbf16>
    tpu.vector_store %arg5[%c0_9, %c0_10], %14 {strides = array<i32>} : memref<16x640xbf16, #tpu.memory_space<vmem>>, vector<16x640xbf16>,
    return
  }
  func.func @transform_0(%arg0: i32) -> (i32, i32) {
    %c0_i32 = arith.constant 0 : i32
    %c0_i32_0 = arith.constant 0 : i32
    %c0_i32_1 = arith.constant 0 : i32
    return %c0_i32, %c0_i32_0 : i32, i32
  }
  func.func @transform_1(%arg0: i32) -> (i32, i32) {
    %c0_i32 = arith.constant 0 : i32
    %c0_i32_0 = arith.constant 0 : i32
    return %c0_i32, %arg0 : i32, i32
  }
  func.func @transform_2(%arg0: i32) -> (i32, i32) {
    %c0_i32 = arith.constant 0 : i32
    %c0_i32_0 = arith.constant 0 : i32
    %c0_i32_1 = arith.constant 0 : i32
    return %c0_i32, %c0_i32_0 : i32, i32
  }
  func.func @transform_3(%arg0: i32) -> (i32, i32) {
    %c0_i32 = arith.constant 0 : i32
    %c0_i32_0 = arith.constant 0 : i32
    %c0_i32_1 = arith.constant 0 : i32
    return %c0_i32, %c0_i32_0 : i32, i32
  }
  func.func @transform_4(%arg0: i32) -> (i32, i32) {
    %c0_i32 = arith.constant 0 : i32
    %c0_i32_0 = arith.constant 0 : i32
    return %c0_i32, %arg0 : i32, i32
  }
}

module attributes {stable_mosaic.version = 11 : i64} {
  func.func @kernel(%arg0: i32, %arg1: memref<16x16xbf16, #tpu.memory_space<vmem>>, %arg2: memref<16x1152xbf16, #tpu.memory_space<vmem>>, %arg3: memref<16x1xf32, #tpu.memory_space<vmem>>, %arg4: memref<16x1xf32, #tpu.memory_space<vmem>>, %arg5: memref<16x1152xbf16, #tpu.memory_space<vmem>>) attributes {dimension_semantics = [#tpu.dimension_semantics<parallel>], iteration_bounds = array<i64: 2>, scalar_prefetch = 0 : i64, scratch_operands = 0 : i64, tpu.core_type = #tpu.core_type<tc>, window_params = [{pipeline_mode = #tpu.pipeline_mode<synchronous>, transform_indices = @transform_0, window_bounds = array<i64: 16, 16>}, {transform_indices = @transform_1, window_bounds = array<i64: 16, 1152>}, {pipeline_mode = #tpu.pipeline_mode<synchronous>, transform_indices = @transform_2, window_bounds = array<i64: 16, 1>}, {pipeline_mode = #tpu.pipeline_mode<synchronous>, transform_indices = @transform_3, window_bounds = array<i64: 16, 1>}, {transform_indices = @transform_4, window_bounds = array<i64: 16, 1152>}]} {
    %c0 = arith.constant 0 : index
    %c0_0 = arith.constant 0 : index
    %0 = vector.load %arg1[%c0, %c0_0] : memref<16x16xbf16, #tpu.memory_space<vmem>>, vector<16x16xbf16>
    %c0_1 = arith.constant 0 : index
    %c0_2 = arith.constant 0 : index
    %1 = vector.load %arg2[%c0_1, %c0_2] : memref<16x1152xbf16, #tpu.memory_space<vmem>>, vector<16x1152xbf16>
    %cst = arith.constant dense<0.000000e+00> : vector<16x1152xf32>
    %2 = tpu.matmul %0, %1, %cst {dimension_numbers = #tpu.dot_dimension_numbers<[1], [0], [0], [1], [0, 0, 1, 1], [], []>} : vector<16x16xbf16>, vector<16x1152xbf16>, vector<16x1152xf32> -> vector<16x1152xf32>
    %c0_3 = arith.constant 0 : index
    %c0_4 = arith.constant 0 : index
    %3 = vector.load %arg3[%c0_3, %c0_4] : memref<16x1xf32, #tpu.memory_space<vmem>>, vector<16x1xf32>
    %4 = vector.broadcast %3 : vector<16x1xf32> to vector<16x1152xf32>
    %5 = arith.mulf %2, %4 : vector<16x1152xf32>
    %c0_5 = arith.constant 0 : index
    %c0_6 = arith.constant 0 : index
    %6 = vector.load %arg4[%c0_5, %c0_6] : memref<16x1xf32, #tpu.memory_space<vmem>>, vector<16x1xf32>
    %7 = vector.broadcast %6 : vector<16x1xf32> to vector<16x1152xf32>
    %8 = arith.addf %5, %7 : vector<16x1152xf32>
    %cst_7 = arith.constant 0.000000e+00 : f32
    %9 = vector.broadcast %cst_7 : f32 to vector<16x1152xf32>
    %10 = arith.cmpf ogt, %8, %9 : vector<16x1152xf32>
    %cst_8 = arith.constant 2.000000e-01 : f32
    %11 = vector.broadcast %cst_8 : f32 to vector<16x1152xf32>
    %12 = arith.mulf %11, %8 : vector<16x1152xf32>
    %13 = arith.select %10, %8, %12 : vector<16x1152xi1>, vector<16x1152xf32>
    %14 = arith.truncf %13 : vector<16x1152xf32> to vector<16x1152xbf16>
    %c0_9 = arith.constant 0 : index
    %c0_10 = arith.constant 0 : index
    %15 = vector.load %arg5[%c0_9, %c0_10] : memref<16x1152xbf16, #tpu.memory_space<vmem>>, vector<16x1152xbf16>
    tpu.vector_store %arg5[%c0_9, %c0_10], %14 {strides = array<i32>} : memref<16x1152xbf16, #tpu.memory_space<vmem>>, vector<16x1152xbf16>,
    return
  }
  func.func @transform_0(%arg0: i32) -> (i32, i32) {
    %c0_i32 = arith.constant 0 : i32
    %c0_i32_0 = arith.constant 0 : i32
    %c0_i32_1 = arith.constant 0 : i32
    return %c0_i32, %c0_i32_0 : i32, i32
  }
  func.func @transform_1(%arg0: i32) -> (i32, i32) {
    %c0_i32 = arith.constant 0 : i32
    %c0_i32_0 = arith.constant 0 : i32
    return %c0_i32, %arg0 : i32, i32
  }
  func.func @transform_2(%arg0: i32) -> (i32, i32) {
    %c0_i32 = arith.constant 0 : i32
    %c0_i32_0 = arith.constant 0 : i32
    %c0_i32_1 = arith.constant 0 : i32
    return %c0_i32, %c0_i32_0 : i32, i32
  }
  func.func @transform_3(%arg0: i32) -> (i32, i32) {
    %c0_i32 = arith.constant 0 : i32
    %c0_i32_0 = arith.constant 0 : i32
    %c0_i32_1 = arith.constant 0 : i32
    return %c0_i32, %c0_i32_0 : i32, i32
  }
  func.func @transform_4(%arg0: i32) -> (i32, i32) {
    %c0_i32 = arith.constant 0 : i32
    %c0_i32_0 = arith.constant 0 : i32
    return %c0_i32, %arg0 : i32, i32
  }
}

module attributes {stable_mosaic.version = 11 : i64} {
  func.func @kernel(%arg0: i32, %arg1: memref<16x16xbf16, #tpu.memory_space<vmem>>, %arg2: memref<16x4352xbf16, #tpu.memory_space<vmem>>, %arg3: memref<16x1xf32, #tpu.memory_space<vmem>>, %arg4: memref<16x1xf32, #tpu.memory_space<vmem>>, %arg5: memref<16x4352xf32, #tpu.memory_space<vmem>>) attributes {dimension_semantics = [#tpu.dimension_semantics<parallel>], iteration_bounds = array<i64: 2>, scalar_prefetch = 0 : i64, scratch_operands = 0 : i64, tpu.core_type = #tpu.core_type<tc>, window_params = [{pipeline_mode = #tpu.pipeline_mode<synchronous>, transform_indices = @transform_0, window_bounds = array<i64: 16, 16>}, {transform_indices = @transform_1, window_bounds = array<i64: 16, 4352>}, {pipeline_mode = #tpu.pipeline_mode<synchronous>, transform_indices = @transform_2, window_bounds = array<i64: 16, 1>}, {pipeline_mode = #tpu.pipeline_mode<synchronous>, transform_indices = @transform_3, window_bounds = array<i64: 16, 1>}, {transform_indices = @transform_4, window_bounds = array<i64: 16, 4352>}]} {
    %c0 = arith.constant 0 : index
    %c0_0 = arith.constant 0 : index
    %0 = vector.load %arg1[%c0, %c0_0] : memref<16x16xbf16, #tpu.memory_space<vmem>>, vector<16x16xbf16>
    %c0_1 = arith.constant 0 : index
    %c0_2 = arith.constant 0 : index
    %1 = vector.load %arg2[%c0_1, %c0_2] : memref<16x4352xbf16, #tpu.memory_space<vmem>>, vector<16x4352xbf16>
    %cst = arith.constant dense<0.000000e+00> : vector<16x4352xf32>
    %2 = tpu.matmul %0, %1, %cst {dimension_numbers = #tpu.dot_dimension_numbers<[1], [0], [0], [1], [0, 0, 1, 1], [], []>} : vector<16x16xbf16>, vector<16x4352xbf16>, vector<16x4352xf32> -> vector<16x4352xf32>
    %c0_3 = arith.constant 0 : index
    %c0_4 = arith.constant 0 : index
    %3 = vector.load %arg3[%c0_3, %c0_4] : memref<16x1xf32, #tpu.memory_space<vmem>>, vector<16x1xf32>
    %4 = vector.broadcast %3 : vector<16x1xf32> to vector<16x4352xf32>
    %5 = arith.mulf %2, %4 : vector<16x4352xf32>
    %c0_5 = arith.constant 0 : index
    %c0_6 = arith.constant 0 : index
    %6 = vector.load %arg4[%c0_5, %c0_6] : memref<16x1xf32, #tpu.memory_space<vmem>>, vector<16x1xf32>
    %7 = vector.broadcast %6 : vector<16x1xf32> to vector<16x4352xf32>
    %8 = arith.addf %5, %7 : vector<16x4352xf32>
    %9 = math.tanh %8 : vector<16x4352xf32>
    %c0_7 = arith.constant 0 : index
    %c0_8 = arith.constant 0 : index
    %10 = vector.load %arg5[%c0_7, %c0_8] : memref<16x4352xf32, #tpu.memory_space<vmem>>, vector<16x4352xf32>
    tpu.vector_store %arg5[%c0_7, %c0_8], %9 {strides = array<i32>} : memref<16x4352xf32, #tpu.memory_space<vmem>>, vector<16x4352xf32>,
    return
  }
  func.func @transform_0(%arg0: i32) -> (i32, i32) {
    %c0_i32 = arith.constant 0 : i32
    %c0_i32_0 = arith.constant 0 : i32
    %c0_i32_1 = arith.constant 0 : i32
    return %c0_i32, %c0_i32_0 : i32, i32
  }
  func.func @transform_1(%arg0: i32) -> (i32, i32) {
    %c0_i32 = arith.constant 0 : i32
    %c0_i32_0 = arith.constant 0 : i32
    return %c0_i32, %arg0 : i32, i32
  }
  func.func @transform_2(%arg0: i32) -> (i32, i32) {
    %c0_i32 = arith.constant 0 : i32
    %c0_i32_0 = arith.constant 0 : i32
    %c0_i32_1 = arith.constant 0 : i32
    return %c0_i32, %c0_i32_0 : i32, i32
  }
  func.func @transform_3(%arg0: i32) -> (i32, i32) {
    %c0_i32 = arith.constant 0 : i32
    %c0_i32_0 = arith.constant 0 : i32
    %c0_i32_1 = arith.constant 0 : i32
    return %c0_i32, %c0_i32_0 : i32, i32
  }
  func.func @transform_4(%arg0: i32) -> (i32, i32) {
    %c0_i32 = arith.constant 0 : i32
    %c0_i32_0 = arith.constant 0 : i32
    return %c0_i32, %arg0 : i32, i32
  }
}

</mosaic_0001>

<llo_original>
// kernel: tile.108
$region0: #{tile.108}
  #allocation0 [shape = 's32[1]{0}', space=sflag, size = 0x4, scoped, tag = 'scoped memory for tile.108']
  %s0 = inlined_call_operand.vmem [shape: f32[3], index: 0, kind: input, shape index: {}]
  %s1 = inlined_call_operand.vmem [shape: f32[4,3], index: 1, kind: output, shape index: {}]
  // Predicated region
  $region2: #{tile.108} parent=0 // pred_check
    _
  $region3: #{tile.108} parent=0 // pred_check_branch
    %3 = sbr.rel (0) target = $region5
  $region4: #{tile.108} parent=0 // pred_region
    _
  $region5: #{tile.108} parent=0 // pred_fallthru
    _
  %v4 = vld [vmem:[%s0] ss:$0 sm:$0xff]
  %5 = vst [vmem:[%s1] sm:$0xf] %v4

// kernel: tile.98
$region0: #{tile.98}
  #allocation0 [shape = 's32[1]{0}', space=sflag, size = 0x4, scoped, tag = 'scoped memory for tile.98']
  %s0 = inlined_call_operand.vmem [shape: f32[4], index: 0, kind: input, shape index: {}]
  %s1 = inlined_call_operand.vmem [shape: f32[4,4], index: 1, kind: output, shape index: {}]
  // Predicated region
  $region2: #{tile.98} parent=0 // pred_check
    _
  $region3: #{tile.98} parent=0 // pred_check_branch
    %3 = sbr.rel (0) target = $region5
  $region4: #{tile.98} parent=0 // pred_region
    _
  $region5: #{tile.98} parent=0 // pred_fallthru
    _
  %v4 = vld [vmem:[%s0] ss:$0 sm:$0xff]
  %5 = vst [vmem:[%s1] sm:$0xf] %v4

// kernel: tile.88
$region0: #{tile.88}
  #allocation0 [shape = 's32[1]{0}', space=sflag, size = 0x4, scoped, tag = 'scoped memory for tile.88']
  %s0 = inlined_call_operand.vmem [shape: f32[12], index: 0, kind: input, shape index: {}]
  %s1 = inlined_call_operand.vmem [shape: f32[4,12], index: 1, kind: output, shape index: {}]
  // Predicated region
  $region2: #{tile.88} parent=0 // pred_check
    _
  $region3: #{tile.88} parent=0 // pred_check_branch
    %3 = sbr.rel (0) target = $region5
  $region4: #{tile.88} parent=0 // pred_region
    _
  $region5: #{tile.88} parent=0 // pred_fallthru
    _
  %v4 = vld [vmem:[%s0] ss:$0 sm:$0xff]
  %5 = vst [vmem:[%s1] sm:$0xf] %v4

// kernel: tile.78
$region0: #{tile.78}
  #allocation0 [shape = 's32[1]{0}', space=sflag, size = 0x4, scoped, tag = 'scoped memory for tile.78']
  %s0 = inlined_call_operand.vmem [shape: f32[16], index: 0, kind: input, shape index: {}]
  %s1 = inlined_call_operand.vmem [shape: f32[4,16], index: 1, kind: output, shape index: {}]
  // Predicated region
  $region2: #{tile.78} parent=0 // pred_check
    _
  $region3: #{tile.78} parent=0 // pred_check_branch
    %3 = sbr.rel (0) target = $region5
  $region4: #{tile.78} parent=0 // pred_region
    _
  $region5: #{tile.78} parent=0 // pred_fallthru
    _
  %v4 = vld [vmem:[%s0] ss:$0 sm:$0xff]
  %5 = vst [vmem:[%s1] sm:$0xf] %v4

// kernel: tile.68
$region0: #{tile.68}
  #allocation0 [shape = 's32[1]{0}', space=sflag, size = 0x4, scoped, tag = 'scoped memory for tile.68']
  %s0 = inlined_call_operand.vmem [shape: f32[32], index: 0, kind: input, shape index: {}]
  %s1 = inlined_call_operand.vmem [shape: f32[4,32], index: 1, kind: output, shape index: {}]
  // Predicated region
  $region2: #{tile.68} parent=0 // pred_check
    _
  $region3: #{tile.68} parent=0 // pred_check_branch
    %3 = sbr.rel (0) target = $region5
  $region4: #{tile.68} parent=0 // pred_region
    _
  $region5: #{tile.68} parent=0 // pred_fallthru
    _
  %v4 = vld [vmem:[%s0] ss:$0 sm:$0xff]
  %5 = vst [vmem:[%s1] sm:$0xf] %v4

// kernel: tile.6
$region0: #{tile.6}
  %s0 = inlined_call_operand.vmem [shape: f32[4,4], index: 0, kind: input, shape index: {}]
  %s1 = inlined_call_operand.vmem [shape: f32[16,1], index: 1, kind: output, shape index: {}]
  $region1: #{tile.6} parent=0
    #allocation0 [shape = 'u8[4096]{0}', space=vmem, size = 0x1000, scoped, tag = 'scoped mem for input reshape']
    %s3 = ssub.s32 16, 1
    %v4 = vld [vmem:[%s0] sm:%s3]
    %5 = vst [vmem:[#allocation0] sm:%s3] %v4
    %v6 = vld [vmem:[#allocation0] sm:$0xf]
    %vm7 = vcmask 7168
    %8 = vst.msk [vmem:[%s1] ss:$4 sm:$0xf] %vm7, %v6
    %v9 = vld [vmem:[#allocation0] sm:$0xf]
    %10 = vrot.lane.b32.xlu0 %v9, 127
    %v11 = vpop.permute.xlu0 %10
    %vm12 = vcmask 7168
    %s13 = scalar_lea.vmem %s1, 1
    %14 = vst.msk [vmem:[%s13] ss:$4 sm:$0xf] %vm12, %v11
    %v15 = vld [vmem:[#allocation0] sm:$0xf]
    %16 = vrot.lane.b32.xlu0 %v15, 126
    %v17 = vpop.permute.xlu0 %16
    %vm18 = vcmask 7168
    %s19 = scalar_lea.vmem %s1, 2
    %20 = vst.msk [vmem:[%s19] ss:$4 sm:$0xf] %vm18, %v17
    %v21 = vld [vmem:[#allocation0] sm:$0xf]
    %22 = vrot.lane.b32.xlu0 %v21, 125
    %v23 = vpop.permute.xlu0 %22
    %vm24 = vcmask 7168
    %s25 = scalar_lea.vmem %s1, 3
    %26 = vst.msk [vmem:[%s25] ss:$4 sm:$0xf] %vm24, %v23

// kernel: tile.8
$region0: #{tile.8}
  %s0 = inlined_call_operand.vmem [shape: f32[4,3], index: 0, kind: input, shape index: {}]
  %s1 = inlined_call_operand.vmem [shape: f32[12,1], index: 1, kind: output, shape index: {}]
  $region1: #{tile.8} parent=0
    #allocation0 [shape = 'u8[4096]{0}', space=vmem, size = 0x1000, scoped, tag = 'scoped mem for input reshape']
    %s3 = ssub.s32 16, 1
    %v4 = vld [vmem:[%s0] sm:%s3]
    %5 = vst [vmem:[#allocation0] sm:%s3] %v4
    %v6 = vld [vmem:[#allocation0] sm:$0xf]
    %vm7 = vcmask 7168
    %8 = vst.msk [vmem:[%s1] ss:$3 sm:$0xf] %vm7, %v6
    %v9 = vld [vmem:[#allocation0] sm:$0xf]
    %10 = vrot.lane.b32.xlu0 %v9, 127
    %v11 = vpop.permute.xlu0 %10
    %vm12 = vcmask 7168
    %s13 = scalar_lea.vmem %s1, 1
    %14 = vst.msk [vmem:[%s13] ss:$3 sm:$0xf] %vm12, %v11
    %v15 = vld [vmem:[#allocation0] sm:$0xf]
    %16 = vrot.lane.b32.xlu0 %v15, 126
    %v17 = vpop.permute.xlu0 %16
    %vm18 = vcmask 7168
    %s19 = scalar_lea.vmem %s1, 2
    %20 = vst.msk [vmem:[%s19] ss:$3 sm:$0xf] %vm18, %v17

// kernel: tile.4
$region0: #{tile.4}
  %s0 = inlined_call_operand.vmem [shape: f32[4,12], index: 0, kind: input, shape index: {}]
  %s1 = inlined_call_operand.vmem [shape: f32[48,1], index: 1, kind: output, shape index: {}]
  $region1: #{tile.4} parent=0
    #allocation0 [shape = 'u8[4096]{0}', space=vmem, size = 0x1000, scoped, tag = 'scoped mem for input reshape']
    %s3 = ssub.s32 16, 1
    %v4 = vld [vmem:[%s0] sm:%s3]
    %5 = vst [vmem:[#allocation0] sm:%s3] %v4
    %v6 = vld [vmem:[#allocation0] sm:$0xf]
    %vm7 = vcmask 7168
    %8 = vst.msk [vmem:[%s1] ss:$12 sm:$0xf] %vm7, %v6
    %v9 = vld.sshfl [vmem:[#allocation0] sm:$0xff pattern:$0x22222130]
    %10 = vrot.lane.b32.xlu0 %v9, 127
    %v11 = vpop.permute.xlu0 %10
    %vm12 = vcmask 7168
    %s13 = scalar_lea.vmem %s1, 1
    %14 = vst.msk [vmem:[%s13] ss:$36 sm:$0x3] %vm12, %v11
    %s15 = scalar_lea.vmem %s1, 4294967285
    %16 = vst.msk [vmem:[%s15] ss:$12 sm:$0xc] %vm12, %v11
    %v17 = vld.sshfl [vmem:[#allocation0] sm:$0xff pattern:$0x22222130]
    %18 = vrot.lane.b32.xlu0 %v17, 126
    %v19 = vpop.permute.xlu0 %18
    %vm20 = vcmask 7168
    %s21 = scalar_lea.vmem %s1, 2
    %22 = vst.msk [vmem:[%s21] ss:$36 sm:$0x3] %vm20, %v19
    %s23 = scalar_lea.vmem %s1, 4294967286
    %24 = vst.msk [vmem:[%s23] ss:$12 sm:$0xc] %vm20, %v19
    %v25 = vld.sshfl [vmem:[#allocation0] sm:$0xff pattern:$0x22222130]
    %26 = vrot.lane.b32.xlu0 %v25, 125
    %v27 = vpop.permute.xlu0 %26
    %vm28 = vcmask 7168
    %s29 = scalar_lea.vmem %s1, 3
    %30 = vst.msk [vmem:[%s29] ss:$36 sm:$0x3] %vm28, %v27
    %s31 = scalar_lea.vmem %s1, 4294967287
    %32 = vst.msk [vmem:[%s31] ss:$12 sm:$0xc] %vm28, %v27
    %v33 = vld.sshfl [vmem:[#allocation0] sm:$0xff pattern:$0x22222130]
    %34 = vrot.lane.b32.xlu0 %v33, 124
    %v35 = vpop.permute.xlu0 %34
    %vm36 = vcmask 7168
    %s37 = scalar_lea.vmem %s1, 4
    %38 = vst.msk [vmem:[%s37] ss:$36 sm:$0x3] %vm36, %v35
    %s39 = scalar_lea.vmem %s1, 4294967288
    %40 = vst.msk [vmem:[%s39] ss:$12 sm:$0xc] %vm36, %v35
    %v41 = vld.sshfl [vmem:[#allocation0] sm:$0xff pattern:$0x22222130]
    %42 = vrot.lane.b32.xlu0 %v41, 123
    %v43 = vpop.permute.xlu0 %42
    %vm44 = vcmask 7168
    %s45 = scalar_lea.vmem %s1, 5
    %46 = vst.msk [vmem:[%s45] ss:$36 sm:$0x3] %vm44, %v43
    %s47 = scalar_lea.vmem %s1, 4294967289
    %48 = vst.msk [vmem:[%s47] ss:$12 sm:$0xc] %vm44, %v43
    %v49 = vld.sshfl [vmem:[#allocation0] sm:$0xff pattern:$0x22222130]
    %50 = vrot.lane.b32.xlu0 %v49, 122
    %v51 = vpop.permute.xlu0 %50
    %vm52 = vcmask 7168
    %s53 = scalar_lea.vmem %s1, 6
    %54 = vst.msk [vmem:[%s53] ss:$36 sm:$0x3] %vm52, %v51
    %s55 = scalar_lea.vmem %s1, 4294967290
    %56 = vst.msk [vmem:[%s55] ss:$12 sm:$0xc] %vm52, %v51
    %v57 = vld.sshfl [vmem:[#allocation0] sm:$0xff pattern:$0x22222130]
    %58 = vrot.lane.b32.xlu0 %v57, 121
    %v59 = vpop.permute.xlu0 %58
    %vm60 = vcmask 7168
    %s61 = scalar_lea.vmem %s1, 7
    %62 = vst.msk [vmem:[%s61] ss:$36 sm:$0x3] %vm60, %v59
    %s63 = scalar_lea.vmem %s1, 4294967291
    %64 = vst.msk [vmem:[%s63] ss:$12 sm:$0xc] %vm60, %v59
    %v65 = vld.sshfl [vmem:[#allocation0] sm:$0xff pattern:$0x11111302]
    %66 = vrot.lane.b32.xlu0 %v65, 120
    %v67 = vpop.permute.xlu0 %66
    %vm68 = vcmask 7168
    %s69 = scalar_lea.vmem %s1, 32
    %70 = vst.msk [vmem:[%s69] ss:$-24 sm:$0x3] %vm68, %v67
    %s71 = scalar_lea.vmem %s1, 92
    %72 = vst.msk [vmem:[%s71] ss:$-24 sm:$0xc] %vm68, %v67
    %v73 = vld.sshfl [vmem:[#allocation0] sm:$0xff pattern:$0x11111302]
    %74 = vrot.lane.b32.xlu0 %v73, 119
    %v75 = vpop.permute.xlu0 %74
    %vm76 = vcmask 7168
    %s77 = scalar_lea.vmem %s1, 33
    %78 = vst.msk [vmem:[%s77] ss:$-24 sm:$0x3] %vm76, %v75
    %s79 = scalar_lea.vmem %s1, 93
    %80 = vst.msk [vmem:[%s79] ss:$-24 sm:$0xc] %vm76, %v75
    %v81 = vld.sshfl [vmem:[#allocation0] sm:$0xff pattern:$0x11111302]
    %82 = vrot.lane.b32.xlu0 %v81, 118
    %v83 = vpop.permute.xlu0 %82
    %vm84 = vcmask 7168
    %s85 = scalar_lea.vmem %s1, 34
    %86 = vst.msk [vmem:[%s85] ss:$-24 sm:$0x3] %vm84, %v83
    %s87 = scalar_lea.vmem %s1, 94
    %88 = vst.msk [vmem:[%s87] ss:$-24 sm:$0xc] %vm84, %v83
    %v89 = vld.sshfl [vmem:[#allocation0] sm:$0xff pattern:$0x11111302]
    %90 = vrot.lane.b32.xlu0 %v89, 117
    %v91 = vpop.permute.xlu0 %90
    %vm92 = vcmask 7168
    %s93 = scalar_lea.vmem %s1, 35
    %94 = vst.msk [vmem:[%s93] ss:$-24 sm:$0x3] %vm92, %v91
    %s95 = scalar_lea.vmem %s1, 95
    %96 = vst.msk [vmem:[%s95] ss:$-24 sm:$0xc] %vm92, %v91

// kernel: tile.2
$region0: #{tile.2}
  %s0 = inlined_call_operand.vmem [shape: f32[4,16], index: 0, kind: input, shape index: {}]
  %s1 = inlined_call_operand.vmem [shape: f32[64,1], index: 1, kind: output, shape index: {}]
  $region1: #{tile.2} parent=0
    #allocation0 [shape = 'u8[4096]{0}', space=vmem, size = 0x1000, scoped, tag = 'scoped mem for input reshape']
    %s3 = ssub.s32 16, 1
    %v4 = vld [vmem:[%s0] sm:%s3]
    %5 = vst [vmem:[#allocation0] sm:%s3] %v4
    %v6 = vld [vmem:[#allocation0] sm:$0xf]
    %vm7 = vcmask 7168
    %8 = vst.msk [vmem:[%s1] ss:$16 sm:$0x3] %vm7, %v6
    %9 = vst.msk [vmem:[%s1] ss:$16 sm:$0xc] %vm7, %v6
    %v10 = vld [vmem:[#allocation0] sm:$0xf]
    %11 = vrot.lane.b32.xlu0 %v10, 127
    %v12 = vpop.permute.xlu0 %11
    %vm13 = vcmask 7168
    %s14 = scalar_lea.vmem %s1, 1
    %15 = vst.msk [vmem:[%s14] ss:$16 sm:$0x3] %vm13, %v12
    %s16 = scalar_lea.vmem %s1, 1
    %17 = vst.msk [vmem:[%s16] ss:$16 sm:$0xc] %vm13, %v12
    %v18 = vld [vmem:[#allocation0] sm:$0xf]
    %19 = vrot.lane.b32.xlu0 %v18, 126
    %v20 = vpop.permute.xlu0 %19
    %vm21 = vcmask 7168
    %s22 = scalar_lea.vmem %s1, 2
    %23 = vst.msk [vmem:[%s22] ss:$16 sm:$0x3] %vm21, %v20
    %s24 = scalar_lea.vmem %s1, 2
    %25 = vst.msk [vmem:[%s24] ss:$16 sm:$0xc] %vm21, %v20
    %v26 = vld [vmem:[#allocation0] sm:$0xf]
    %27 = vrot.lane.b32.xlu0 %v26, 125
    %v28 = vpop.permute.xlu0 %27
    %vm29 = vcmask 7168
    %s30 = scalar_lea.vmem %s1, 3
    %31 = vst.msk [vmem:[%s30] ss:$16 sm:$0x3] %vm29, %v28
    %s32 = scalar_lea.vmem %s1, 3
    %33 = vst.msk [vmem:[%s32] ss:$16 sm:$0xc] %vm29, %v28
    %v34 = vld [vmem:[#allocation0] sm:$0xf]
    %35 = vrot.lane.b32.xlu0 %v34, 124
    %v36 = vpop.permute.xlu0 %35
    %vm37 = vcmask 7168
    %s38 = scalar_lea.vmem %s1, 4
    %39 = vst.msk [vmem:[%s38] ss:$16 sm:$0x3] %vm37, %v36
    %s40 = scalar_lea.vmem %s1, 4
    %41 = vst.msk [vmem:[%s40] ss:$16 sm:$0xc] %vm37, %v36
    %v42 = vld [vmem:[#allocation0] sm:$0xf]
    %43 = vrot.lane.b32.xlu0 %v42, 123
    %v44 = vpop.permute.xlu0 %43
    %vm45 = vcmask 7168
    %s46 = scalar_lea.vmem %s1, 5
    %47 = vst.msk [vmem:[%s46] ss:$16 sm:$0x3] %vm45, %v44
    %s48 = scalar_lea.vmem %s1, 5
    %49 = vst.msk [vmem:[%s48] ss:$16 sm:$0xc] %vm45, %v44
    %v50 = vld [vmem:[#allocation0] sm:$0xf]
    %51 = vrot.lane.b32.xlu0 %v50, 122
    %v52 = vpop.permute.xlu0 %51
    %vm53 = vcmask 7168
    %s54 = scalar_lea.vmem %s1, 6
    %55 = vst.msk [vmem:[%s54] ss:$16 sm:$0x3] %vm53, %v52
    %s56 = scalar_lea.vmem %s1, 6
    %57 = vst.msk [vmem:[%s56] ss:$16 sm:$0xc] %vm53, %v52
    %v58 = vld [vmem:[#allocation0] sm:$0xf]
    %59 = vrot.lane.b32.xlu0 %v58, 121
    %v60 = vpop.permute.xlu0 %59
    %vm61 = vcmask 7168
    %s62 = scalar_lea.vmem %s1, 7
    %63 = vst.msk [vmem:[%s62] ss:$16 sm:$0x3] %vm61, %v60
    %s64 = scalar_lea.vmem %s1, 7
    %65 = vst.msk [vmem:[%s64] ss:$16 sm:$0xc] %vm61, %v60
    %v66 = vld [vmem:[#allocation0] sm:$0xf]
    %67 = vrot.lane.b32.xlu0 %v66, 120
    %v68 = vpop.permute.xlu0 %67
    %vm69 = vcmask 7168
    %s70 = scalar_lea.vmem %s1, 8
    %71 = vst.msk [vmem:[%s70] ss:$16 sm:$0x3] %vm69, %v68
    %s72 = scalar_lea.vmem %s1, 8
    %73 = vst.msk [vmem:[%s72] ss:$16 sm:$0xc] %vm69, %v68
    %v74 = vld [vmem:[#allocation0] sm:$0xf]
    %75 = vrot.lane.b32.xlu0 %v74, 119
    %v76 = vpop.permute.xlu0 %75
    %vm77 = vcmask 7168
    %s78 = scalar_lea.vmem %s1, 9
    %79 = vst.msk [vmem:[%s78] ss:$16 sm:$0x3] %vm77, %v76
    %s80 = scalar_lea.vmem %s1, 9
    %81 = vst.msk [vmem:[%s80] ss:$16 sm:$0xc] %vm77, %v76
    %v82 = vld [vmem:[#allocation0] sm:$0xf]
    %83 = vrot.lane.b32.xlu0 %v82, 118
    %v84 = vpop.permute.xlu0 %83
    %vm85 = vcmask 7168
    %s86 = scalar_lea.vmem %s1, 10
    %87 = vst.msk [vmem:[%s86] ss:$16 sm:$0x3] %vm85, %v84
    %s88 = scalar_lea.vmem %s1, 10
    %89 = vst.msk [vmem:[%s88] ss:$16 sm:$0xc] %vm85, %v84
    %v90 = vld [vmem:[#allocation0] sm:$0xf]
    %91 = vrot.lane.b32.xlu0 %v90, 117
    %v92 = vpop.permute.xlu0 %91
    %vm93 = vcmask 7168
    %s94 = scalar_lea.vmem %s1, 11
    %95 = vst.msk [vmem:[%s94] ss:$16 sm:$0x3] %vm93, %v92
    %s96 = scalar_lea.vmem %s1, 11
    %97 = vst.msk [vmem:[%s96] ss:$16 sm:$0xc] %vm93, %v92
    %v98 = vld [vmem:[#allocation0] sm:$0xf]
    %99 = vrot.lane.b32.xlu0 %v98, 116
    %v100 = vpop.permute.xlu0 %99
    %vm101 = vcmask 7168
    %s102 = scalar_lea.vmem %s1, 12
    %103 = vst.msk [vmem:[%s102] ss:$16 sm:$0x3] %vm101, %v100
    %s104 = scalar_lea.vmem %s1, 12
    %105 = vst.msk [vmem:[%s104] ss:$16 sm:$0xc] %vm101, %v100
    %v106 = vld [vmem:[#allocation0] sm:$0xf]
    %107 = vrot.lane.b32.xlu0 %v106, 115
    %v108 = vpop.permute.xlu0 %107
    %vm109 = vcmask 7168
    %s110 = scalar_lea.vmem %s1, 13
    %111 = vst.msk [vmem:[%s110] ss:$16 sm:$0x3] %vm109, %v108
    %s112 = scalar_lea.vmem %s1, 13
    %113 = vst.msk [vmem:[%s112] ss:$16 sm:$0xc] %vm109, %v108
    %v114 = vld [vmem:[#allocation0] sm:$0xf]
    %115 = vrot.lane.b32.xlu0 %v114, 114
    %v116 = vpop.permute.xlu0 %115
    %vm117 = vcmask 7168
    %s118 = scalar_lea.vmem %s1, 14
    %119 = vst.msk [vmem:[%s118] ss:$16 sm:$0x3] %vm117, %v116
    %s120 = scalar_lea.vmem %s1, 14
    %121 = vst.msk [vmem:[%s120] ss:$16 sm:$0xc] %vm117, %v116
    %v122 = vld [vmem:[#allocation0] sm:$0xf]
    %123 = vrot.lane.b32.xlu0 %v122, 113
    %v124 = vpop.permute.xlu0 %123
    %vm125 = vcmask 7168
    %s126 = scalar_lea.vmem %s1, 15
    %127 = vst.msk [vmem:[%s126] ss:$16 sm:$0x3] %vm125, %v124
    %s128 = scalar_lea.vmem %s1, 15
    %129 = vst.msk [vmem:[%s128] ss:$16 sm:$0xc] %vm125, %v124

// kernel: tile.0
$region0: #{tile.0}
  %s0 = inlined_call_operand.vmem [shape: f32[4,32], index: 0, kind: input, shape index: {}]
  %s1 = inlined_call_operand.vmem [shape: f32[128,1], index: 1, kind: output, shape index: {}]
  $region1: #{tile.0} parent=0
    #allocation0 [shape = 'u8[4096]{0}', space=vmem, size = 0x1000, scoped, tag = 'scoped mem for input reshape']
    %s3 = ssub.s32 16, 1
    %v4 = vld [vmem:[%s0] sm:%s3]
    %5 = vst [vmem:[#allocation0] sm:%s3] %v4
    %v6 = vld [vmem:[#allocation0] sm:$0xf]
    %vm7 = vcmask 7168
    %8 = vst.msk [vmem:[%s1] sm:$0x1] %vm7, %v6
    %s9 = scalar_lea.vmem %s1, 31
    %10 = vst.msk [vmem:[%s9] sm:$0x2] %vm7, %v6
    %s11 = scalar_lea.vmem %s1, 62
    %12 = vst.msk [vmem:[%s11] sm:$0x4] %vm7, %v6
    %s13 = scalar_lea.vmem %s1, 93
    %14 = vst.msk [vmem:[%s13] sm:$0x8] %vm7, %v6
    %v15 = vld [vmem:[#allocation0] sm:$0xf]
    %16 = vrot.lane.b32.xlu0 %v15, 127
    %v17 = vpop.permute.xlu0 %16
    %vm18 = vcmask 7168
    %s19 = scalar_lea.vmem %s1, 1
    %20 = vst.msk [vmem:[%s19] sm:$0x1] %vm18, %v17
    %s21 = scalar_lea.vmem %s1, 32
    %22 = vst.msk [vmem:[%s21] sm:$0x2] %vm18, %v17
    %s23 = scalar_lea.vmem %s1, 63
    %24 = vst.msk [vmem:[%s23] sm:$0x4] %vm18, %v17
    %s25 = scalar_lea.vmem %s1, 94
    %26 = vst.msk [vmem:[%s25] sm:$0x8] %vm18, %v17
    %v27 = vld [vmem:[#allocation0] sm:$0xf]
    %28 = vrot.lane.b32.xlu0 %v27, 126
    %v29 = vpop.permute.xlu0 %28
    %vm30 = vcmask 7168
    %s31 = scalar_lea.vmem %s1, 2
    %32 = vst.msk [vmem:[%s31] sm:$0x1] %vm30, %v29
    %s33 = scalar_lea.vmem %s1, 33
    %34 = vst.msk [vmem:[%s33] sm:$0x2] %vm30, %v29
    %s35 = scalar_lea.vmem %s1, 64
    %36 = vst.msk [vmem:[%s35] sm:$0x4] %vm30, %v29
    %s37 = scalar_lea.vmem %s1, 95
    %38 = vst.msk [vmem:[%s37] sm:$0x8] %vm30, %v29
    %v39 = vld [vmem:[#allocation0] sm:$0xf]
    %40 = vrot.lane.b32.xlu0 %v39, 125
    %v41 = vpop.permute.xlu0 %40
    %vm42 = vcmask 7168
    %s43 = scalar_lea.vmem %s1, 3
    %44 = vst.msk [vmem:[%s43] sm:$0x1] %vm42, %v41
    %s45 = scalar_lea.vmem %s1, 34
    %46 = vst.msk [vmem:[%s45] sm:$0x2] %vm42, %v41
    %s47 = scalar_lea.vmem %s1, 65
    %48 = vst.msk [vmem:[%s47] sm:$0x4] %vm42, %v41
    %s49 = scalar_lea.vmem %s1, 96
    %50 = vst.msk [vmem:[%s49] sm:$0x8] %vm42, %v41
    %v51 = vld [vmem:[#allocation0] sm:$0xf]
    %52 = vrot.lane.b32.xlu0 %v51, 124
    %v53 = vpop.permute.xlu0 %52
    %vm54 = vcmask 7168
    %s55 = scalar_lea.vmem %s1, 4
    %56 = vst.msk [vmem:[%s55] sm:$0x1] %vm54, %v53
    %s57 = scalar_lea.vmem %s1, 35
    %58 = vst.msk [vmem:[%s57] sm:$0x2] %vm54, %v53
    %s59 = scalar_lea.vmem %s1, 66
    %60 = vst.msk [vmem:[%s59] sm:$0x4] %vm54, %v53
    %s61 = scalar_lea.vmem %s1, 97
    %62 = vst.msk [vmem:[%s61] sm:$0x8] %vm54, %v53
    %v63 = vld [vmem:[#allocation0] sm:$0xf]
    %64 = vrot.lane.b32.xlu0 %v63, 123
    %v65 = vpop.permute.xlu0 %64
    %vm66 = vcmask 7168
    %s67 = scalar_lea.vmem %s1, 5
    %68 = vst.msk [vmem:[%s67] sm:$0x1] %vm66, %v65
    %s69 = scalar_lea.vmem %s1, 36
    %70 = vst.msk [vmem:[%s69] sm:$0x2] %vm66, %v65
    %s71 = scalar_lea.vmem %s1, 67
    %72 = vst.msk [vmem:[%s71] sm:$0x4] %vm66, %v65
    %s73 = scalar_lea.vmem %s1, 98
    %74 = vst.msk [vmem:[%s73] sm:$0x8] %vm66, %v65
    %v75 = vld [vmem:[#allocation0] sm:$0xf]
    %76 = vrot.lane.b32.xlu0 %v75, 122
    %v77 = vpop.permute.xlu0 %76
    %vm78 = vcmask 7168
    %s79 = scalar_lea.vmem %s1, 6
    %80 = vst.msk [vmem:[%s79] sm:$0x1] %vm78, %v77
    %s81 = scalar_lea.vmem %s1, 37
    %82 = vst.msk [vmem:[%s81] sm:$0x2] %vm78, %v77
    %s83 = scalar_lea.vmem %s1, 68
    %84 = vst.msk [vmem:[%s83] sm:$0x4] %vm78, %v77
    %s85 = scalar_lea.vmem %s1, 99
    %86 = vst.msk [vmem:[%s85] sm:$0x8] %vm78, %v77
    %v87 = vld [vmem:[#allocation0] sm:$0xf]
    %88 = vrot.lane.b32.xlu0 %v87, 121
    %v89 = vpop.permute.xlu0 %88
    %vm90 = vcmask 7168
    %s91 = scalar_lea.vmem %s1, 7
    %92 = vst.msk [vmem:[%s91] sm:$0x1] %vm90, %v89
    %s93 = scalar_lea.vmem %s1, 38
    %94 = vst.msk [vmem:[%s93] sm:$0x2] %vm90, %v89
    %s95 = scalar_lea.vmem %s1, 69
    %96 = vst.msk [vmem:[%s95] sm:$0x4] %vm90, %v89
    %s97 = scalar_lea.vmem %s1, 100
    %98 = vst.msk [vmem:[%s97] sm:$0x8] %vm90, %v89
    %v99 = vld [vmem:[#allocation0] sm:$0xf]
    %100 = vrot.lane.b32.xlu0 %v99, 120
    %v101 = vpop.permute.xlu0 %100
    %vm102 = vcmask 7168
    %s103 = scalar_lea.vmem %s1, 8
    %104 = vst.msk [vmem:[%s103] sm:$0x1] %vm102, %v101
    %s105 = scalar_lea.vmem %s1, 39
    %106 = vst.msk [vmem:[%s105] sm:$0x2] %vm102, %v101
    %s107 = scalar_lea.vmem %s1, 70
    %108 = vst.msk [vmem:[%s107] sm:$0x4] %vm102, %v101
    %s109 = scalar_lea.vmem %s1, 101
    %110 = vst.msk [vmem:[%s109] sm:$0x8] %vm102, %v101
    %v111 = vld [vmem:[#allocation0] sm:$0xf]
    %112 = vrot.lane.b32.xlu0 %v111, 119
    %v113 = vpop.permute.xlu0 %112
    %vm114 = vcmask 7168
    %s115 = scalar_lea.vmem %s1, 9
    %116 = vst.msk [vmem:[%s115] sm:$0x1] %vm114, %v113
    %s117 = scalar_lea.vmem %s1, 40
    %118 = vst.msk [vmem:[%s117] sm:$0x2] %vm114, %v113
    %s119 = scalar_lea.vmem %s1, 71
    %120 = vst.msk [vmem:[%s119] sm:$0x4] %vm114, %v113
    %s121 = scalar_lea.vmem %s1, 102
    %122 = vst.msk [vmem:[%s121] sm:$0x8] %vm114, %v113
    %v123 = vld [vmem:[#allocation0] sm:$0xf]
    %124 = vrot.lane.b32.xlu0 %v123, 118
    %v125 = vpop.permute.xlu0 %124
    %vm126 = vcmask 7168
    %s127 = scalar_lea.vmem %s1, 10
    %128 = vst.msk [vmem:[%s127] sm:$0x1] %vm126, %v125
    %s129 = scalar_lea.vmem %s1, 41
    %130 = vst.msk [vmem:[%s129] sm:$0x2] %vm126, %v125
    %s131 = scalar_lea.vmem %s1, 72
    %132 = vst.msk [vmem:[%s131] sm:$0x4] %vm126, %v125
    %s133 = scalar_lea.vmem %s1, 103
    %134 = vst.msk [vmem:[%s133] sm:$0x8] %vm126, %v125
    %v135 = vld [vmem:[#allocation0] sm:$0xf]
    %136 = vrot.lane.b32.xlu0 %v135, 117
    %v137 = vpop.permute.xlu0 %136
    %vm138 = vcmask 7168
    %s139 = scalar_lea.vmem %s1, 11
    %140 = vst.msk [vmem:[%s139] sm:$0x1] %vm138, %v137
    %s141 = scalar_lea.vmem %s1, 42
    %142 = vst.msk [vmem:[%s141] sm:$0x2] %vm138, %v137
    %s143 = scalar_lea.vmem %s1, 73
    %144 = vst.msk [vmem:[%s143] sm:$0x4] %vm138, %v137
    %s145 = scalar_lea.vmem %s1, 104
    %146 = vst.msk [vmem:[%s145] sm:$0x8] %vm138, %v137
    %v147 = vld [vmem:[#allocation0] sm:$0xf]
    %148 = vrot.lane.b32.xlu0 %v147, 116
    %v149 = vpop.permute.xlu0 %148
    %vm150 = vcmask 7168
    %s151 = scalar_lea.vmem %s1, 12
    %152 = vst.msk [vmem:[%s151] sm:$0x1] %vm150, %v149
    %s153 = scalar_lea.vmem %s1, 43
    %154 = vst.msk [vmem:[%s153] sm:$0x2] %vm150, %v149
    %s155 = scalar_lea.vmem %s1, 74
    %156 = vst.msk [vmem:[%s155] sm:$0x4] %vm150, %v149
    %s157 = scalar_lea.vmem %s1, 105
    %158 = vst.msk [vmem:[%s157] sm:$0x8] %vm150, %v149
    %v159 = vld [vmem:[#allocation0] sm:$0xf]
    %160 = vrot.lane.b32.xlu0 %v159, 115
    %v161 = vpop.permute.xlu0 %160
    %vm162 = vcmask 7168
    %s163 = scalar_lea.vmem %s1, 13
    %164 = vst.msk [vmem:[%s163] sm:$0x1] %vm162, %v161
    %s165 = scalar_lea.vmem %s1, 44
    %166 = vst.msk [vmem:[%s165] sm:$0x2] %vm162, %v161
    %s167 = scalar_lea.vmem %s1, 75
    %168 = vst.msk [vmem:[%s167] sm:$0x4] %vm162, %v161
    %s169 = scalar_lea.vmem %s1, 106
    %170 = vst.msk [vmem:[%s169] sm:$0x8] %vm162, %v161
    %v171 = vld [vmem:[#allocation0] sm:$0xf]
    %172 = vrot.lane.b32.xlu0 %v171, 114
    %v173 = vpop.permute.xlu0 %172
    %vm174 = vcmask 7168
    %s175 = scalar_lea.vmem %s1, 14
    %176 = vst.msk [vmem:[%s175] sm:$0x1] %vm174, %v173
    %s177 = scalar_lea.vmem %s1, 45
    %178 = vst.msk [vmem:[%s177] sm:$0x2] %vm174, %v173
    %s179 = scalar_lea.vmem %s1, 76
    %180 = vst.msk [vmem:[%s179] sm:$0x4] %vm174, %v173
    %s181 = scalar_lea.vmem %s1, 107
    %182 = vst.msk [vmem:[%s181] sm:$0x8] %vm174, %v173
    %v183 = vld [vmem:[#allocation0] sm:$0xf]
    %184 = vrot.lane.b32.xlu0 %v183, 113
    %v185 = vpop.permute.xlu0 %184
    %vm186 = vcmask 7168
    %s187 = scalar_lea.vmem %s1, 15
    %188 = vst.msk [vmem:[%s187] sm:$0x1] %vm186, %v185
    %s189 = scalar_lea.vmem %s1, 46
    %190 = vst.msk [vmem:[%s189] sm:$0x2] %vm186, %v185
    %s191 = scalar_lea.vmem %s1, 77
    %192 = vst.msk [vmem:[%s191] sm:$0x4] %vm186, %v185
    %s193 = scalar_lea.vmem %s1, 108
    %194 = vst.msk [vmem:[%s193] sm:$0x8] %vm186, %v185
    %v195 = vld [vmem:[#allocation0] sm:$0xf]
    %196 = vrot.lane.b32.xlu0 %v195, 112
    %v197 = vpop.permute.xlu0 %196
    %vm198 = vcmask 7168
    %s199 = scalar_lea.vmem %s1, 16
    %200 = vst.msk [vmem:[%s199] sm:$0x1] %vm198, %v197
    %s201 = scalar_lea.vmem %s1, 47
    %202 = vst.msk [vmem:[%s201] sm:$0x2] %vm198, %v197
    %s203 = scalar_lea.vmem %s1, 78
    %204 = vst.msk [vmem:[%s203] sm:$0x4] %vm198, %v197
    %s205 = scalar_lea.vmem %s1, 109
    %206 = vst.msk [vmem:[%s205] sm:$0x8] %vm198, %v197
    %v207 = vld [vmem:[#allocation0] sm:$0xf]
    %208 = vrot.lane.b32.xlu0 %v207, 111
    %v209 = vpop.permute.xlu0 %208
    %vm210 = vcmask 7168
    %s211 = scalar_lea.vmem %s1, 17
    %212 = vst.msk [vmem:[%s211] sm:$0x1] %vm210, %v209
    %s213 = scalar_lea.vmem %s1, 48
    %214 = vst.msk [vmem:[%s213] sm:$0x2] %vm210, %v209
    %s215 = scalar_lea.vmem %s1, 79
    %216 = vst.msk [vmem:[%s215] sm:$0x4] %vm210, %v209
    %s217 = scalar_lea.vmem %s1, 110
    %218 = vst.msk [vmem:[%s217] sm:$0x8] %vm210, %v209
    %v219 = vld [vmem:[#allocation0] sm:$0xf]
    %220 = vrot.lane.b32.xlu0 %v219, 110
    %v221 = vpop.permute.xlu0 %220
    %vm222 = vcmask 7168
    %s223 = scalar_lea.vmem %s1, 18
    %224 = vst.msk [vmem:[%s223] sm:$0x1] %vm222, %v221
    %s225 = scalar_lea.vmem %s1, 49
    %226 = vst.msk [vmem:[%s225] sm:$0x2] %vm222, %v221
    %s227 = scalar_lea.vmem %s1, 80
    %228 = vst.msk [vmem:[%s227] sm:$0x4] %vm222, %v221
    %s229 = scalar_lea.vmem %s1, 111
    %230 = vst.msk [vmem:[%s229] sm:$0x8] %vm222, %v221
    %v231 = vld [vmem:[#allocation0] sm:$0xf]
    %232 = vrot.lane.b32.xlu0 %v231, 109
    %v233 = vpop.permute.xlu0 %232
    %vm234 = vcmask 7168
    %s235 = scalar_lea.vmem %s1, 19
    %236 = vst.msk [vmem:[%s235] sm:$0x1] %vm234, %v233
    %s237 = scalar_lea.vmem %s1, 50
    %238 = vst.msk [vmem:[%s237] sm:$0x2] %vm234, %v233
    %s239 = scalar_lea.vmem %s1, 81
    %240 = vst.msk [vmem:[%s239] sm:$0x4] %vm234, %v233
    %s241 = scalar_lea.vmem %s1, 112
    %242 = vst.msk [vmem:[%s241] sm:$0x8] %vm234, %v233
    %v243 = vld [vmem:[#allocation0] sm:$0xf]
    %244 = vrot.lane.b32.xlu0 %v243, 108
    %v245 = vpop.permute.xlu0 %244
    %vm246 = vcmask 7168
    %s247 = scalar_lea.vmem %s1, 20
    %248 = vst.msk [vmem:[%s247] sm:$0x1] %vm246, %v245
    %s249 = scalar_lea.vmem %s1, 51
    %250 = vst.msk [vmem:[%s249] sm:$0x2] %vm246, %v245
    %s251 = scalar_lea.vmem %s1, 82
    %252 = vst.msk [vmem:[%s251] sm:$0x4] %vm246, %v245
    %s253 = scalar_lea.vmem %s1, 113
    %254 = vst.msk [vmem:[%s253] sm:$0x8] %vm246, %v245
    %v255 = vld [vmem:[#allocation0] sm:$0xf]
    %256 = vrot.lane.b32.xlu0 %v255, 107
    %v257 = vpop.permute.xlu0 %256
    %vm258 = vcmask 7168
    %s259 = scalar_lea.vmem %s1, 21
    %260 = vst.msk [vmem:[%s259] sm:$0x1] %vm258, %v257
    %s261 = scalar_lea.vmem %s1, 52
    %262 = vst.msk [vmem:[%s261] sm:$0x2] %vm258, %v257
    %s263 = scalar_lea.vmem %s1, 83
    %264 = vst.msk [vmem:[%s263] sm:$0x4] %vm258, %v257
    %s265 = scalar_lea.vmem %s1, 114
    %266 = vst.msk [vmem:[%s265] sm:$0x8] %vm258, %v257
    %v267 = vld [vmem:[#allocation0] sm:$0xf]
    %268 = vrot.lane.b32.xlu0 %v267, 106
    %v269 = vpop.permute.xlu0 %268
    %vm270 = vcmask 7168
    %s271 = scalar_lea.vmem %s1, 22
    %272 = vst.msk [vmem:[%s271] sm:$0x1] %vm270, %v269
    %s273 = scalar_lea.vmem %s1, 53
    %274 = vst.msk [vmem:[%s273] sm:$0x2] %vm270, %v269
    %s275 = scalar_lea.vmem %s1, 84
    %276 = vst.msk [vmem:[%s275] sm:$0x4] %vm270, %v269
    %s277 = scalar_lea.vmem %s1, 115
    %278 = vst.msk [vmem:[%s277] sm:$0x8] %vm270, %v269
    %v279 = vld [vmem:[#allocation0] sm:$0xf]
    %280 = vrot.lane.b32.xlu0 %v279, 105
    %v281 = vpop.permute.xlu0 %280
    %vm282 = vcmask 7168
    %s283 = scalar_lea.vmem %s1, 23
    %284 = vst.msk [vmem:[%s283] sm:$0x1] %vm282, %v281
    %s285 = scalar_lea.vmem %s1, 54
    %286 = vst.msk [vmem:[%s285] sm:$0x2] %vm282, %v281
    %s287 = scalar_lea.vmem %s1, 85
    %288 = vst.msk [vmem:[%s287] sm:$0x4] %vm282, %v281
    %s289 = scalar_lea.vmem %s1, 116
    %290 = vst.msk [vmem:[%s289] sm:$0x8] %vm282, %v281
    %v291 = vld [vmem:[#allocation0] sm:$0xf]
    %292 = vrot.lane.b32.xlu0 %v291, 104
    %v293 = vpop.permute.xlu0 %292
    %vm294 = vcmask 7168
    %s295 = scalar_lea.vmem %s1, 24
    %296 = vst.msk [vmem:[%s295] sm:$0x1] %vm294, %v293
    %s297 = scalar_lea.vmem %s1, 55
    %298 = vst.msk [vmem:[%s297] sm:$0x2] %vm294, %v293
    %s299 = scalar_lea.vmem %s1, 86
    %300 = vst.msk [vmem:[%s299] sm:$0x4] %vm294, %v293
    %s301 = scalar_lea.vmem %s1, 117
    %302 = vst.msk [vmem:[%s301] sm:$0x8] %vm294, %v293
    %v303 = vld [vmem:[#allocation0] sm:$0xf]
    %304 = vrot.lane.b32.xlu0 %v303, 103
    %v305 = vpop.permute.xlu0 %304
    %vm306 = vcmask 7168
    %s307 = scalar_lea.vmem %s1, 25
    %308 = vst.msk [vmem:[%s307] sm:$0x1] %vm306, %v305
    %s309 = scalar_lea.vmem %s1, 56
    %310 = vst.msk [vmem:[%s309] sm:$0x2] %vm306, %v305
    %s311 = scalar_lea.vmem %s1, 87
    %312 = vst.msk [vmem:[%s311] sm:$0x4] %vm306, %v305
    %s313 = scalar_lea.vmem %s1, 118
    %314 = vst.msk [vmem:[%s313] sm:$0x8] %vm306, %v305
    %v315 = vld [vmem:[#allocation0] sm:$0xf]
    %316 = vrot.lane.b32.xlu0 %v315, 102
    %v317 = vpop.permute.xlu0 %316
    %vm318 = vcmask 7168
    %s319 = scalar_lea.vmem %s1, 26
    %320 = vst.msk [vmem:[%s319] sm:$0x1] %vm318, %v317
    %s321 = scalar_lea.vmem %s1, 57
    %322 = vst.msk [vmem:[%s321] sm:$0x2] %vm318, %v317
    %s323 = scalar_lea.vmem %s1, 88
    %324 = vst.msk [vmem:[%s323] sm:$0x4] %vm318, %v317
    %s325 = scalar_lea.vmem %s1, 119
    %326 = vst.msk [vmem:[%s325] sm:$0x8] %vm318, %v317
    %v327 = vld [vmem:[#allocation0] sm:$0xf]
    %328 = vrot.lane.b32.xlu0 %v327, 101
    %v329 = vpop.permute.xlu0 %328
    %vm330 = vcmask 7168
    %s331 = scalar_lea.vmem %s1, 27
    %332 = vst.msk [vmem:[%s331] sm:$0x1] %vm330, %v329
    %s333 = scalar_lea.vmem %s1, 58
    %334 = vst.msk [vmem:[%s333] sm:$0x2] %vm330, %v329
    %s335 = scalar_lea.vmem %s1, 89
    %336 = vst.msk [vmem:[%s335] sm:$0x4] %vm330, %v329
    %s337 = scalar_lea.vmem %s1, 120
    %338 = vst.msk [vmem:[%s337] sm:$0x8] %vm330, %v329
    %v339 = vld [vmem:[#allocation0] sm:$0xf]
    %340 = vrot.lane.b32.xlu0 %v339, 100
    %v341 = vpop.permute.xlu0 %340
    %vm342 = vcmask 7168
    %s343 = scalar_lea.vmem %s1, 28
    %344 = vst.msk [vmem:[%s343] sm:$0x1] %vm342, %v341
    %s345 = scalar_lea.vmem %s1, 59
    %346 = vst.msk [vmem:[%s345] sm:$0x2] %vm342, %v341
    %s347 = scalar_lea.vmem %s1, 90
    %348 = vst.msk [vmem:[%s347] sm:$0x4] %vm342, %v341
    %s349 = scalar_lea.vmem %s1, 121
    %350 = vst.msk [vmem:[%s349] sm:$0x8] %vm342, %v341
    %v351 = vld [vmem:[#allocation0] sm:$0xf]
    %352 = vrot.lane.b32.xlu0 %v351, 99
    %v353 = vpop.permute.xlu0 %352
    %vm354 = vcmask 7168
    %s355 = scalar_lea.vmem %s1, 29
    %356 = vst.msk [vmem:[%s355] sm:$0x1] %vm354, %v353
    %s357 = scalar_lea.vmem %s1, 60
    %358 = vst.msk [vmem:[%s357] sm:$0x2] %vm354, %v353
    %s359 = scalar_lea.vmem %s1, 91
    %360 = vst.msk [vmem:[%s359] sm:$0x4] %vm354, %v353
    %s361 = scalar_lea.vmem %s1, 122
    %362 = vst.msk [vmem:[%s361] sm:$0x8] %vm354, %v353
    %v363 = vld [vmem:[#allocation0] sm:$0xf]
    %364 = vrot.lane.b32.xlu0 %v363, 98
    %v365 = vpop.permute.xlu0 %364
    %vm366 = vcmask 7168
    %s367 = scalar_lea.vmem %s1, 30
    %368 = vst.msk [vmem:[%s367] sm:$0x1] %vm366, %v365
    %s369 = scalar_lea.vmem %s1, 61
    %370 = vst.msk [vmem:[%s369] sm:$0x2] %vm366, %v365
    %s371 = scalar_lea.vmem %s1, 92
    %372 = vst.msk [vmem:[%s371] sm:$0x4] %vm366, %v365
    %s373 = scalar_lea.vmem %s1, 123
    %374 = vst.msk [vmem:[%s373] sm:$0x8] %vm366, %v365
    %v375 = vld [vmem:[#allocation0] sm:$0xf]
    %376 = vrot.lane.b32.xlu0 %v375, 97
    %v377 = vpop.permute.xlu0 %376
    %vm378 = vcmask 7168
    %s379 = scalar_lea.vmem %s1, 31
    %380 = vst.msk [vmem:[%s379] sm:$0x1] %vm378, %v377
    %s381 = scalar_lea.vmem %s1, 62
    %382 = vst.msk [vmem:[%s381] sm:$0x2] %vm378, %v377
    %s383 = scalar_lea.vmem %s1, 93
    %384 = vst.msk [vmem:[%s383] sm:$0x4] %vm378, %v377
    %s385 = scalar_lea.vmem %s1, 124
    %386 = vst.msk [vmem:[%s385] sm:$0x8] %vm378, %v377

// kernel: generator_conv_forward.7
$region0: #{generator_conv_forward.7}
  #allocation0 [shape = 'u32[]', space=smem, size = 0x4, offset = 0x4, fixed_abs, tag = 'smem constant byte address 0x4 - core index']
  #allocation1 [shape = 'u32[72,128]{1,0:T(1,128)}', space=vmem, size = 0x9000, scoped, tag = 'internal scratch']
  %s0 = inlined_call_operand.vmem [shape: bf16[128,32], index: 0, kind: input, shape index: {}]
  %s1 = inlined_call_operand.vmem [shape: bf16[32,128], index: 1, kind: input, shape index: {}]
  %s2 = inlined_call_operand.vmem [shape: f32[128,1], index: 2, kind: input, shape index: {}]
  %s3 = inlined_call_operand.vmem [shape: f32[128,1], index: 3, kind: input, shape index: {}]
  %s4 = inlined_call_operand.vmem [shape: bf16[128,128], index: 4, kind: output, shape index: {}]
  %s5 = sld [smem:[#allocation0]]
  $region26: #{generator_conv_forward.7} parent=0
    _
  %s7 = ssub.s32 1, %s5
  %s8 = scalar_select 0, %s7, %s5
  // Predicated region
  $region2: #{generator_conv_forward.7} parent=0 // pred_check
    _
  $region3: #{generator_conv_forward.7} parent=0 // pred_check_branch
    %10 = sbr.rel (0) target = $region5
  $region4: #{generator_conv_forward.7} parent=0 // pred_region
    _
  $region5: #{generator_conv_forward.7} parent=0 // pred_fallthru
    _
  // Predicated region
  $region6: #{generator_conv_forward.7} parent=0 // pred_check
    _
  $region7: #{generator_conv_forward.7} parent=0 // pred_check_branch
    %12 = sbr.rel (0) target = $region9
  $region8: #{generator_conv_forward.7} parent=0 // pred_region
    _
  $region9: #{generator_conv_forward.7} parent=0 // pred_fallthru
    _
  // Predicated region
  $region10: #{generator_conv_forward.7} parent=0 // pred_check
    _
  $region11: #{generator_conv_forward.7} parent=0 // pred_check_branch
    %14 = sbr.rel (0) target = $region13
  $region12: #{generator_conv_forward.7} parent=0 // pred_region
    _
  $region13: #{generator_conv_forward.7} parent=0 // pred_fallthru
    _
  // Predicated region
  $region14: #{generator_conv_forward.7} parent=0 // pred_check
    _
  $region15: #{generator_conv_forward.7} parent=0 // pred_check_branch
    %16 = sbr.rel (0) target = $region17
  $region16: #{generator_conv_forward.7} parent=0 // pred_region
    _
  $region17: #{generator_conv_forward.7} parent=0 // pred_fallthru
    _
  %v18 = vld [vmem:[%s0] sm:$0xf]
  %v19 = vld [vmem:[%s0 + $0x4] sm:$0xf]
  %v20 = vld [vmem:[%s0 + $0x8] sm:$0xf]
  %v21 = vld [vmem:[%s0 + $0xc] sm:$0xf]
  %v22 = vld [vmem:[%s0 + $0x10] sm:$0xf]
  %v23 = vld [vmem:[%s0 + $0x14] sm:$0xf]
  %v24 = vld [vmem:[%s0 + $0x18] sm:$0xf]
  %v25 = vld [vmem:[%s0 + $0x1c] sm:$0xf]
  %v26 = vld [vmem:[%s0 + $0x20] sm:$0xf]
  %v27 = vld [vmem:[%s0 + $0x24] sm:$0xf]
  %v28 = vld [vmem:[%s0 + $0x28] sm:$0xf]
  %v29 = vld [vmem:[%s0 + $0x2c] sm:$0xf]
  %v30 = vld [vmem:[%s0 + $0x30] sm:$0xf]
  %v31 = vld [vmem:[%s0 + $0x34] sm:$0xf]
  %v32 = vld [vmem:[%s0 + $0x38] sm:$0xf]
  %v33 = vld [vmem:[%s0 + $0x3c] sm:$0xf]
  %v34 = vld [vmem:[%s1] sm:$0xf]
  %v35 = vld [vmem:[%s1 + $0x4] sm:$0xf]
  %v36 = vld [vmem:[%s1 + $0x8] sm:$0xf]
  %v37 = vld [vmem:[%s1 + $0xc] sm:$0xf]
  %v54 = vunpack.c.l.b16 %v18
  %v55 = vunpack.c.l.b16 %v19
  %v56 = vunpack.c.l.b16 %v20
  %v57 = vunpack.c.l.b16 %v21
  %v58 = vunpack.c.l.b16 %v22
  %v59 = vunpack.c.l.b16 %v23
  %v60 = vunpack.c.l.b16 %v24
  %v61 = vunpack.c.l.b16 %v25
  %v62 = vunpack.c.l.b16 %v26
  %v63 = vunpack.c.l.b16 %v27
  %v64 = vunpack.c.l.b16 %v28
  %v65 = vunpack.c.l.b16 %v29
  %v66 = vunpack.c.l.b16 %v30
  %v67 = vunpack.c.l.b16 %v31
  %v68 = vunpack.c.l.b16 %v32
  %v69 = vunpack.c.l.b16 %v33
  %v70 = vpack.c.b16 %v55, %v54
  %v71 = vpack.c.b16 %v57, %v56
  %v72 = vpack.c.b16 %v59, %v58
  %v73 = vpack.c.b16 %v61, %v60
  %v74 = vpack.c.b16 %v63, %v62
  %v75 = vpack.c.b16 %v65, %v64
  %v76 = vpack.c.b16 %v67, %v66
  %v77 = vpack.c.b16 %v69, %v68
  %v82 = vunpack.c.l.b16 %v34
  %v83 = vunpack.c.l.b16 %v35
  %v84 = vunpack.c.l.b16 %v36
  %v85 = vunpack.c.l.b16 %v37
  %v86 = vpack.c.b16 %v83, %v82
  %v87 = vpack.c.b16 %v85, %v84
  %vm90 = vcmask 261120
  %v92 = vsel %vm90, %v70, 0
  %v95 = vsel %vm90, %v71, 0
  %v98 = vsel %vm90, %v72, 0
  %v101 = vsel %vm90, %v73, 0
  %v104 = vsel %vm90, %v74, 0
  %v107 = vsel %vm90, %v75, 0
  %v110 = vsel %vm90, %v76, 0
  %v113 = vsel %vm90, %v77, 0
  %115 = vmatpush.bf16.msra.mxu0 0
  %116 = vmatpush.bf16.msra.mxu0 0
  %117 = vmatpush.bf16.msra.mxu0 0
  %118 = vmatpush.bf16.msra.mxu0 0
  %119 = vmatpush.bf16.msra.mxu0 0
  %120 = vmatpush.bf16.msra.mxu0 0
  %121 = vmatpush.bf16.msra.mxu0 %v87
  %122 = vmatpush.bf16.msra.mxu0 %v86
  %123 = vmatmul.bf16.gmra.mxu0 %v92
  %v124 = vpop.f32.mrf.mxu0
  %v125 = vadd.f32 0.0, %v124
  %v126 = vpop.f32.mrf.mxu0
  %v127 = vadd.f32 0.0, %v126
  %128 = vmatmul.bf16.gmra.mxu0 %v95
  %v129 = vpop.f32.mrf.mxu0
  %v130 = vadd.f32 0.0, %v129
  %v131 = vpop.f32.mrf.mxu0
  %v132 = vadd.f32 0.0, %v131
  %133 = vmatmul.bf16.gmra.mxu0 %v98
  %v134 = vpop.f32.mrf.mxu0
  %v135 = vadd.f32 0.0, %v134
  %v136 = vpop.f32.mrf.mxu0
  %v137 = vadd.f32 0.0, %v136
  %138 = vmatmul.bf16.gmra.mxu0 %v101
  %v139 = vpop.f32.mrf.mxu0
  %v140 = vadd.f32 0.0, %v139
  %v141 = vpop.f32.mrf.mxu0
  %v142 = vadd.f32 0.0, %v141
  %143 = vmatmul.bf16.gmra.mxu0 %v104
  %v144 = vpop.f32.mrf.mxu0
  %v145 = vadd.f32 0.0, %v144
  %v146 = vpop.f32.mrf.mxu0
  %v147 = vadd.f32 0.0, %v146
  %148 = vmatmul.bf16.gmra.mxu0 %v107
  %v149 = vpop.f32.mrf.mxu0
  %v150 = vadd.f32 0.0, %v149
  %v151 = vpop.f32.mrf.mxu0
  %v152 = vadd.f32 0.0, %v151
  %153 = vmatmul.bf16.gmra.mxu0 %v110
  %v154 = vpop.f32.mrf.mxu0
  %v155 = vadd.f32 0.0, %v154
  %v156 = vpop.f32.mrf.mxu0
  %v157 = vadd.f32 0.0, %v156
  %158 = vmatmul.bf16.gmra.mxu0 %v113
  %v159 = vpop.f32.mrf.mxu0
  %v160 = vadd.f32 0.0, %v159
  %v161 = vpop.f32.mrf.mxu0
  %v162 = vadd.f32 0.0, %v161
  %163 = vdwg.mxu0
  %v164 = vld [vmem:[%s2] sm:$0xff]
  %v165 = vld [vmem:[%s2 + $0x8] sm:$0xff]
  %v166 = vld [vmem:[%s2 + $0x10] sm:$0xff]
  %v167 = vld [vmem:[%s2 + $0x18] sm:$0xff]
  %v168 = vld [vmem:[%s2 + $0x20] sm:$0xff]
  %v169 = vld [vmem:[%s2 + $0x28] sm:$0xff]
  %v170 = vld [vmem:[%s2 + $0x30] sm:$0xff]
  %v171 = vld [vmem:[%s2 + $0x38] sm:$0xff]
  %v172 = vld [vmem:[%s2 + $0x40] sm:$0xff]
  %v173 = vld [vmem:[%s2 + $0x48] sm:$0xff]
  %v174 = vld [vmem:[%s2 + $0x50] sm:$0xff]
  %v175 = vld [vmem:[%s2 + $0x58] sm:$0xff]
  %v176 = vld [vmem:[%s2 + $0x60] sm:$0xff]
  %v177 = vld [vmem:[%s2 + $0x68] sm:$0xff]
  %v178 = vld [vmem:[%s2 + $0x70] sm:$0xff]
  %v179 = vld [vmem:[%s2 + $0x78] sm:$0xff]
  %181 = vset.pattern.permute.xlu0 0
  %182 = vperm.xlu0 %181, %v164
  %v183 = vpop.permute.xlu0 %182
  %186 = vset.pattern.permute.xlu0 0
  %187 = vperm.xlu0 %186, %v165
  %v188 = vpop.permute.xlu0 %187
  %191 = vset.pattern.permute.xlu0 0
  %192 = vperm.xlu0 %191, %v166
  %v193 = vpop.permute.xlu0 %192
  %196 = vset.pattern.permute.xlu0 0
  %197 = vperm.xlu0 %196, %v167
  %v198 = vpop.permute.xlu0 %197
  %201 = vset.pattern.permute.xlu0 0
  %202 = vperm.xlu0 %201, %v168
  %v203 = vpop.permute.xlu0 %202
  %206 = vset.pattern.permute.xlu0 0
  %207 = vperm.xlu0 %206, %v169
  %v208 = vpop.permute.xlu0 %207
  %211 = vset.pattern.permute.xlu0 0
  %212 = vperm.xlu0 %211, %v170
  %v213 = vpop.permute.xlu0 %212
  %216 = vset.pattern.permute.xlu0 0
  %217 = vperm.xlu0 %216, %v171
  %v218 = vpop.permute.xlu0 %217
  %221 = vset.pattern.permute.xlu0 0
  %222 = vperm.xlu0 %221, %v172
  %v223 = vpop.permute.xlu0 %222
  %226 = vset.pattern.permute.xlu0 0
  %227 = vperm.xlu0 %226, %v173
  %v228 = vpop.permute.xlu0 %227
  %231 = vset.pattern.permute.xlu0 0
  %232 = vperm.xlu0 %231, %v174
  %v233 = vpop.permute.xlu0 %232
  %236 = vset.pattern.permute.xlu0 0
  %237 = vperm.xlu0 %236, %v175
  %v238 = vpop.permute.xlu0 %237
  %241 = vset.pattern.permute.xlu0 0
  %242 = vperm.xlu0 %241, %v176
  %v243 = vpop.permute.xlu0 %242
  %246 = vset.pattern.permute.xlu0 0
  %247 = vperm.xlu0 %246, %v177
  %v248 = vpop.permute.xlu0 %247
  %251 = vset.pattern.permute.xlu0 0
  %252 = vperm.xlu0 %251, %v178
  %v253 = vpop.permute.xlu0 %252
  %256 = vset.pattern.permute.xlu0 0
  %257 = vperm.xlu0 %256, %v179
  %v258 = vpop.permute.xlu0 %257
  %v260 = vmul.f32 %v125, %v183
  %v261 = vmul.f32 %v127, %v188
  %v262 = vmul.f32 %v130, %v193
  %v263 = vmul.f32 %v132, %v198
  %v264 = vmul.f32 %v135, %v203
  %v265 = vmul.f32 %v137, %v208
  %v266 = vmul.f32 %v140, %v213
  %v267 = vmul.f32 %v142, %v218
  %v268 = vmul.f32 %v145, %v223
  %v269 = vmul.f32 %v147, %v228
  %v270 = vmul.f32 %v150, %v233
  %v271 = vmul.f32 %v152, %v238
  %v272 = vmul.f32 %v155, %v243
  %v273 = vmul.f32 %v157, %v248
  %v274 = vmul.f32 %v160, %v253
  %v275 = vmul.f32 %v162, %v258
  %v276 = vld [vmem:[%s3] sm:$0xff]
  %v277 = vld [vmem:[%s3 + $0x8] sm:$0xff]
  %v278 = vld [vmem:[%s3 + $0x10] sm:$0xff]
  %v279 = vld [vmem:[%s3 + $0x18] sm:$0xff]
  %v280 = vld [vmem:[%s3 + $0x20] sm:$0xff]
  %v281 = vld [vmem:[%s3 + $0x28] sm:$0xff]
  %v282 = vld [vmem:[%s3 + $0x30] sm:$0xff]
  %v283 = vld [vmem:[%s3 + $0x38] sm:$0xff]
  %v284 = vld [vmem:[%s3 + $0x40] sm:$0xff]
  %v285 = vld [vmem:[%s3 + $0x48] sm:$0xff]
  %v286 = vld [vmem:[%s3 + $0x50] sm:$0xff]
  %v287 = vld [vmem:[%s3 + $0x58] sm:$0xff]
  %v288 = vld [vmem:[%s3 + $0x60] sm:$0xff]
  %v289 = vld [vmem:[%s3 + $0x68] sm:$0xff]
  %v290 = vld [vmem:[%s3 + $0x70] sm:$0xff]
  %v291 = vld [vmem:[%s3 + $0x78] sm:$0xff]
  %293 = vset.pattern.permute.xlu0 0
  %294 = vperm.xlu0 %293, %v276
  %v295 = vpop.permute.xlu0 %294
  %298 = vset.pattern.permute.xlu0 0
  %299 = vperm.xlu0 %298, %v277
  %v300 = vpop.permute.xlu0 %299
  %303 = vset.pattern.permute.xlu0 0
  %304 = vperm.xlu0 %303, %v278
  %v305 = vpop.permute.xlu0 %304
  %308 = vset.pattern.permute.xlu0 0
  %309 = vperm.xlu0 %308, %v279
  %v310 = vpop.permute.xlu0 %309
  %313 = vset.pattern.permute.xlu0 0
  %314 = vperm.xlu0 %313, %v280
  %v315 = vpop.permute.xlu0 %314
  %318 = vset.pattern.permute.xlu0 0
  %319 = vperm.xlu0 %318, %v281
  %v320 = vpop.permute.xlu0 %319
  %323 = vset.pattern.permute.xlu0 0
  %324 = vperm.xlu0 %323, %v282
  %v325 = vpop.permute.xlu0 %324
  %328 = vset.pattern.permute.xlu0 0
  %329 = vperm.xlu0 %328, %v283
  %v330 = vpop.permute.xlu0 %329
  %333 = vset.pattern.permute.xlu0 0
  %334 = vperm.xlu0 %333, %v284
  %v335 = vpop.permute.xlu0 %334
  %338 = vset.pattern.permute.xlu0 0
  %339 = vperm.xlu0 %338, %v285
  %v340 = vpop.permute.xlu0 %339
  %343 = vset.pattern.permute.xlu0 0
  %344 = vperm.xlu0 %343, %v286
  %v345 = vpop.permute.xlu0 %344
  %348 = vset.pattern.permute.xlu0 0
  %349 = vperm.xlu0 %348, %v287
  %v350 = vpop.permute.xlu0 %349
  %353 = vset.pattern.permute.xlu0 0
  %354 = vperm.xlu0 %353, %v288
  %v355 = vpop.permute.xlu0 %354
  %358 = vset.pattern.permute.xlu0 0
  %359 = vperm.xlu0 %358, %v289
  %v360 = vpop.permute.xlu0 %359
  %363 = vset.pattern.permute.xlu0 0
  %364 = vperm.xlu0 %363, %v290
  %v365 = vpop.permute.xlu0 %364
  %368 = vset.pattern.permute.xlu0 0
  %369 = vperm.xlu0 %368, %v291
  %v370 = vpop.permute.xlu0 %369
  %v372 = vadd.f32 %v260, %v295
  %v373 = vadd.f32 %v261, %v300
  %v374 = vadd.f32 %v262, %v305
  %v375 = vadd.f32 %v263, %v310
  %v376 = vadd.f32 %v264, %v315
  %v377 = vadd.f32 %v265, %v320
  %v378 = vadd.f32 %v266, %v325
  %v379 = vadd.f32 %v267, %v330
  %v380 = vadd.f32 %v268, %v335
  %v381 = vadd.f32 %v269, %v340
  %v382 = vadd.f32 %v270, %v345
  %v383 = vadd.f32 %v271, %v350
  %v384 = vadd.f32 %v272, %v355
  %v385 = vadd.f32 %v273, %v360
  %v386 = vadd.f32 %v274, %v365
  %v387 = vadd.f32 %v275, %v370
  %vm388 = vcmp.gt.f32.partialorder %v372, 0.0
  %vm389 = vcmp.gt.f32.partialorder %v373, 0.0
  %vm390 = vcmp.gt.f32.partialorder %v374, 0.0
  %vm391 = vcmp.gt.f32.partialorder %v375, 0.0
  %vm392 = vcmp.gt.f32.partialorder %v376, 0.0
  %vm393 = vcmp.gt.f32.partialorder %v377, 0.0
  %vm394 = vcmp.gt.f32.partialorder %v378, 0.0
  %vm395 = vcmp.gt.f32.partialorder %v379, 0.0
  %vm396 = vcmp.gt.f32.partialorder %v380, 0.0
  %vm397 = vcmp.gt.f32.partialorder %v381, 0.0
  %vm398 = vcmp.gt.f32.partialorder %v382, 0.0
  %vm399 = vcmp.gt.f32.partialorder %v383, 0.0
  %vm400 = vcmp.gt.f32.partialorder %v384, 0.0
  %vm401 = vcmp.gt.f32.partialorder %v385, 0.0
  %vm402 = vcmp.gt.f32.partialorder %v386, 0.0
  %vm403 = vcmp.gt.f32.partialorder %v387, 0.0
  %v404 = vmul.f32 %v372, 0.2
  %v405 = vmul.f32 %v373, 0.2
  %v406 = vmul.f32 %v374, 0.2
  %v407 = vmul.f32 %v375, 0.2
  %v408 = vmul.f32 %v376, 0.2
  %v409 = vmul.f32 %v377, 0.2
  %v410 = vmul.f32 %v378, 0.2
  %v411 = vmul.f32 %v379, 0.2
  %v412 = vmul.f32 %v380, 0.2
  %v413 = vmul.f32 %v381, 0.2
  %v414 = vmul.f32 %v382, 0.2
  %v415 = vmul.f32 %v383, 0.2
  %v416 = vmul.f32 %v384, 0.2
  %v417 = vmul.f32 %v385, 0.2
  %v418 = vmul.f32 %v386, 0.2
  %v419 = vmul.f32 %v387, 0.2
  %v420 = vsel %vm388, %v372, %v404
  %v421 = vsel %vm389, %v373, %v405
  %v422 = vsel %vm390, %v374, %v406
  %v423 = vsel %vm391, %v375, %v407
  %v424 = vsel %vm392, %v376, %v408
  %v425 = vsel %vm393, %v377, %v409
  %v426 = vsel %vm394, %v378, %v410
  %v427 = vsel %vm395, %v379, %v411
  %v428 = vsel %vm396, %v380, %v412
  %v429 = vsel %vm397, %v381, %v413
  %v430 = vsel %vm398, %v382, %v414
  %v431 = vsel %vm399, %v383, %v415
  %v432 = vsel %vm400, %v384, %v416
  %v433 = vsel %vm401, %v385, %v417
  %v434 = vsel %vm402, %v386, %v418
  %v435 = vsel %vm403, %v387, %v419
  %v436 = vpack.c.bf16 %v420, %v420
  %v437 = vpack.c.bf16 %v421, %v421
  %v438 = vpack.c.bf16 %v422, %v422
  %v439 = vpack.c.bf16 %v423, %v423
  %v440 = vpack.c.bf16 %v424, %v424
  %v441 = vpack.c.bf16 %v425, %v425
  %v442 = vpack.c.bf16 %v426, %v426
  %v443 = vpack.c.bf16 %v427, %v427
  %v444 = vpack.c.bf16 %v428, %v428
  %v445 = vpack.c.bf16 %v429, %v429
  %v446 = vpack.c.bf16 %v430, %v430
  %v447 = vpack.c.bf16 %v431, %v431
  %v448 = vpack.c.bf16 %v432, %v432
  %v449 = vpack.c.bf16 %v433, %v433
  %v450 = vpack.c.bf16 %v434, %v434
  %v451 = vpack.c.bf16 %v435, %v435
  %452 = vst [vmem:[%s4] sm:$0xf] %v436
  %453 = vst [vmem:[%s4 + $0x4] sm:$0xf] %v437
  %454 = vst [vmem:[%s4 + $0x8] sm:$0xf] %v438
  %455 = vst [vmem:[%s4 + $0xc] sm:$0xf] %v439
  %456 = vst [vmem:[%s4 + $0x10] sm:$0xf] %v440
  %457 = vst [vmem:[%s4 + $0x14] sm:$0xf] %v441
  %458 = vst [vmem:[%s4 + $0x18] sm:$0xf] %v442
  %459 = vst [vmem:[%s4 + $0x1c] sm:$0xf] %v443
  %460 = vst [vmem:[%s4 + $0x20] sm:$0xf] %v444
  %461 = vst [vmem:[%s4 + $0x24] sm:$0xf] %v445
  %462 = vst [vmem:[%s4 + $0x28] sm:$0xf] %v446
  %463 = vst [vmem:[%s4 + $0x2c] sm:$0xf] %v447
  %464 = vst [vmem:[%s4 + $0x30] sm:$0xf] %v448
  %465 = vst [vmem:[%s4 + $0x34] sm:$0xf] %v449
  %466 = vst [vmem:[%s4 + $0x38] sm:$0xf] %v450
  %467 = vst [vmem:[%s4 + $0x3c] sm:$0xf] %v451
  // Predicated region
  $region18: #{generator_conv_forward.7} parent=0 // pred_check
    _
  $region19: #{generator_conv_forward.7} parent=0 // pred_check_branch
    %469 = sbr.rel (0) target = $region21
  $region20: #{generator_conv_forward.7} parent=0 // pred_region
    _
  $region21: #{generator_conv_forward.7} parent=0 // pred_fallthru
    _
  // Predicated region
  $region22: #{generator_conv_forward.7} parent=0 // pred_check
    _
  $region23: #{generator_conv_forward.7} parent=0 // pred_check_branch
    %471 = sbr.rel (0) target = $region25
  $region24: #{generator_conv_forward.7} parent=0 // pred_region
    _
  $region25: #{generator_conv_forward.7} parent=0 // pred_fallthru
    _

// kernel: generator_conv_forward.8
$region0: #{generator_conv_forward.8}
  #allocation0 [shape = 'u32[]', space=smem, size = 0x4, offset = 0x4, fixed_abs, tag = 'smem constant byte address 0x4 - core index']
  #allocation1 [shape = 'u32[72,128]{1,0:T(1,128)}', space=vmem, size = 0x9000, scoped, tag = 'internal scratch']
  %s0 = inlined_call_operand.vmem [shape: bf16[64,128], index: 0, kind: input, shape index: {}]
  %s1 = inlined_call_operand.vmem [shape: bf16[128,128], index: 1, kind: input, shape index: {}]
  %s2 = inlined_call_operand.vmem [shape: f32[64,1], index: 2, kind: input, shape index: {}]
  %s3 = inlined_call_operand.vmem [shape: f32[64,1], index: 3, kind: input, shape index: {}]
  %s4 = inlined_call_operand.vmem [shape: bf16[64,128], index: 4, kind: output, shape index: {}]
  %s5 = sld [smem:[#allocation0]]
  $region26: #{generator_conv_forward.8} parent=0
    _
  %s7 = ssub.s32 1, %s5
  %s8 = scalar_select 0, %s7, %s5
  // Predicated region
  $region2: #{generator_conv_forward.8} parent=0 // pred_check
    _
  $region3: #{generator_conv_forward.8} parent=0 // pred_check_branch
    %10 = sbr.rel (0) target = $region5
  $region4: #{generator_conv_forward.8} parent=0 // pred_region
    _
  $region5: #{generator_conv_forward.8} parent=0 // pred_fallthru
    _
  // Predicated region
  $region6: #{generator_conv_forward.8} parent=0 // pred_check
    _
  $region7: #{generator_conv_forward.8} parent=0 // pred_check_branch
    %12 = sbr.rel (0) target = $region9
  $region8: #{generator_conv_forward.8} parent=0 // pred_region
    _
  $region9: #{generator_conv_forward.8} parent=0 // pred_fallthru
    _
  // Predicated region
  $region10: #{generator_conv_forward.8} parent=0 // pred_check
    _
  $region11: #{generator_conv_forward.8} parent=0 // pred_check_branch
    %14 = sbr.rel (0) target = $region13
  $region12: #{generator_conv_forward.8} parent=0 // pred_region
    _
  $region13: #{generator_conv_forward.8} parent=0 // pred_fallthru
    _
  // Predicated region
  $region14: #{generator_conv_forward.8} parent=0 // pred_check
    _
  $region15: #{generator_conv_forward.8} parent=0 // pred_check_branch
    %16 = sbr.rel (0) target = $region17
  $region16: #{generator_conv_forward.8} parent=0 // pred_region
    _
  $region17: #{generator_conv_forward.8} parent=0 // pred_fallthru
    _
  %v17 = vld [vmem:[%s0] sm:$0xf]
  %v18 = vld [vmem:[%s0 + $0x4] sm:$0xf]
  %v19 = vld [vmem:[%s0 + $0x8] sm:$0xf]
  %v20 = vld [vmem:[%s0 + $0xc] sm:$0xf]
  %v21 = vld [vmem:[%s0 + $0x10] sm:$0xf]
  %v22 = vld [vmem:[%s0 + $0x14] sm:$0xf]
  %v23 = vld [vmem:[%s0 + $0x18] sm:$0xf]
  %v24 = vld [vmem:[%s0 + $0x1c] sm:$0xf]
  %v25 = vld [vmem:[%s1] sm:$0xf]
  %v26 = vld [vmem:[%s1 + $0x4] sm:$0xf]
  %v27 = vld [vmem:[%s1 + $0x8] sm:$0xf]
  %v28 = vld [vmem:[%s1 + $0xc] sm:$0xf]
  %v29 = vld [vmem:[%s1 + $0x10] sm:$0xf]
  %v30 = vld [vmem:[%s1 + $0x14] sm:$0xf]
  %v31 = vld [vmem:[%s1 + $0x18] sm:$0xf]
  %v32 = vld [vmem:[%s1 + $0x1c] sm:$0xf]
  %v33 = vld [vmem:[%s1 + $0x20] sm:$0xf]
  %v34 = vld [vmem:[%s1 + $0x24] sm:$0xf]
  %v35 = vld [vmem:[%s1 + $0x28] sm:$0xf]
  %v36 = vld [vmem:[%s1 + $0x2c] sm:$0xf]
  %v37 = vld [vmem:[%s1 + $0x30] sm:$0xf]
  %v38 = vld [vmem:[%s1 + $0x34] sm:$0xf]
  %v39 = vld [vmem:[%s1 + $0x38] sm:$0xf]
  %v40 = vld [vmem:[%s1 + $0x3c] sm:$0xf]
  %v49 = vunpack.c.l.b16 %v17
  %v50 = vunpack.c.l.b16 %v18
  %v51 = vunpack.c.l.b16 %v19
  %v52 = vunpack.c.l.b16 %v20
  %v53 = vunpack.c.l.b16 %v21
  %v54 = vunpack.c.l.b16 %v22
  %v55 = vunpack.c.l.b16 %v23
  %v56 = vunpack.c.l.b16 %v24
  %v57 = vpack.c.b16 %v50, %v49
  %v58 = vpack.c.b16 %v52, %v51
  %v59 = vpack.c.b16 %v54, %v53
  %v60 = vpack.c.b16 %v56, %v55
  %v81 = vunpack.c.l.b16 %v25
  %v82 = vunpack.c.l.b16 %v26
  %v83 = vunpack.c.l.b16 %v27
  %v84 = vunpack.c.l.b16 %v28
  %v85 = vunpack.c.l.b16 %v29
  %v86 = vunpack.c.l.b16 %v30
  %v87 = vunpack.c.l.b16 %v31
  %v88 = vunpack.c.l.b16 %v32
  %v89 = vunpack.c.l.b16 %v33
  %v90 = vunpack.c.l.b16 %v34
  %v91 = vunpack.c.l.b16 %v35
  %v92 = vunpack.c.l.b16 %v36
  %v93 = vunpack.c.l.b16 %v37
  %v94 = vunpack.c.l.b16 %v38
  %v95 = vunpack.c.l.b16 %v39
  %v96 = vunpack.c.l.b16 %v40
  %v97 = vpack.c.b16 %v82, %v81
  %v98 = vpack.c.b16 %v84, %v83
  %v99 = vpack.c.b16 %v86, %v85
  %v100 = vpack.c.b16 %v88, %v87
  %v101 = vpack.c.b16 %v90, %v89
  %v102 = vpack.c.b16 %v92, %v91
  %v103 = vpack.c.b16 %v94, %v93
  %v104 = vpack.c.b16 %v96, %v95
  %113 = vmatpush.bf16.msra.mxu0 %v104
  %114 = vmatpush.bf16.msra.mxu0 %v103
  %115 = vmatpush.bf16.msra.mxu0 %v102
  %116 = vmatpush.bf16.msra.mxu0 %v101
  %117 = vmatpush.bf16.msra.mxu0 %v100
  %118 = vmatpush.bf16.msra.mxu0 %v99
  %119 = vmatpush.bf16.msra.mxu0 %v98
  %120 = vmatpush.bf16.msra.mxu0 %v97
  %121 = vmatmul.bf16.gmra.mxu0 %v57
  %v122 = vpop.f32.mrf.mxu0
  %v123 = vadd.f32 0.0, %v122
  %v124 = vpop.f32.mrf.mxu0
  %v125 = vadd.f32 0.0, %v124
  %126 = vmatmul.bf16.gmra.mxu0 %v58
  %v127 = vpop.f32.mrf.mxu0
  %v128 = vadd.f32 0.0, %v127
  %v129 = vpop.f32.mrf.mxu0
  %v130 = vadd.f32 0.0, %v129
  %131 = vmatmul.bf16.gmra.mxu0 %v59
  %v132 = vpop.f32.mrf.mxu0
  %v133 = vadd.f32 0.0, %v132
  %v134 = vpop.f32.mrf.mxu0
  %v135 = vadd.f32 0.0, %v134
  %136 = vmatmul.bf16.gmra.mxu0 %v60
  %v137 = vpop.f32.mrf.mxu0
  %v138 = vadd.f32 0.0, %v137
  %v139 = vpop.f32.mrf.mxu0
  %v140 = vadd.f32 0.0, %v139
  %141 = vdwg.mxu0
  %v142 = vld [vmem:[%s2] sm:$0xff]
  %v143 = vld [vmem:[%s2 + $0x8] sm:$0xff]
  %v144 = vld [vmem:[%s2 + $0x10] sm:$0xff]
  %v145 = vld [vmem:[%s2 + $0x18] sm:$0xff]
  %v146 = vld [vmem:[%s2 + $0x20] sm:$0xff]
  %v147 = vld [vmem:[%s2 + $0x28] sm:$0xff]
  %v148 = vld [vmem:[%s2 + $0x30] sm:$0xff]
  %v149 = vld [vmem:[%s2 + $0x38] sm:$0xff]
  %151 = vset.pattern.permute.xlu0 0
  %152 = vperm.xlu0 %151, %v142
  %v153 = vpop.permute.xlu0 %152
  %156 = vset.pattern.permute.xlu0 0
  %157 = vperm.xlu0 %156, %v143
  %v158 = vpop.permute.xlu0 %157
  %161 = vset.pattern.permute.xlu0 0
  %162 = vperm.xlu0 %161, %v144
  %v163 = vpop.permute.xlu0 %162
  %166 = vset.pattern.permute.xlu0 0
  %167 = vperm.xlu0 %166, %v145
  %v168 = vpop.permute.xlu0 %167
  %171 = vset.pattern.permute.xlu0 0
  %172 = vperm.xlu0 %171, %v146
  %v173 = vpop.permute.xlu0 %172
  %176 = vset.pattern.permute.xlu0 0
  %177 = vperm.xlu0 %176, %v147
  %v178 = vpop.permute.xlu0 %177
  %181 = vset.pattern.permute.xlu0 0
  %182 = vperm.xlu0 %181, %v148
  %v183 = vpop.permute.xlu0 %182
  %186 = vset.pattern.permute.xlu0 0
  %187 = vperm.xlu0 %186, %v149
  %v188 = vpop.permute.xlu0 %187
  %v190 = vmul.f32 %v123, %v153
  %v191 = vmul.f32 %v125, %v158
  %v192 = vmul.f32 %v128, %v163
  %v193 = vmul.f32 %v130, %v168
  %v194 = vmul.f32 %v133, %v173
  %v195 = vmul.f32 %v135, %v178
  %v196 = vmul.f32 %v138, %v183
  %v197 = vmul.f32 %v140, %v188
  %v198 = vld [vmem:[%s3] sm:$0xff]
  %v199 = vld [vmem:[%s3 + $0x8] sm:$0xff]
  %v200 = vld [vmem:[%s3 + $0x10] sm:$0xff]
  %v201 = vld [vmem:[%s3 + $0x18] sm:$0xff]
  %v202 = vld [vmem:[%s3 + $0x20] sm:$0xff]
  %v203 = vld [vmem:[%s3 + $0x28] sm:$0xff]
  %v204 = vld [vmem:[%s3 + $0x30] sm:$0xff]
  %v205 = vld [vmem:[%s3 + $0x38] sm:$0xff]
  %207 = vset.pattern.permute.xlu0 0
  %208 = vperm.xlu0 %207, %v198
  %v209 = vpop.permute.xlu0 %208
  %212 = vset.pattern.permute.xlu0 0
  %213 = vperm.xlu0 %212, %v199
  %v214 = vpop.permute.xlu0 %213
  %217 = vset.pattern.permute.xlu0 0
  %218 = vperm.xlu0 %217, %v200
  %v219 = vpop.permute.xlu0 %218
  %222 = vset.pattern.permute.xlu0 0
  %223 = vperm.xlu0 %222, %v201
  %v224 = vpop.permute.xlu0 %223
  %227 = vset.pattern.permute.xlu0 0
  %228 = vperm.xlu0 %227, %v202
  %v229 = vpop.permute.xlu0 %228
  %232 = vset.pattern.permute.xlu0 0
  %233 = vperm.xlu0 %232, %v203
  %v234 = vpop.permute.xlu0 %233
  %237 = vset.pattern.permute.xlu0 0
  %238 = vperm.xlu0 %237, %v204
  %v239 = vpop.permute.xlu0 %238
  %242 = vset.pattern.permute.xlu0 0
  %243 = vperm.xlu0 %242, %v205
  %v244 = vpop.permute.xlu0 %243
  %v246 = vadd.f32 %v190, %v209
  %v247 = vadd.f32 %v191, %v214
  %v248 = vadd.f32 %v192, %v219
  %v249 = vadd.f32 %v193, %v224
  %v250 = vadd.f32 %v194, %v229
  %v251 = vadd.f32 %v195, %v234
  %v252 = vadd.f32 %v196, %v239
  %v253 = vadd.f32 %v197, %v244
  %vm254 = vcmp.gt.f32.partialorder %v246, 0.0
  %vm255 = vcmp.gt.f32.partialorder %v247, 0.0
  %vm256 = vcmp.gt.f32.partialorder %v248, 0.0
  %vm257 = vcmp.gt.f32.partialorder %v249, 0.0
  %vm258 = vcmp.gt.f32.partialorder %v250, 0.0
  %vm259 = vcmp.gt.f32.partialorder %v251, 0.0
  %vm260 = vcmp.gt.f32.partialorder %v252, 0.0
  %vm261 = vcmp.gt.f32.partialorder %v253, 0.0
  %v262 = vmul.f32 %v246, 0.2
  %v263 = vmul.f32 %v247, 0.2
  %v264 = vmul.f32 %v248, 0.2
  %v265 = vmul.f32 %v249, 0.2
  %v266 = vmul.f32 %v250, 0.2
  %v267 = vmul.f32 %v251, 0.2
  %v268 = vmul.f32 %v252, 0.2
  %v269 = vmul.f32 %v253, 0.2
  %v270 = vsel %vm254, %v246, %v262
  %v271 = vsel %vm255, %v247, %v263
  %v272 = vsel %vm256, %v248, %v264
  %v273 = vsel %vm257, %v249, %v265
  %v274 = vsel %vm258, %v250, %v266
  %v275 = vsel %vm259, %v251, %v267
  %v276 = vsel %vm260, %v252, %v268
  %v277 = vsel %vm261, %v253, %v269
  %v278 = vpack.c.bf16 %v270, %v270
  %v279 = vpack.c.bf16 %v271, %v271
  %v280 = vpack.c.bf16 %v272, %v272
  %v281 = vpack.c.bf16 %v273, %v273
  %v282 = vpack.c.bf16 %v274, %v274
  %v283 = vpack.c.bf16 %v275, %v275
  %v284 = vpack.c.bf16 %v276, %v276
  %v285 = vpack.c.bf16 %v277, %v277
  %286 = vst [vmem:[%s4] sm:$0xf] %v278
  %287 = vst [vmem:[%s4 + $0x4] sm:$0xf] %v279
  %288 = vst [vmem:[%s4 + $0x8] sm:$0xf] %v280
  %289 = vst [vmem:[%s4 + $0xc] sm:$0xf] %v281
  %290 = vst [vmem:[%s4 + $0x10] sm:$0xf] %v282
  %291 = vst [vmem:[%s4 + $0x14] sm:$0xf] %v283
  %292 = vst [vmem:[%s4 + $0x18] sm:$0xf] %v284
  %293 = vst [vmem:[%s4 + $0x1c] sm:$0xf] %v285
  // Predicated region
  $region18: #{generator_conv_forward.8} parent=0 // pred_check
    _
  $region19: #{generator_conv_forward.8} parent=0 // pred_check_branch
    %295 = sbr.rel (0) target = $region21
  $region20: #{generator_conv_forward.8} parent=0 // pred_region
    _
  $region21: #{generator_conv_forward.8} parent=0 // pred_fallthru
    _
  // Predicated region
  $region22: #{generator_conv_forward.8} parent=0 // pred_check
    _
  $region23: #{generator_conv_forward.8} parent=0 // pred_check_branch
    %297 = sbr.rel (0) target = $region25
  $region24: #{generator_conv_forward.8} parent=0 // pred_region
    _
  $region25: #{generator_conv_forward.8} parent=0 // pred_fallthru
    _

// kernel: generator_conv_forward.9
$region0: #{generator_conv_forward.9}
  #allocation0 [shape = 'u32[]', space=smem, size = 0x4, offset = 0x4, fixed_abs, tag = 'smem constant byte address 0x4 - core index']
  #allocation1 [shape = 'u32[72,128]{1,0:T(1,128)}', space=vmem, size = 0x9000, scoped, tag = 'internal scratch']
  %s0 = inlined_call_operand.vmem [shape: bf16[48,64], index: 0, kind: input, shape index: {}]
  %s1 = inlined_call_operand.vmem [shape: bf16[64,128], index: 1, kind: input, shape index: {}]
  %s2 = inlined_call_operand.vmem [shape: f32[48,1], index: 2, kind: input, shape index: {}]
  %s3 = inlined_call_operand.vmem [shape: f32[48,1], index: 3, kind: input, shape index: {}]
  %s4 = inlined_call_operand.vmem [shape: bf16[48,128], index: 4, kind: output, shape index: {}]
  %s5 = sld [smem:[#allocation0]]
  $region26: #{generator_conv_forward.9} parent=0
    _
  %s7 = ssub.s32 1, %s5
  %s8 = scalar_select 0, %s7, %s5
  // Predicated region
  $region2: #{generator_conv_forward.9} parent=0 // pred_check
    _
  $region3: #{generator_conv_forward.9} parent=0 // pred_check_branch
    %10 = sbr.rel (0) target = $region5
  $region4: #{generator_conv_forward.9} parent=0 // pred_region
    _
  $region5: #{generator_conv_forward.9} parent=0 // pred_fallthru
    _
  // Predicated region
  $region6: #{generator_conv_forward.9} parent=0 // pred_check
    _
  $region7: #{generator_conv_forward.9} parent=0 // pred_check_branch
    %12 = sbr.rel (0) target = $region9
  $region8: #{generator_conv_forward.9} parent=0 // pred_region
    _
  $region9: #{generator_conv_forward.9} parent=0 // pred_fallthru
    _
  // Predicated region
  $region10: #{generator_conv_forward.9} parent=0 // pred_check
    _
  $region11: #{generator_conv_forward.9} parent=0 // pred_check_branch
    %14 = sbr.rel (0) target = $region13
  $region12: #{generator_conv_forward.9} parent=0 // pred_region
    _
  $region13: #{generator_conv_forward.9} parent=0 // pred_fallthru
    _
  // Predicated region
  $region14: #{generator_conv_forward.9} parent=0 // pred_check
    _
  $region15: #{generator_conv_forward.9} parent=0 // pred_check_branch
    %16 = sbr.rel (0) target = $region17
  $region16: #{generator_conv_forward.9} parent=0 // pred_region
    _
  $region17: #{generator_conv_forward.9} parent=0 // pred_fallthru
    _
  %v18 = vld [vmem:[%s0] sm:$0xf]
  %v19 = vld [vmem:[%s0 + $0x4] sm:$0xf]
  %v20 = vld [vmem:[%s0 + $0x8] sm:$0xf]
  %v21 = vld [vmem:[%s0 + $0xc] sm:$0xf]
  %v22 = vld [vmem:[%s0 + $0x10] sm:$0xf]
  %v23 = vld [vmem:[%s0 + $0x14] sm:$0xf]
  %v24 = vld [vmem:[%s1] sm:$0xf]
  %v25 = vld [vmem:[%s1 + $0x4] sm:$0xf]
  %v26 = vld [vmem:[%s1 + $0x8] sm:$0xf]
  %v27 = vld [vmem:[%s1 + $0xc] sm:$0xf]
  %v28 = vld [vmem:[%s1 + $0x10] sm:$0xf]
  %v29 = vld [vmem:[%s1 + $0x14] sm:$0xf]
  %v30 = vld [vmem:[%s1 + $0x18] sm:$0xf]
  %v31 = vld [vmem:[%s1 + $0x1c] sm:$0xf]
  %v38 = vunpack.c.l.b16 %v18
  %v39 = vunpack.c.l.b16 %v19
  %v40 = vunpack.c.l.b16 %v20
  %v41 = vunpack.c.l.b16 %v21
  %v42 = vunpack.c.l.b16 %v22
  %v43 = vunpack.c.l.b16 %v23
  %v44 = vpack.c.b16 %v39, %v38
  %v45 = vpack.c.b16 %v41, %v40
  %v46 = vpack.c.b16 %v43, %v42
  %v55 = vunpack.c.l.b16 %v24
  %v56 = vunpack.c.l.b16 %v25
  %v57 = vunpack.c.l.b16 %v26
  %v58 = vunpack.c.l.b16 %v27
  %v59 = vunpack.c.l.b16 %v28
  %v60 = vunpack.c.l.b16 %v29
  %v61 = vunpack.c.l.b16 %v30
  %v62 = vunpack.c.l.b16 %v31
  %v63 = vpack.c.b16 %v56, %v55
  %v64 = vpack.c.b16 %v58, %v57
  %v65 = vpack.c.b16 %v60, %v59
  %v66 = vpack.c.b16 %v62, %v61
  %vm71 = vcmask 523264
  %v73 = vsel %vm71, %v44, 0
  %v76 = vsel %vm71, %v45, 0
  %v79 = vsel %vm71, %v46, 0
  %81 = vmatpush.bf16.msra.mxu0 0
  %82 = vmatpush.bf16.msra.mxu0 0
  %83 = vmatpush.bf16.msra.mxu0 0
  %84 = vmatpush.bf16.msra.mxu0 0
  %85 = vmatpush.bf16.msra.mxu0 %v66
  %86 = vmatpush.bf16.msra.mxu0 %v65
  %87 = vmatpush.bf16.msra.mxu0 %v64
  %88 = vmatpush.bf16.msra.mxu0 %v63
  %89 = vmatmul.bf16.gmra.mxu0 %v73
  %v90 = vpop.f32.mrf.mxu0
  %v91 = vadd.f32 0.0, %v90
  %v92 = vpop.f32.mrf.mxu0
  %v93 = vadd.f32 0.0, %v92
  %94 = vmatmul.bf16.gmra.mxu0 %v76
  %v95 = vpop.f32.mrf.mxu0
  %v96 = vadd.f32 0.0, %v95
  %v97 = vpop.f32.mrf.mxu0
  %v98 = vadd.f32 0.0, %v97
  %99 = vmatmul.bf16.gmra.mxu0 %v79
  %v100 = vpop.f32.mrf.mxu0
  %v101 = vadd.f32 0.0, %v100
  %v102 = vpop.f32.mrf.mxu0
  %v103 = vadd.f32 0.0, %v102
  %104 = vdwg.mxu0
  %v105 = vld [vmem:[%s2] sm:$0xff]
  %v106 = vld [vmem:[%s2 + $0x8] sm:$0xff]
  %v107 = vld [vmem:[%s2 + $0x10] sm:$0xff]
  %v108 = vld [vmem:[%s2 + $0x18] sm:$0xff]
  %v109 = vld [vmem:[%s2 + $0x20] sm:$0xff]
  %v110 = vld [vmem:[%s2 + $0x28] sm:$0xff]
  %112 = vset.pattern.permute.xlu0 0
  %113 = vperm.xlu0 %112, %v105
  %v114 = vpop.permute.xlu0 %113
  %117 = vset.pattern.permute.xlu0 0
  %118 = vperm.xlu0 %117, %v106
  %v119 = vpop.permute.xlu0 %118
  %122 = vset.pattern.permute.xlu0 0
  %123 = vperm.xlu0 %122, %v107
  %v124 = vpop.permute.xlu0 %123
  %127 = vset.pattern.permute.xlu0 0
  %128 = vperm.xlu0 %127, %v108
  %v129 = vpop.permute.xlu0 %128
  %132 = vset.pattern.permute.xlu0 0
  %133 = vperm.xlu0 %132, %v109
  %v134 = vpop.permute.xlu0 %133
  %137 = vset.pattern.permute.xlu0 0
  %138 = vperm.xlu0 %137, %v110
  %v139 = vpop.permute.xlu0 %138
  %v141 = vmul.f32 %v91, %v114
  %v142 = vmul.f32 %v93, %v119
  %v143 = vmul.f32 %v96, %v124
  %v144 = vmul.f32 %v98, %v129
  %v145 = vmul.f32 %v101, %v134
  %v146 = vmul.f32 %v103, %v139
  %v147 = vld [vmem:[%s3] sm:$0xff]
  %v148 = vld [vmem:[%s3 + $0x8] sm:$0xff]
  %v149 = vld [vmem:[%s3 + $0x10] sm:$0xff]
  %v150 = vld [vmem:[%s3 + $0x18] sm:$0xff]
  %v151 = vld [vmem:[%s3 + $0x20] sm:$0xff]
  %v152 = vld [vmem:[%s3 + $0x28] sm:$0xff]
  %154 = vset.pattern.permute.xlu0 0
  %155 = vperm.xlu0 %154, %v147
  %v156 = vpop.permute.xlu0 %155
  %159 = vset.pattern.permute.xlu0 0
  %160 = vperm.xlu0 %159, %v148
  %v161 = vpop.permute.xlu0 %160
  %164 = vset.pattern.permute.xlu0 0
  %165 = vperm.xlu0 %164, %v149
  %v166 = vpop.permute.xlu0 %165
  %169 = vset.pattern.permute.xlu0 0
  %170 = vperm.xlu0 %169, %v150
  %v171 = vpop.permute.xlu0 %170
  %174 = vset.pattern.permute.xlu0 0
  %175 = vperm.xlu0 %174, %v151
  %v176 = vpop.permute.xlu0 %175
  %179 = vset.pattern.permute.xlu0 0
  %180 = vperm.xlu0 %179, %v152
  %v181 = vpop.permute.xlu0 %180
  %v183 = vadd.f32 %v141, %v156
  %v184 = vadd.f32 %v142, %v161
  %v185 = vadd.f32 %v143, %v166
  %v186 = vadd.f32 %v144, %v171
  %v187 = vadd.f32 %v145, %v176
  %v188 = vadd.f32 %v146, %v181
  %vm189 = vcmp.gt.f32.partialorder %v183, 0.0
  %vm190 = vcmp.gt.f32.partialorder %v184, 0.0
  %vm191 = vcmp.gt.f32.partialorder %v185, 0.0
  %vm192 = vcmp.gt.f32.partialorder %v186, 0.0
  %vm193 = vcmp.gt.f32.partialorder %v187, 0.0
  %vm194 = vcmp.gt.f32.partialorder %v188, 0.0
  %v195 = vmul.f32 %v183, 0.2
  %v196 = vmul.f32 %v184, 0.2
  %v197 = vmul.f32 %v185, 0.2
  %v198 = vmul.f32 %v186, 0.2
  %v199 = vmul.f32 %v187, 0.2
  %v200 = vmul.f32 %v188, 0.2
  %v201 = vsel %vm189, %v183, %v195
  %v202 = vsel %vm190, %v184, %v196
  %v203 = vsel %vm191, %v185, %v197
  %v204 = vsel %vm192, %v186, %v198
  %v205 = vsel %vm193, %v187, %v199
  %v206 = vsel %vm194, %v188, %v200
  %v207 = vpack.c.bf16 %v201, %v201
  %v208 = vpack.c.bf16 %v202, %v202
  %v209 = vpack.c.bf16 %v203, %v203
  %v210 = vpack.c.bf16 %v204, %v204
  %v211 = vpack.c.bf16 %v205, %v205
  %v212 = vpack.c.bf16 %v206, %v206
  %213 = vst [vmem:[%s4] sm:$0xf] %v207
  %214 = vst [vmem:[%s4 + $0x4] sm:$0xf] %v208
  %215 = vst [vmem:[%s4 + $0x8] sm:$0xf] %v209
  %216 = vst [vmem:[%s4 + $0xc] sm:$0xf] %v210
  %217 = vst [vmem:[%s4 + $0x10] sm:$0xf] %v211
  %218 = vst [vmem:[%s4 + $0x14] sm:$0xf] %v212
  // Predicated region
  $region18: #{generator_conv_forward.9} parent=0 // pred_check
    _
  $region19: #{generator_conv_forward.9} parent=0 // pred_check_branch
    %220 = sbr.rel (0) target = $region21
  $region20: #{generator_conv_forward.9} parent=0 // pred_region
    _
  $region21: #{generator_conv_forward.9} parent=0 // pred_fallthru
    _
  // Predicated region
  $region22: #{generator_conv_forward.9} parent=0 // pred_check
    _
  $region23: #{generator_conv_forward.9} parent=0 // pred_check_branch
    %222 = sbr.rel (0) target = $region25
  $region24: #{generator_conv_forward.9} parent=0 // pred_region
    _
  $region25: #{generator_conv_forward.9} parent=0 // pred_fallthru
    _

// kernel: generator_conv_forward.10
$region0: #{generator_conv_forward.10}
  #allocation0 [shape = 'u32[]', space=smem, size = 0x4, offset = 0x4, fixed_abs, tag = 'smem constant byte address 0x4 - core index']
  #allocation1 [shape = 'u32[72,128]{1,0:T(1,128)}', space=vmem, size = 0x9000, scoped, tag = 'internal scratch']
  %s0 = inlined_call_operand.vmem [shape: bf16[16,48], index: 0, kind: input, shape index: {}]
  %s1 = inlined_call_operand.vmem [shape: bf16[48,256], index: 1, kind: input, shape index: {}]
  %s2 = inlined_call_operand.vmem [shape: f32[16,1], index: 2, kind: input, shape index: {}]
  %s3 = inlined_call_operand.vmem [shape: f32[16,1], index: 3, kind: input, shape index: {}]
  %s4 = inlined_call_operand.vmem [shape: bf16[16,256], index: 4, kind: output, shape index: {}]
  %s5 = sld [smem:[#allocation0]]
  $region26: #{generator_conv_forward.10} parent=0
    _
  %s7 = ssub.s32 1, %s5
  %s8 = scalar_select 0, %s7, %s5
  // Predicated region
  $region2: #{generator_conv_forward.10} parent=0 // pred_check
    _
  $region3: #{generator_conv_forward.10} parent=0 // pred_check_branch
    %10 = sbr.rel (0) target = $region5
  $region4: #{generator_conv_forward.10} parent=0 // pred_region
    _
  $region5: #{generator_conv_forward.10} parent=0 // pred_fallthru
    _
  // Predicated region
  $region6: #{generator_conv_forward.10} parent=0 // pred_check
    _
  $region7: #{generator_conv_forward.10} parent=0 // pred_check_branch
    %12 = sbr.rel (0) target = $region9
  $region8: #{generator_conv_forward.10} parent=0 // pred_region
    _
  $region9: #{generator_conv_forward.10} parent=0 // pred_fallthru
    _
  // Predicated region
  $region10: #{generator_conv_forward.10} parent=0 // pred_check
    _
  $region11: #{generator_conv_forward.10} parent=0 // pred_check_branch
    %14 = sbr.rel (0) target = $region13
  $region12: #{generator_conv_forward.10} parent=0 // pred_region
    _
  $region13: #{generator_conv_forward.10} parent=0 // pred_fallthru
    _
  // Predicated region
  $region14: #{generator_conv_forward.10} parent=0 // pred_check
    _
  $region15: #{generator_conv_forward.10} parent=0 // pred_check_branch
    %16 = sbr.rel (0) target = $region17
  $region16: #{generator_conv_forward.10} parent=0 // pred_region
    _
  $region17: #{generator_conv_forward.10} parent=0 // pred_fallthru
    _
  %v18 = vld [vmem:[%s0] sm:$0xf]
  %v19 = vld [vmem:[%s0 + $0x4] sm:$0xf]
  %v20 = vld [vmem:[%s1] sm:$0xff]
  %v21 = vld [vmem:[%s1 + $0x8] sm:$0xff]
  %v22 = vld [vmem:[%s1 + $0x10] sm:$0xff]
  %v23 = vld [vmem:[%s1 + $0x18] sm:$0xff]
  %v24 = vld [vmem:[%s1 + $0x20] sm:$0xff]
  %v25 = vld [vmem:[%s1 + $0x28] sm:$0xff]
  %v28 = vunpack.c.l.b16 %v18
  %v29 = vunpack.c.l.b16 %v19
  %v30 = vpack.c.b16 %v29, %v28
  %v37 = vunpack.c.l.b16 %v20
  %v38 = vunpack.c.h.b16 %v20
  %v39 = vunpack.c.l.b16 %v21
  %v40 = vunpack.c.h.b16 %v21
  %v41 = vunpack.c.l.b16 %v22
  %v42 = vunpack.c.h.b16 %v22
  %v43 = vunpack.c.l.b16 %v23
  %v44 = vunpack.c.h.b16 %v23
  %v45 = vunpack.c.l.b16 %v24
  %v46 = vunpack.c.h.b16 %v24
  %v47 = vunpack.c.l.b16 %v25
  %v48 = vunpack.c.h.b16 %v25
  %v49 = vpack.c.b16 %v39, %v37
  %v50 = vpack.c.b16 %v40, %v38
  %v51 = vpack.c.b16 %v43, %v41
  %v52 = vpack.c.b16 %v44, %v42
  %v53 = vpack.c.b16 %v47, %v45
  %v54 = vpack.c.b16 %v48, %v46
  %vm61 = vcmask 392192
  %v63 = vsel %vm61, %v30, 0
  %65 = vmatpush.bf16.msra.mxu0 0
  %66 = vmatpush.bf16.msra.mxu0 0
  %67 = vmatpush.bf16.msra.mxu0 0
  %68 = vmatpush.bf16.msra.mxu0 0
  %69 = vmatpush.bf16.msra.mxu0 0
  %70 = vmatpush.bf16.msra.mxu0 %v53
  %71 = vmatpush.bf16.msra.mxu0 %v51
  %72 = vmatpush.bf16.msra.mxu0 %v49
  %73 = vmatmul.bf16.gmra.mxu0 %v63
  %v74 = vpop.f32.mrf.mxu0
  %v75 = vadd.f32 0.0, %v74
  %v76 = vpop.f32.mrf.mxu0
  %v77 = vadd.f32 0.0, %v76
  %78 = vdwg.mxu0
  %79 = vmatpush.bf16.msra.mxu0 0
  %80 = vmatpush.bf16.msra.mxu0 0
  %81 = vmatpush.bf16.msra.mxu0 0
  %82 = vmatpush.bf16.msra.mxu0 0
  %83 = vmatpush.bf16.msra.mxu0 0
  %84 = vmatpush.bf16.msra.mxu0 %v54
  %85 = vmatpush.bf16.msra.mxu0 %v52
  %86 = vmatpush.bf16.msra.mxu0 %v50
  %87 = vmatmul.bf16.gmra.mxu0 %v63
  %v88 = vpop.f32.mrf.mxu0
  %v89 = vadd.f32 0.0, %v88
  %v90 = vpop.f32.mrf.mxu0
  %v91 = vadd.f32 0.0, %v90
  %92 = vdwg.mxu0
  %v93 = vld [vmem:[%s2] sm:$0xff]
  %v94 = vld [vmem:[%s2 + $0x8] sm:$0xff]
  %96 = vset.pattern.permute.xlu0 0
  %97 = vperm.xlu0 %96, %v93
  %v98 = vpop.permute.xlu0 %97
  %101 = vset.pattern.permute.xlu0 0
  %102 = vperm.xlu0 %101, %v94
  %v103 = vpop.permute.xlu0 %102
  %v105 = vmul.f32 %v75, %v98
  %v106 = vmul.f32 %v89, %v98
  %v107 = vmul.f32 %v77, %v103
  %v108 = vmul.f32 %v91, %v103
  %v109 = vld [vmem:[%s3] sm:$0xff]
  %v110 = vld [vmem:[%s3 + $0x8] sm:$0xff]
  %112 = vset.pattern.permute.xlu0 0
  %113 = vperm.xlu0 %112, %v109
  %v114 = vpop.permute.xlu0 %113
  %117 = vset.pattern.permute.xlu0 0
  %118 = vperm.xlu0 %117, %v110
  %v119 = vpop.permute.xlu0 %118
  %v121 = vadd.f32 %v105, %v114
  %v122 = vadd.f32 %v106, %v114
  %v123 = vadd.f32 %v107, %v119
  %v124 = vadd.f32 %v108, %v119
  %vm125 = vcmp.gt.f32.partialorder %v121, 0.0
  %vm126 = vcmp.gt.f32.partialorder %v122, 0.0
  %vm127 = vcmp.gt.f32.partialorder %v123, 0.0
  %vm128 = vcmp.gt.f32.partialorder %v124, 0.0
  %v129 = vmul.f32 %v121, 0.2
  %v130 = vmul.f32 %v122, 0.2
  %v131 = vmul.f32 %v123, 0.2
  %v132 = vmul.f32 %v124, 0.2
  %v133 = vsel %vm125, %v121, %v129
  %v134 = vsel %vm126, %v122, %v130
  %v135 = vsel %vm127, %v123, %v131
  %v136 = vsel %vm128, %v124, %v132
  %v137 = vpack.c.bf16 %v134, %v133
  %v138 = vpack.c.bf16 %v136, %v135
  %139 = vst [vmem:[%s4] sm:$0xff] %v137
  %140 = vst [vmem:[%s4 + $0x8] sm:$0xff] %v138
  // Predicated region
  $region18: #{generator_conv_forward.10} parent=0 // pred_check
    _
  $region19: #{generator_conv_forward.10} parent=0 // pred_check_branch
    %142 = sbr.rel (0) target = $region21
  $region20: #{generator_conv_forward.10} parent=0 // pred_region
    _
  $region21: #{generator_conv_forward.10} parent=0 // pred_fallthru
    _
  // Predicated region
  $region22: #{generator_conv_forward.10} parent=0 // pred_check
    _
  $region23: #{generator_conv_forward.10} parent=0 // pred_check_branch
    %144 = sbr.rel (0) target = $region25
  $region24: #{generator_conv_forward.10} parent=0 // pred_region
    _
  $region25: #{generator_conv_forward.10} parent=0 // pred_fallthru
    _

// kernel: generator_conv_forward.11
$region0: #{generator_conv_forward.11}
  #allocation0 [shape = 'u32[]', space=smem, size = 0x4, offset = 0x4, fixed_abs, tag = 'smem constant byte address 0x4 - core index']
  #allocation1 [shape = 'u32[72,128]{1,0:T(1,128)}', space=vmem, size = 0x9000, scoped, tag = 'internal scratch']
  %s0 = inlined_call_operand.vmem [shape: bf16[16,16], index: 0, kind: input, shape index: {}]
  %s1 = inlined_call_operand.vmem [shape: bf16[16,640], index: 1, kind: input, shape index: {}]
  %s2 = inlined_call_operand.vmem [shape: f32[16,1], index: 2, kind: input, shape index: {}]
  %s3 = inlined_call_operand.vmem [shape: f32[16,1], index: 3, kind: input, shape index: {}]
  %s4 = inlined_call_operand.vmem [shape: bf16[16,640], index: 4, kind: output, shape index: {}]
  %s5 = sld [smem:[#allocation0]]
  $region26: #{generator_conv_forward.11} parent=0
    _
  %s7 = ssub.s32 1, %s5
  %s8 = scalar_select 0, %s7, %s5
  // Predicated region
  $region2: #{generator_conv_forward.11} parent=0 // pred_check
    _
  $region3: #{generator_conv_forward.11} parent=0 // pred_check_branch
    %10 = sbr.rel (0) target = $region5
  $region4: #{generator_conv_forward.11} parent=0 // pred_region
    _
  $region5: #{generator_conv_forward.11} parent=0 // pred_fallthru
    _
  // Predicated region
  $region6: #{generator_conv_forward.11} parent=0 // pred_check
    _
  $region7: #{generator_conv_forward.11} parent=0 // pred_check_branch
    %12 = sbr.rel (0) target = $region9
  $region8: #{generator_conv_forward.11} parent=0 // pred_region
    _
  $region9: #{generator_conv_forward.11} parent=0 // pred_fallthru
    _
  // Predicated region
  $region10: #{generator_conv_forward.11} parent=0 // pred_check
    _
  $region11: #{generator_conv_forward.11} parent=0 // pred_check_branch
    %14 = sbr.rel (0) target = $region13
  $region12: #{generator_conv_forward.11} parent=0 // pred_region
    _
  $region13: #{generator_conv_forward.11} parent=0 // pred_fallthru
    _
  // Predicated region
  $region14: #{generator_conv_forward.11} parent=0 // pred_check
    _
  $region15: #{generator_conv_forward.11} parent=0 // pred_check_branch
    %16 = sbr.rel (0) target = $region17
  $region16: #{generator_conv_forward.11} parent=0 // pred_region
    _
  $region17: #{generator_conv_forward.11} parent=0 // pred_fallthru
    _
  %v18 = vld [vmem:[%s0] sm:$0xf]
  %v19 = vld [vmem:[%s0 + $0x4] sm:$0xf]
  %v20 = vld [vmem:[%s1] sm:$0xff]
  %v21 = vld [vmem:[%s1 + $0x8] sm:$0xff]
  %v22 = vld [vmem:[%s1 + $0x10] sm:$0xf]
  %v23 = vld [vmem:[%s1 + $0x14] sm:$0xff]
  %v24 = vld [vmem:[%s1 + $0x1c] sm:$0xff]
  %v25 = vld [vmem:[%s1 + $0x24] sm:$0xf]
  %v28 = vunpack.c.l.b16 %v18
  %v29 = vunpack.c.l.b16 %v19
  %v30 = vpack.c.b16 %v29, %v28
  %v37 = vunpack.c.l.b16 %v20
  %v38 = vunpack.c.h.b16 %v20
  %v39 = vunpack.c.l.b16 %v21
  %v40 = vunpack.c.h.b16 %v21
  %v41 = vunpack.c.l.b16 %v22
  %v42 = vunpack.c.l.b16 %v23
  %v43 = vunpack.c.h.b16 %v23
  %v44 = vunpack.c.l.b16 %v24
  %v45 = vunpack.c.h.b16 %v24
  %v46 = vunpack.c.l.b16 %v25
  %v47 = vpack.c.b16 %v42, %v37
  %v48 = vpack.c.b16 %v43, %v38
  %v49 = vpack.c.b16 %v44, %v39
  %v50 = vpack.c.b16 %v45, %v40
  %v51 = vpack.c.b16 %v46, %v41
  %vm57 = vcmask 130048
  %v59 = vsel %vm57, %v30, 0
  %61 = vmatpush.bf16.msra.mxu0 0
  %62 = vmatpush.bf16.msra.mxu0 0
  %63 = vmatpush.bf16.msra.mxu0 0
  %64 = vmatpush.bf16.msra.mxu0 0
  %65 = vmatpush.bf16.msra.mxu0 0
  %66 = vmatpush.bf16.msra.mxu0 0
  %67 = vmatpush.bf16.msra.mxu0 0
  %68 = vmatpush.bf16.msra.mxu0 %v47
  %69 = vmatmul.bf16.gmra.mxu0 %v59
  %v70 = vpop.f32.mrf.mxu0
  %v71 = vadd.f32 0.0, %v70
  %v72 = vpop.f32.mrf.mxu0
  %v73 = vadd.f32 0.0, %v72
  %74 = vdwg.mxu0
  %75 = vmatpush.bf16.msra.mxu0 0
  %76 = vmatpush.bf16.msra.mxu0 0
  %77 = vmatpush.bf16.msra.mxu0 0
  %78 = vmatpush.bf16.msra.mxu0 0
  %79 = vmatpush.bf16.msra.mxu0 0
  %80 = vmatpush.bf16.msra.mxu0 0
  %81 = vmatpush.bf16.msra.mxu0 0
  %82 = vmatpush.bf16.msra.mxu0 %v48
  %83 = vmatmul.bf16.gmra.mxu0 %v59
  %v84 = vpop.f32.mrf.mxu0
  %v85 = vadd.f32 0.0, %v84
  %v86 = vpop.f32.mrf.mxu0
  %v87 = vadd.f32 0.0, %v86
  %88 = vdwg.mxu0
  %89 = vmatpush.bf16.msra.mxu0 0
  %90 = vmatpush.bf16.msra.mxu0 0
  %91 = vmatpush.bf16.msra.mxu0 0
  %92 = vmatpush.bf16.msra.mxu0 0
  %93 = vmatpush.bf16.msra.mxu0 0
  %94 = vmatpush.bf16.msra.mxu0 0
  %95 = vmatpush.bf16.msra.mxu0 0
  %96 = vmatpush.bf16.msra.mxu0 %v49
  %97 = vmatmul.bf16.gmra.mxu0 %v59
  %v98 = vpop.f32.mrf.mxu0
  %v99 = vadd.f32 0.0, %v98
  %v100 = vpop.f32.mrf.mxu0
  %v101 = vadd.f32 0.0, %v100
  %102 = vdwg.mxu0
  %103 = vmatpush.bf16.msra.mxu0 0
  %104 = vmatpush.bf16.msra.mxu0 0
  %105 = vmatpush.bf16.msra.mxu0 0
  %106 = vmatpush.bf16.msra.mxu0 0
  %107 = vmatpush.bf16.msra.mxu0 0
  %108 = vmatpush.bf16.msra.mxu0 0
  %109 = vmatpush.bf16.msra.mxu0 0
  %110 = vmatpush.bf16.msra.mxu0 %v50
  %111 = vmatmul.bf16.gmra.mxu0 %v59
  %v112 = vpop.f32.mrf.mxu0
  %v113 = vadd.f32 0.0, %v112
  %v114 = vpop.f32.mrf.mxu0
  %v115 = vadd.f32 0.0, %v114
  %116 = vdwg.mxu0
  %117 = vmatpush.bf16.msra.mxu0 0
  %118 = vmatpush.bf16.msra.mxu0 0
  %119 = vmatpush.bf16.msra.mxu0 0
  %120 = vmatpush.bf16.msra.mxu0 0
  %121 = vmatpush.bf16.msra.mxu0 0
  %122 = vmatpush.bf16.msra.mxu0 0
  %123 = vmatpush.bf16.msra.mxu0 0
  %124 = vmatpush.bf16.msra.mxu0 %v51
  %125 = vmatmul.bf16.gmra.mxu0 %v59
  %v126 = vpop.f32.mrf.mxu0
  %v127 = vadd.f32 0.0, %v126
  %v128 = vpop.f32.mrf.mxu0
  %v129 = vadd.f32 0.0, %v128
  %130 = vdwg.mxu0
  %v131 = vld [vmem:[%s2] sm:$0xff]
  %v132 = vld [vmem:[%s2 + $0x8] sm:$0xff]
  %134 = vset.pattern.permute.xlu0 0
  %135 = vperm.xlu0 %134, %v131
  %v136 = vpop.permute.xlu0 %135
  %139 = vset.pattern.permute.xlu0 0
  %140 = vperm.xlu0 %139, %v132
  %v141 = vpop.permute.xlu0 %140
  %v143 = vmul.f32 %v71, %v136
  %v144 = vmul.f32 %v85, %v136
  %v145 = vmul.f32 %v99, %v136
  %v146 = vmul.f32 %v113, %v136
  %v147 = vmul.f32 %v127, %v136
  %v148 = vmul.f32 %v73, %v141
  %v149 = vmul.f32 %v87, %v141
  %v150 = vmul.f32 %v101, %v141
  %v151 = vmul.f32 %v115, %v141
  %v152 = vmul.f32 %v129, %v141
  %v153 = vld [vmem:[%s3] sm:$0xff]
  %v154 = vld [vmem:[%s3 + $0x8] sm:$0xff]
  %156 = vset.pattern.permute.xlu0 0
  %157 = vperm.xlu0 %156, %v153
  %v158 = vpop.permute.xlu0 %157
  %161 = vset.pattern.permute.xlu0 0
  %162 = vperm.xlu0 %161, %v154
  %v163 = vpop.permute.xlu0 %162
  %v165 = vadd.f32 %v143, %v158
  %v166 = vadd.f32 %v144, %v158
  %v167 = vadd.f32 %v145, %v158
  %v168 = vadd.f32 %v146, %v158
  %v169 = vadd.f32 %v147, %v158
  %v170 = vadd.f32 %v148, %v163
  %v171 = vadd.f32 %v149, %v163
  %v172 = vadd.f32 %v150, %v163
  %v173 = vadd.f32 %v151, %v163
  %v174 = vadd.f32 %v152, %v163
  %vm175 = vcmp.gt.f32.partialorder %v165, 0.0
  %vm176 = vcmp.gt.f32.partialorder %v166, 0.0
  %vm177 = vcmp.gt.f32.partialorder %v167, 0.0
  %vm178 = vcmp.gt.f32.partialorder %v168, 0.0
  %vm179 = vcmp.gt.f32.partialorder %v169, 0.0
  %vm180 = vcmp.gt.f32.partialorder %v170, 0.0
  %vm181 = vcmp.gt.f32.partialorder %v171, 0.0
  %vm182 = vcmp.gt.f32.partialorder %v172, 0.0
  %vm183 = vcmp.gt.f32.partialorder %v173, 0.0
  %vm184 = vcmp.gt.f32.partialorder %v174, 0.0
  %v185 = vmul.f32 %v165, 0.2
  %v186 = vmul.f32 %v166, 0.2
  %v187 = vmul.f32 %v167, 0.2
  %v188 = vmul.f32 %v168, 0.2
  %v189 = vmul.f32 %v169, 0.2
  %v190 = vmul.f32 %v170, 0.2
  %v191 = vmul.f32 %v171, 0.2
  %v192 = vmul.f32 %v172, 0.2
  %v193 = vmul.f32 %v173, 0.2
  %v194 = vmul.f32 %v174, 0.2
  %v195 = vsel %vm175, %v165, %v185
  %v196 = vsel %vm176, %v166, %v186
  %v197 = vsel %vm177, %v167, %v187
  %v198 = vsel %vm178, %v168, %v188
  %v199 = vsel %vm179, %v169, %v189
  %v200 = vsel %vm180, %v170, %v190
  %v201 = vsel %vm181, %v171, %v191
  %v202 = vsel %vm182, %v172, %v192
  %v203 = vsel %vm183, %v173, %v193
  %v204 = vsel %vm184, %v174, %v194
  %v205 = vpack.c.bf16 %v196, %v195
  %v206 = vpack.c.bf16 %v198, %v197
  %v207 = vpack.c.bf16 %v199, %v199
  %v208 = vpack.c.bf16 %v201, %v200
  %v209 = vpack.c.bf16 %v203, %v202
  %v210 = vpack.c.bf16 %v204, %v204
  %211 = vst [vmem:[%s4] sm:$0xff] %v205
  %212 = vst [vmem:[%s4 + $0x8] sm:$0xff] %v206
  %213 = vst [vmem:[%s4 + $0x10] sm:$0xf] %v207
  %214 = vst [vmem:[%s4 + $0x14] sm:$0xff] %v208
  %215 = vst [vmem:[%s4 + $0x1c] sm:$0xff] %v209
  %216 = vst [vmem:[%s4 + $0x24] sm:$0xf] %v210
  // Predicated region
  $region18: #{generator_conv_forward.11} parent=0 // pred_check
    _
  $region19: #{generator_conv_forward.11} parent=0 // pred_check_branch
    %218 = sbr.rel (0) target = $region21
  $region20: #{generator_conv_forward.11} parent=0 // pred_region
    _
  $region21: #{generator_conv_forward.11} parent=0 // pred_fallthru
    _
  // Predicated region
  $region22: #{generator_conv_forward.11} parent=0 // pred_check
    _
  $region23: #{generator_conv_forward.11} parent=0 // pred_check_branch
    %220 = sbr.rel (0) target = $region25
  $region24: #{generator_conv_forward.11} parent=0 // pred_region
    _
  $region25: #{generator_conv_forward.11} parent=0 // pred_fallthru
    _

// kernel: generator_conv_forward.12
$region0: #{generator_conv_forward.12}
  #allocation0 [shape = 'u32[]', space=smem, size = 0x4, offset = 0x4, fixed_abs, tag = 'smem constant byte address 0x4 - core index']
  #allocation1 [shape = 'u32[72,128]{1,0:T(1,128)}', space=vmem, size = 0x9000, scoped, tag = 'internal scratch']
  %s0 = inlined_call_operand.vmem [shape: bf16[16,16], index: 0, kind: input, shape index: {}]
  %s1 = inlined_call_operand.vmem [shape: bf16[16,2304], index: 1, kind: input, shape index: {}]
  %s2 = inlined_call_operand.vmem [shape: f32[16,1], index: 2, kind: input, shape index: {}]
  %s3 = inlined_call_operand.vmem [shape: f32[16,1], index: 3, kind: input, shape index: {}]
  %s4 = inlined_call_operand.vmem [shape: bf16[16,2304], index: 4, kind: output, shape index: {}]
  %s5 = sld [smem:[#allocation0]]
  $region97: #{generator_conv_forward.12} parent=0
    _
  %s7 = ssub.s32 1, %s5
  %s8 = scalar_select 0, %s7, %s5
  $region1: #{generator_conv_forward.12} parent=0
    #allocation2 [shape = 'u8[73728]{0}', space=vmem, size = 0x12000, scoped, tag = 'input window, operand 1']
    #allocation3 [shape = 'u8[73728]{0}', space=vmem, size = 0x12000, scoped, tag = 'output window, operand 0']
    loop: start=0, step=1, limit=4
    $region2: #{generator_conv_forward.12} parent=1 // loop_pre_header
      _
    $region3: #{generator_conv_forward.12} parent=1 // loop_header
      %s10 = sphi 0, %s14
      %p11 = scmp.ge.s32.totalorder %s10, 4
      %s18 = sphi 0, %s18
      %s20 = sphi 0, %s18
      %s21 = sphi 0, %s20
      %s35 = sphi 0, %s21
      %s41 = sphi 0, %s43
      %s44 = sphi 0, %s41
      %s45 = sphi 0, %s44
      %s61 = sphi 0, %s45
      %s65 = sphi 0, %s65
      %s67 = sphi 0, %s65
      %s68 = sphi 0, %s67
      %s82 = sphi 0, %s68
      %s86 = sphi 0, %s86
      %s88 = sphi 0, %s86
      %s89 = sphi 0, %s88
      %s103 = sphi 0, %s89
      %s109 = sphi 0, %s111
      %s112 = sphi 0, %s109
      %s113 = sphi 0, %s112
      %s129 = sphi 0, %s113
    $region4: #{generator_conv_forward.12} parent=1 // loop_header_branch
      %13 = sbr.rel (%p11) target = $region8
    $region5: #{generator_conv_forward.12} parent=1 // loop_body
      %s15 = ssub.s32 %s10, 1
      %s16 = ssub.s32 %s10, 2
      %s17 = sadd.s32 %s10, 1
      %s19 = sadd.s32 %s18, 1
      %p22 = scmp.eq.s32.totalorder %s10, 1
      %p23 = scmp.ne.s32.totalorder %s18, %s20
      %p24 = scmp.eq.s32.totalorder %s10, 0
      %p25 = por %p23, %p24
      %p26 = scmp.ne.s32.totalorder %s18, %s20
      %p27 = scmp.eq.s32.totalorder %s15, 1
      %p28 = por %p26, %p27
      %p29 = scmp.ne.s32.totalorder %s20, %s21
      %p30 = scmp.eq.s32.totalorder %s15, 0
      %p31 = por %p29, %p30
      %p32 = scmp.ne.s32.totalorder %s20, %s21
      %p33 = scmp.eq.s32.totalorder %s16, 1
      %p34 = por %p32, %p33
      %p36 = scmp.ne.s32.totalorder %s21, %s35
      %p37 = scmp.eq.s32.totalorder %s16, 0
      %p38 = por %p36, %p37
      %s39 = ssub.s32 %s10, %s17
      %p40 = scmp.eq.s32.totalorder %s39, 0
      %s42 = sadd.s32 %s41, 1
      %s43 = scalar_select %p40, %s41, %s42
      %p46 = pneg %p40
      %p47 = scmp.eq.s32.totalorder %s10, 1
      %p48 = por %p46, %p47
      %p49 = scmp.ne.s32.totalorder %s41, %s44
      %p50 = scmp.eq.s32.totalorder %s10, 0
      %p51 = por %p49, %p50
      %p52 = scmp.ne.s32.totalorder %s41, %s44
      %p53 = scmp.eq.s32.totalorder %s15, 1
      %p54 = por %p52, %p53
      %p55 = scmp.ne.s32.totalorder %s44, %s45
      %p56 = scmp.eq.s32.totalorder %s15, 0
      %p57 = por %p55, %p56
      %p58 = scmp.ne.s32.totalorder %s44, %s45
      %p59 = scmp.eq.s32.totalorder %s16, 1
      %p60 = por %p58, %p59
      %p62 = scmp.ne.s32.totalorder %s45, %s61
      %p63 = scmp.eq.s32.totalorder %s16, 0
      %p64 = por %p62, %p63
      %s66 = sadd.s32 %s65, 1
      %p69 = scmp.eq.s32.totalorder %s10, 1
      %p70 = scmp.ne.s32.totalorder %s65, %s67
      %p71 = scmp.eq.s32.totalorder %s10, 0
      %p72 = por %p70, %p71
      %p73 = scmp.ne.s32.totalorder %s65, %s67
      %p74 = scmp.eq.s32.totalorder %s15, 1
      %p75 = por %p73, %p74
      %p76 = scmp.ne.s32.totalorder %s67, %s68
      %p77 = scmp.eq.s32.totalorder %s15, 0
      %p78 = por %p76, %p77
      %p79 = scmp.ne.s32.totalorder %s67, %s68
      %p80 = scmp.eq.s32.totalorder %s16, 1
      %p81 = por %p79, %p80
      %p83 = scmp.ne.s32.totalorder %s68, %s82
      %p84 = scmp.eq.s32.totalorder %s16, 0
      %p85 = por %p83, %p84
      %s87 = sadd.s32 %s86, 1
      %p90 = scmp.eq.s32.totalorder %s10, 1
      %p91 = scmp.ne.s32.totalorder %s86, %s88
      %p92 = scmp.eq.s32.totalorder %s10, 0
      %p93 = por %p91, %p92
      %p94 = scmp.ne.s32.totalorder %s86, %s88
      %p95 = scmp.eq.s32.totalorder %s15, 1
      %p96 = por %p94, %p95
      %p97 = scmp.ne.s32.totalorder %s88, %s89
      %p98 = scmp.eq.s32.totalorder %s15, 0
      %p99 = por %p97, %p98
      %p100 = scmp.ne.s32.totalorder %s88, %s89
      %p101 = scmp.eq.s32.totalorder %s16, 1
      %p102 = por %p100, %p101
      %p104 = scmp.ne.s32.totalorder %s89, %s103
      %p105 = scmp.eq.s32.totalorder %s16, 0
      %p106 = por %p104, %p105
      %s107 = ssub.s32 %s10, %s17
      %p108 = scmp.eq.s32.totalorder %s107, 0
      %s110 = sadd.s32 %s109, 1
      %s111 = scalar_select %p108, %s109, %s110
      %p114 = pneg %p108
      %p115 = scmp.eq.s32.totalorder %s10, 1
      %p116 = por %p114, %p115
      %p117 = scmp.ne.s32.totalorder %s109, %s112
      %p118 = scmp.eq.s32.totalorder %s10, 0
      %p119 = por %p117, %p118
      %p120 = scmp.ne.s32.totalorder %s109, %s112
      %p121 = scmp.eq.s32.totalorder %s15, 1
      %p122 = por %p120, %p121
      %p123 = scmp.ne.s32.totalorder %s112, %s113
      %p124 = scmp.eq.s32.totalorder %s15, 0
      %p125 = por %p123, %p124
      %p126 = scmp.ne.s32.totalorder %s112, %s113
      %p127 = scmp.eq.s32.totalorder %s16, 1
      %p128 = por %p126, %p127
      %p130 = scmp.ne.s32.totalorder %s113, %s129
      %p131 = scmp.eq.s32.totalorder %s16, 0
      %p132 = por %p130, %p131
      %p133 = scmp.le.s32.totalorder 1, %s10
      %p134 = scmp.lt.s32.totalorder %s10, 3
      %p135 = pnand %p133, %p134
      %p136 = pneg %p135
      // Predicated region
      $region9: #{generator_conv_forward.12} parent=5 // pred_check
        _
      $region10: #{generator_conv_forward.12} parent=5 // pred_check_branch
        %138 = sbr.rel (%p135) target = $region12
      $region11: #{generator_conv_forward.12} parent=5 // pred_region
        %s139 = ssub.s32 %s10, 1
        // Predicated region
        $region13: #{generator_conv_forward.12} parent=11 // pred_check
          %p140 = pneg %p31
        $region14: #{generator_conv_forward.12} parent=11 // pred_check_branch
          %142 = sbr.rel (%p140) target = $region16
        $region15: #{generator_conv_forward.12} parent=11 // pred_region
          _
        $region16: #{generator_conv_forward.12} parent=11 // pred_fallthru
          _
        // Predicated region
        $region17: #{generator_conv_forward.12} parent=11 // pred_check
          %p143 = pneg %p78
        $region18: #{generator_conv_forward.12} parent=11 // pred_check_branch
          %145 = sbr.rel (%p143) target = $region20
        $region19: #{generator_conv_forward.12} parent=11 // pred_region
          _
        $region20: #{generator_conv_forward.12} parent=11 // pred_fallthru
          _
        // Predicated region
        $region21: #{generator_conv_forward.12} parent=11 // pred_check
          %p146 = pneg %p99
        $region22: #{generator_conv_forward.12} parent=11 // pred_check_branch
          %148 = sbr.rel (%p146) target = $region24
        $region23: #{generator_conv_forward.12} parent=11 // pred_region
          _
        $region24: #{generator_conv_forward.12} parent=11 // pred_fallthru
          _
      $region12: #{generator_conv_forward.12} parent=5 // pred_fallthru
        _
      %p149 = scmp.lt.s32.totalorder %s10, 2
      // Predicated region
      $region25: #{generator_conv_forward.12} parent=5 // pred_check
        %p150 = pneg %p149
      $region26: #{generator_conv_forward.12} parent=5 // pred_check_branch
        %152 = sbr.rel (%p150) target = $region28
      $region27: #{generator_conv_forward.12} parent=5 // pred_region
        // Predicated region
        $region29: #{generator_conv_forward.12} parent=27 // pred_check
          %p153 = pneg %p51
        $region30: #{generator_conv_forward.12} parent=27 // pred_check_branch
          %155 = sbr.rel (%p153) target = $region32
        $region31: #{generator_conv_forward.12} parent=27 // pred_region
          %s156 = sand.u32 %s41, 1
          %s157 = sand.u32 %s41, 1
          %s158 = smul.addr %s157, 72
          %s159 = scalar_lea.vmem [#allocation2], %s158
          %s160 = smul.u32 9, %s10
          %s161 = smul.addr %s160, 4
          %s162 = scalar_lea.vmem %s1, %s161
          // Predicated region
          $region33: #{generator_conv_forward.12} parent=31 // pred_check
            _
          $region34: #{generator_conv_forward.12} parent=31 // pred_check_branch
            %164 = sbr.rel (0) target = $region36
          $region35: #{generator_conv_forward.12} parent=31 // pred_region
            // Predicated region
            $region37: #{generator_conv_forward.12} parent=35 // pred_check
              _
            $region38: #{generator_conv_forward.12} parent=35 // pred_check_branch
              %166 = sbr.rel (0) target = $region40
            $region39: #{generator_conv_forward.12} parent=35 // pred_region
              %s167 = scalar_lea.vmem %s162, 32
              %s168 = scalar_lea.vmem %s159, 32 [#allocation2]
              loop: start=0, step=1, limit=1
              $region41: #{generator_conv_forward.12} parent=39 // loop_pre_header
                _
              $region42: #{generator_conv_forward.12} parent=39 // loop_header
                %s170 = sphi 0, %s174
                %p171 = scmp.ge.s32.totalorder %s170, 1
                %s175 = sphi %s162, %s162
                %s176 = sphi %s159, %s159
              $region43: #{generator_conv_forward.12} parent=39 // loop_header_branch
                %173 = sbr.rel (%p171) target = $region47
              $region44: #{generator_conv_forward.12} parent=39 // loop_body
                %v177 = vld [vmem:[%s175] sm:$0xff]
                %178 = vst [vmem:[%s176] sm:$0xff] %v177
                %v179 = vld [vmem:[%s175 + $0x8] sm:$0xff]
                %180 = vst [vmem:[%s176 + $0x8] sm:$0xff] %v179
                %v181 = vld [vmem:[%s175 + $0x10] sm:$0xff]
                %182 = vst [vmem:[%s176 + $0x10] sm:$0xff] %v181
                %v183 = vld [vmem:[%s175 + $0x18] sm:$0xff]
                %184 = vst [vmem:[%s176 + $0x18] sm:$0xff] %v183
                %v185 = vld [vmem:[%s175 + $0x48] sm:$0xff]
                %186 = vst [vmem:[%s176 + $0x24] sm:$0xff] %v185
                %v187 = vld [vmem:[%s175 + $0x50] sm:$0xff]
                %188 = vst [vmem:[%s176 + $0x2c] sm:$0xff] %v187
                %v189 = vld [vmem:[%s175 + $0x58] sm:$0xff]
                %190 = vst [vmem:[%s176 + $0x34] sm:$0xff] %v189
                %v191 = vld [vmem:[%s175 + $0x60] sm:$0xff]
                %192 = vst [vmem:[%s176 + $0x3c] sm:$0xff] %v191
              $region45: #{generator_conv_forward.12} parent=39 // loop_footer
                %s174 = sadd.s32 1, %s170
              $region46: #{generator_conv_forward.12} parent=39 // loop_footer_branch
                %169 = sbr.rel target = $region42
              $region47: #{generator_conv_forward.12} parent=39 // loop_exit
                _
              %s194 = ssub.s32 16, 1
              loop: start=0, step=1, limit=1
              $region48: #{generator_conv_forward.12} parent=39 // loop_pre_header
                _
              $region49: #{generator_conv_forward.12} parent=39 // loop_header
                %s196 = sphi 0, %s200
                %p197 = scmp.ge.s32.totalorder %s196, 1
                %s201 = sphi %s167, %s167
                %s202 = sphi %s168, %s168
              $region50: #{generator_conv_forward.12} parent=39 // loop_header_branch
                %199 = sbr.rel (%p197) target = $region54
              $region51: #{generator_conv_forward.12} parent=39 // loop_body
                %v203 = vld [vmem:[%s201] sm:%s194]
                %204 = vst [vmem:[%s202] sm:%s194] %v203
                %v205 = vld [vmem:[%s201 + $0x48] sm:%s194]
                %206 = vst [vmem:[%s202 + $0x24] sm:%s194] %v205
              $region52: #{generator_conv_forward.12} parent=39 // loop_footer
                %s200 = sadd.s32 1, %s196
              $region53: #{generator_conv_forward.12} parent=39 // loop_footer_branch
                %195 = sbr.rel target = $region49
              $region54: #{generator_conv_forward.12} parent=39 // loop_exit
                _
            $region40: #{generator_conv_forward.12} parent=35 // pred_fallthru
              _
          $region36: #{generator_conv_forward.12} parent=31 // pred_fallthru
            _
          %207 = vnop
        $region32: #{generator_conv_forward.12} parent=27 // pred_fallthru
          _
      $region28: #{generator_conv_forward.12} parent=5 // pred_fallthru
        _
      %p208 = scmp.le.s32.totalorder 1, %s10
      %p209 = scmp.lt.s32.totalorder %s10, 3
      %p210 = pnand %p208, %p209
      %p211 = pneg %p210
      // Predicated region
      $region55: #{generator_conv_forward.12} parent=5 // pred_check
        _
      $region56: #{generator_conv_forward.12} parent=5 // pred_check_branch
        %213 = sbr.rel (%p210) target = $region58
      $region57: #{generator_conv_forward.12} parent=5 // pred_region
        %s214 = ssub.s32 %s10, 1
        %s215 = sand.u32 %s44, 1
        %s216 = sand.u32 %s44, 1
        %s217 = smul.addr %s216, 72
        %s218 = scalar_lea.vmem [#allocation2], %s217
        // Predicated region
        $region59: #{generator_conv_forward.12} parent=57 // pred_check
          %p219 = pneg %p57
        $region60: #{generator_conv_forward.12} parent=57 // pred_check_branch
          %221 = sbr.rel (%p219) target = $region62
        $region61: #{generator_conv_forward.12} parent=57 // pred_region
          _
        $region62: #{generator_conv_forward.12} parent=57 // pred_fallthru
          _
        %p222 = pneg %p31
        %p223 = pneg %p28
        %s224 = sand.u32 %s44, 1
        %s225 = sand.u32 %s44, 1
        %s226 = smul.addr %s225, 72
        %s227 = scalar_lea.vmem [#allocation2], %s226
        %p228 = pneg %p57
        %p229 = pneg %p54
        %p230 = pneg %p78
        %p231 = pneg %p75
        %p232 = pneg %p99
        %p233 = pneg %p96
        %p234 = pneg %p125
        %p235 = pneg %p122
        %s236 = sand.u32 %s112, 1
        %s237 = sand.u32 %s112, 1
        %s238 = smul.addr %s237, 72
        %s239 = scalar_lea.vmem [#allocation3], %s238
        %s240 = smul.u32 9, %s15
        %s241 = smul.u32 9, %s15
        %v243 = vld [vmem:[%s0] sm:$0xf]
        %v244 = vld [vmem:[%s0 + $0x4] sm:$0xf]
        %v245 = vld [vmem:[%s218] sm:$0xff]
        %v246 = vld [vmem:[%s218 + $0x8] sm:$0xff]
        %v247 = vld [vmem:[%s218 + $0x10] sm:$0xff]
        %v248 = vld [vmem:[%s218 + $0x18] sm:$0xff]
        %v249 = vld [vmem:[%s218 + $0x20] sm:$0xf]
        %v250 = vld [vmem:[%s218 + $0x24] sm:$0xff]
        %v251 = vld [vmem:[%s218 + $0x2c] sm:$0xff]
        %v252 = vld [vmem:[%s218 + $0x34] sm:$0xff]
        %v253 = vld [vmem:[%s218 + $0x3c] sm:$0xff]
        %v254 = vld [vmem:[%s218 + $0x44] sm:$0xf]
        %v257 = vunpack.c.l.b16 %v243
        %v258 = vunpack.c.l.b16 %v244
        %v259 = vpack.c.b16 %v258, %v257
        %v270 = vunpack.c.l.b16 %v245
        %v271 = vunpack.c.h.b16 %v245
        %v272 = vunpack.c.l.b16 %v246
        %v273 = vunpack.c.h.b16 %v246
        %v274 = vunpack.c.l.b16 %v247
        %v275 = vunpack.c.h.b16 %v247
        %v276 = vunpack.c.l.b16 %v248
        %v277 = vunpack.c.h.b16 %v248
        %v278 = vunpack.c.l.b16 %v249
        %v279 = vunpack.c.l.b16 %v250
        %v280 = vunpack.c.h.b16 %v250
        %v281 = vunpack.c.l.b16 %v251
        %v282 = vunpack.c.h.b16 %v251
        %v283 = vunpack.c.l.b16 %v252
        %v284 = vunpack.c.h.b16 %v252
        %v285 = vunpack.c.l.b16 %v253
        %v286 = vunpack.c.h.b16 %v253
        %v287 = vunpack.c.l.b16 %v254
        %v288 = vpack.c.b16 %v279, %v270
        %v289 = vpack.c.b16 %v280, %v271
        %v290 = vpack.c.b16 %v281, %v272
        %v291 = vpack.c.b16 %v282, %v273
        %v292 = vpack.c.b16 %v283, %v274
        %v293 = vpack.c.b16 %v284, %v275
        %v294 = vpack.c.b16 %v285, %v276
        %v295 = vpack.c.b16 %v286, %v277
        %v296 = vpack.c.b16 %v287, %v278
        %vm306 = vcmask 130048
        %v308 = vsel %vm306, %v259, 0
        %310 = vmatpush.bf16.msra.mxu0 0
        %311 = vmatpush.bf16.msra.mxu0 0
        %312 = vmatpush.bf16.msra.mxu0 0
        %313 = vmatpush.bf16.msra.mxu0 0
        %314 = vmatpush.bf16.msra.mxu0 0
        %315 = vmatpush.bf16.msra.mxu0 0
        %316 = vmatpush.bf16.msra.mxu0 0
        %317 = vmatpush.bf16.msra.mxu0 %v288
        %318 = vmatmul.bf16.gmra.mxu0 %v308
        %v319 = vpop.f32.mrf.mxu0
        %v320 = vadd.f32 0.0, %v319
        %v321 = vpop.f32.mrf.mxu0
        %v322 = vadd.f32 0.0, %v321
        %323 = vdwg.mxu0
        %324 = vmatpush.bf16.msra.mxu0 0
        %325 = vmatpush.bf16.msra.mxu0 0
        %326 = vmatpush.bf16.msra.mxu0 0
        %327 = vmatpush.bf16.msra.mxu0 0
        %328 = vmatpush.bf16.msra.mxu0 0
        %329 = vmatpush.bf16.msra.mxu0 0
        %330 = vmatpush.bf16.msra.mxu0 0
        %331 = vmatpush.bf16.msra.mxu0 %v289
        %332 = vmatmul.bf16.gmra.mxu0 %v308
        %v333 = vpop.f32.mrf.mxu0
        %v334 = vadd.f32 0.0, %v333
        %v335 = vpop.f32.mrf.mxu0
        %v336 = vadd.f32 0.0, %v335
        %337 = vdwg.mxu0
        %338 = vmatpush.bf16.msra.mxu0 0
        %339 = vmatpush.bf16.msra.mxu0 0
        %340 = vmatpush.bf16.msra.mxu0 0
        %341 = vmatpush.bf16.msra.mxu0 0
        %342 = vmatpush.bf16.msra.mxu0 0
        %343 = vmatpush.bf16.msra.mxu0 0
        %344 = vmatpush.bf16.msra.mxu0 0
        %345 = vmatpush.bf16.msra.mxu0 %v290
        %346 = vmatmul.bf16.gmra.mxu0 %v308
        %v347 = vpop.f32.mrf.mxu0
        %v348 = vadd.f32 0.0, %v347
        %v349 = vpop.f32.mrf.mxu0
        %v350 = vadd.f32 0.0, %v349
        %351 = vdwg.mxu0
        %352 = vmatpush.bf16.msra.mxu0 0
        %353 = vmatpush.bf16.msra.mxu0 0
        %354 = vmatpush.bf16.msra.mxu0 0
        %355 = vmatpush.bf16.msra.mxu0 0
        %356 = vmatpush.bf16.msra.mxu0 0
        %357 = vmatpush.bf16.msra.mxu0 0
        %358 = vmatpush.bf16.msra.mxu0 0
        %359 = vmatpush.bf16.msra.mxu0 %v291
        %360 = vmatmul.bf16.gmra.mxu0 %v308
        %v361 = vpop.f32.mrf.mxu0
        %v362 = vadd.f32 0.0, %v361
        %v363 = vpop.f32.mrf.mxu0
        %v364 = vadd.f32 0.0, %v363
        %365 = vdwg.mxu0
        %366 = vmatpush.bf16.msra.mxu0 0
        %367 = vmatpush.bf16.msra.mxu0 0
        %368 = vmatpush.bf16.msra.mxu0 0
        %369 = vmatpush.bf16.msra.mxu0 0
        %370 = vmatpush.bf16.msra.mxu0 0
        %371 = vmatpush.bf16.msra.mxu0 0
        %372 = vmatpush.bf16.msra.mxu0 0
        %373 = vmatpush.bf16.msra.mxu0 %v292
        %374 = vmatmul.bf16.gmra.mxu0 %v308
        %v375 = vpop.f32.mrf.mxu0
        %v376 = vadd.f32 0.0, %v375
        %v377 = vpop.f32.mrf.mxu0
        %v378 = vadd.f32 0.0, %v377
        %379 = vdwg.mxu0
        %380 = vmatpush.bf16.msra.mxu0 0
        %381 = vmatpush.bf16.msra.mxu0 0
        %382 = vmatpush.bf16.msra.mxu0 0
        %383 = vmatpush.bf16.msra.mxu0 0
        %384 = vmatpush.bf16.msra.mxu0 0
        %385 = vmatpush.bf16.msra.mxu0 0
        %386 = vmatpush.bf16.msra.mxu0 0
        %387 = vmatpush.bf16.msra.mxu0 %v293
        %388 = vmatmul.bf16.gmra.mxu0 %v308
        %v389 = vpop.f32.mrf.mxu0
        %v390 = vadd.f32 0.0, %v389
        %v391 = vpop.f32.mrf.mxu0
        %v392 = vadd.f32 0.0, %v391
        %393 = vdwg.mxu0
        %394 = vmatpush.bf16.msra.mxu0 0
        %395 = vmatpush.bf16.msra.mxu0 0
        %396 = vmatpush.bf16.msra.mxu0 0
        %397 = vmatpush.bf16.msra.mxu0 0
        %398 = vmatpush.bf16.msra.mxu0 0
        %399 = vmatpush.bf16.msra.mxu0 0
        %400 = vmatpush.bf16.msra.mxu0 0
        %401 = vmatpush.bf16.msra.mxu0 %v294
        %402 = vmatmul.bf16.gmra.mxu0 %v308
        %v403 = vpop.f32.mrf.mxu0
        %v404 = vadd.f32 0.0, %v403
        %v405 = vpop.f32.mrf.mxu0
        %v406 = vadd.f32 0.0, %v405
        %407 = vdwg.mxu0
        %408 = vmatpush.bf16.msra.mxu0 0
        %409 = vmatpush.bf16.msra.mxu0 0
        %410 = vmatpush.bf16.msra.mxu0 0
        %411 = vmatpush.bf16.msra.mxu0 0
        %412 = vmatpush.bf16.msra.mxu0 0
        %413 = vmatpush.bf16.msra.mxu0 0
        %414 = vmatpush.bf16.msra.mxu0 0
        %415 = vmatpush.bf16.msra.mxu0 %v295
        %416 = vmatmul.bf16.gmra.mxu0 %v308
        %v417 = vpop.f32.mrf.mxu0
        %v418 = vadd.f32 0.0, %v417
        %v419 = vpop.f32.mrf.mxu0
        %v420 = vadd.f32 0.0, %v419
        %421 = vdwg.mxu0
        %422 = vmatpush.bf16.msra.mxu0 0
        %423 = vmatpush.bf16.msra.mxu0 0
        %424 = vmatpush.bf16.msra.mxu0 0
        %425 = vmatpush.bf16.msra.mxu0 0
        %426 = vmatpush.bf16.msra.mxu0 0
        %427 = vmatpush.bf16.msra.mxu0 0
        %428 = vmatpush.bf16.msra.mxu0 0
        %429 = vmatpush.bf16.msra.mxu0 %v296
        %430 = vmatmul.bf16.gmra.mxu0 %v308
        %v431 = vpop.f32.mrf.mxu0
        %v432 = vadd.f32 0.0, %v431
        %v433 = vpop.f32.mrf.mxu0
        %v434 = vadd.f32 0.0, %v433
        %435 = vdwg.mxu0
        %v436 = vld [vmem:[%s2] sm:$0xff]
        %v437 = vld [vmem:[%s2 + $0x8] sm:$0xff]
        %439 = vset.pattern.permute.xlu0 0
        %440 = vperm.xlu0 %439, %v436
        %v441 = vpop.permute.xlu0 %440
        %444 = vset.pattern.permute.xlu0 0
        %445 = vperm.xlu0 %444, %v437
        %v446 = vpop.permute.xlu0 %445
        %v448 = vmul.f32 %v320, %v441
        %v449 = vmul.f32 %v334, %v441
        %v450 = vmul.f32 %v348, %v441
        %v451 = vmul.f32 %v362, %v441
        %v452 = vmul.f32 %v376, %v441
        %v453 = vmul.f32 %v390, %v441
        %v454 = vmul.f32 %v404, %v441
        %v455 = vmul.f32 %v418, %v441
        %v456 = vmul.f32 %v432, %v441
        %v457 = vmul.f32 %v322, %v446
        %v458 = vmul.f32 %v336, %v446
        %v459 = vmul.f32 %v350, %v446
        %v460 = vmul.f32 %v364, %v446
        %v461 = vmul.f32 %v378, %v446
        %v462 = vmul.f32 %v392, %v446
        %v463 = vmul.f32 %v406, %v446
        %v464 = vmul.f32 %v420, %v446
        %v465 = vmul.f32 %v434, %v446
        %v466 = vld [vmem:[%s3] sm:$0xff]
        %v467 = vld [vmem:[%s3 + $0x8] sm:$0xff]
        %469 = vset.pattern.permute.xlu0 0
        %470 = vperm.xlu0 %469, %v466
        %v471 = vpop.permute.xlu0 %470
        %474 = vset.pattern.permute.xlu0 0
        %475 = vperm.xlu0 %474, %v467
        %v476 = vpop.permute.xlu0 %475
        %v478 = vadd.f32 %v448, %v471
        %v479 = vadd.f32 %v449, %v471
        %v480 = vadd.f32 %v450, %v471
        %v481 = vadd.f32 %v451, %v471
        %v482 = vadd.f32 %v452, %v471
        %v483 = vadd.f32 %v453, %v471
        %v484 = vadd.f32 %v454, %v471
        %v485 = vadd.f32 %v455, %v471
        %v486 = vadd.f32 %v456, %v471
        %v487 = vadd.f32 %v457, %v476
        %v488 = vadd.f32 %v458, %v476
        %v489 = vadd.f32 %v459, %v476
        %v490 = vadd.f32 %v460, %v476
        %v491 = vadd.f32 %v461, %v476
        %v492 = vadd.f32 %v462, %v476
        %v493 = vadd.f32 %v463, %v476
        %v494 = vadd.f32 %v464, %v476
        %v495 = vadd.f32 %v465, %v476
        %vm496 = vcmp.gt.f32.partialorder %v478, 0.0
        %vm497 = vcmp.gt.f32.partialorder %v479, 0.0
        %vm498 = vcmp.gt.f32.partialorder %v480, 0.0
        %vm499 = vcmp.gt.f32.partialorder %v481, 0.0
        %vm500 = vcmp.gt.f32.partialorder %v482, 0.0
        %vm501 = vcmp.gt.f32.partialorder %v483, 0.0
        %vm502 = vcmp.gt.f32.partialorder %v484, 0.0
        %vm503 = vcmp.gt.f32.partialorder %v485, 0.0
        %vm504 = vcmp.gt.f32.partialorder %v486, 0.0
        %vm505 = vcmp.gt.f32.partialorder %v487, 0.0
        %vm506 = vcmp.gt.f32.partialorder %v488, 0.0
        %vm507 = vcmp.gt.f32.partialorder %v489, 0.0
        %vm508 = vcmp.gt.f32.partialorder %v490, 0.0
        %vm509 = vcmp.gt.f32.partialorder %v491, 0.0
        %vm510 = vcmp.gt.f32.partialorder %v492, 0.0
        %vm511 = vcmp.gt.f32.partialorder %v493, 0.0
        %vm512 = vcmp.gt.f32.partialorder %v494, 0.0
        %vm513 = vcmp.gt.f32.partialorder %v495, 0.0
        %v514 = vmul.f32 %v478, 0.2
        %v515 = vmul.f32 %v479, 0.2
        %v516 = vmul.f32 %v480, 0.2
        %v517 = vmul.f32 %v481, 0.2
        %v518 = vmul.f32 %v482, 0.2
        %v519 = vmul.f32 %v483, 0.2
        %v520 = vmul.f32 %v484, 0.2
        %v521 = vmul.f32 %v485, 0.2
        %v522 = vmul.f32 %v486, 0.2
        %v523 = vmul.f32 %v487, 0.2
        %v524 = vmul.f32 %v488, 0.2
        %v525 = vmul.f32 %v489, 0.2
        %v526 = vmul.f32 %v490, 0.2
        %v527 = vmul.f32 %v491, 0.2
        %v528 = vmul.f32 %v492, 0.2
        %v529 = vmul.f32 %v493, 0.2
        %v530 = vmul.f32 %v494, 0.2
        %v531 = vmul.f32 %v495, 0.2
        %v532 = vsel %vm496, %v478, %v514
        %v533 = vsel %vm497, %v479, %v515
        %v534 = vsel %vm498, %v480, %v516
        %v535 = vsel %vm499, %v481, %v517
        %v536 = vsel %vm500, %v482, %v518
        %v537 = vsel %vm501, %v483, %v519
        %v538 = vsel %vm502, %v484, %v520
        %v539 = vsel %vm503, %v485, %v521
        %v540 = vsel %vm504, %v486, %v522
        %v541 = vsel %vm505, %v487, %v523
        %v542 = vsel %vm506, %v488, %v524
        %v543 = vsel %vm507, %v489, %v525
        %v544 = vsel %vm508, %v490, %v526
        %v545 = vsel %vm509, %v491, %v527
        %v546 = vsel %vm510, %v492, %v528
        %v547 = vsel %vm511, %v493, %v529
        %v548 = vsel %vm512, %v494, %v530
        %v549 = vsel %vm513, %v495, %v531
        %v550 = vpack.c.bf16 %v533, %v532
        %v551 = vpack.c.bf16 %v535, %v534
        %v552 = vpack.c.bf16 %v537, %v536
        %v553 = vpack.c.bf16 %v539, %v538
        %v554 = vpack.c.bf16 %v540, %v540
        %v555 = vpack.c.bf16 %v542, %v541
        %v556 = vpack.c.bf16 %v544, %v543
        %v557 = vpack.c.bf16 %v546, %v545
        %v558 = vpack.c.bf16 %v548, %v547
        %v559 = vpack.c.bf16 %v549, %v549
        %560 = vst [vmem:[%s239] sm:$0xff] %v550
        %561 = vst [vmem:[%s239 + $0x8] sm:$0xff] %v551
        %562 = vst [vmem:[%s239 + $0x10] sm:$0xff] %v552
        %563 = vst [vmem:[%s239 + $0x18] sm:$0xff] %v553
        %564 = vst [vmem:[%s239 + $0x20] sm:$0xf] %v554
        %565 = vst [vmem:[%s239 + $0x24] sm:$0xff] %v555
        %566 = vst [vmem:[%s239 + $0x2c] sm:$0xff] %v556
        %567 = vst [vmem:[%s239 + $0x34] sm:$0xff] %v557
        %568 = vst [vmem:[%s239 + $0x3c] sm:$0xff] %v558
        %569 = vst [vmem:[%s239 + $0x44] sm:$0xf] %v559
        %s570 = sand.u32 %s112, 1
        %s571 = sand.u32 %s112, 1
        %s572 = smul.addr %s571, 72
        %s573 = scalar_lea.vmem [#allocation3], %s572
        // Predicated region
        $region63: #{generator_conv_forward.12} parent=57 // pred_check
          %p574 = pneg %p122
        $region64: #{generator_conv_forward.12} parent=57 // pred_check_branch
          %576 = sbr.rel (%p574) target = $region66
        $region65: #{generator_conv_forward.12} parent=57 // pred_region
          %s577 = smul.u32 9, %s15
          %s578 = smul.addr %s577, 4
          %s579 = scalar_lea.vmem %s4, %s578
          // Predicated region
          $region67: #{generator_conv_forward.12} parent=65 // pred_check
            _
          $region68: #{generator_conv_forward.12} parent=65 // pred_check_branch
            %581 = sbr.rel (0) target = $region70
          $region69: #{generator_conv_forward.12} parent=65 // pred_region
            // Predicated region
            $region71: #{generator_conv_forward.12} parent=69 // pred_check
              _
            $region72: #{generator_conv_forward.12} parent=69 // pred_check_branch
              %583 = sbr.rel (0) target = $region74
            $region73: #{generator_conv_forward.12} parent=69 // pred_region
              %s584 = scalar_lea.vmem %s573, 32 [#allocation3]
              %s585 = scalar_lea.vmem %s579, 32
              loop: start=0, step=1, limit=1
              $region75: #{generator_conv_forward.12} parent=73 // loop_pre_header
                _
              $region76: #{generator_conv_forward.12} parent=73 // loop_header
                %s587 = sphi 0, %s591
                %p588 = scmp.ge.s32.totalorder %s587, 1
                %s592 = sphi %s573, %s573
                %s593 = sphi %s579, %s579
              $region77: #{generator_conv_forward.12} parent=73 // loop_header_branch
                %590 = sbr.rel (%p588) target = $region81
              $region78: #{generator_conv_forward.12} parent=73 // loop_body
                %v594 = vld [vmem:[%s592] sm:$0xff]
                %595 = vst [vmem:[%s593] sm:$0xff] %v594
                %v596 = vld [vmem:[%s592 + $0x8] sm:$0xff]
                %597 = vst [vmem:[%s593 + $0x8] sm:$0xff] %v596
                %v598 = vld [vmem:[%s592 + $0x10] sm:$0xff]
                %599 = vst [vmem:[%s593 + $0x10] sm:$0xff] %v598
                %v600 = vld [vmem:[%s592 + $0x18] sm:$0xff]
                %601 = vst [vmem:[%s593 + $0x18] sm:$0xff] %v600
                %v602 = vld [vmem:[%s592 + $0x24] sm:$0xff]
                %603 = vst [vmem:[%s593 + $0x48] sm:$0xff] %v602
                %v604 = vld [vmem:[%s592 + $0x2c] sm:$0xff]
                %605 = vst [vmem:[%s593 + $0x50] sm:$0xff] %v604
                %v606 = vld [vmem:[%s592 + $0x34] sm:$0xff]
                %607 = vst [vmem:[%s593 + $0x58] sm:$0xff] %v606
                %v608 = vld [vmem:[%s592 + $0x3c] sm:$0xff]
                %609 = vst [vmem:[%s593 + $0x60] sm:$0xff] %v608
              $region79: #{generator_conv_forward.12} parent=73 // loop_footer
                %s591 = sadd.s32 1, %s587
              $region80: #{generator_conv_forward.12} parent=73 // loop_footer_branch
                %586 = sbr.rel target = $region76
              $region81: #{generator_conv_forward.12} parent=73 // loop_exit
                _
              %s611 = ssub.s32 16, 1
              loop: start=0, step=1, limit=1
              $region82: #{generator_conv_forward.12} parent=73 // loop_pre_header
                _
              $region83: #{generator_conv_forward.12} parent=73 // loop_header
                %s613 = sphi 0, %s617
                %p614 = scmp.ge.s32.totalorder %s613, 1
                %s618 = sphi %s584, %s584
                %s619 = sphi %s585, %s585
              $region84: #{generator_conv_forward.12} parent=73 // loop_header_branch
                %616 = sbr.rel (%p614) target = $region88
              $region85: #{generator_conv_forward.12} parent=73 // loop_body
                %v620 = vld [vmem:[%s618] sm:%s611]
                %621 = vst [vmem:[%s619] sm:%s611] %v620
                %v622 = vld [vmem:[%s618 + $0x24] sm:%s611]
                %623 = vst [vmem:[%s619 + $0x48] sm:%s611] %v622
              $region86: #{generator_conv_forward.12} parent=73 // loop_footer
                %s617 = sadd.s32 1, %s613
              $region87: #{generator_conv_forward.12} parent=73 // loop_footer_branch
                %612 = sbr.rel target = $region83
              $region88: #{generator_conv_forward.12} parent=73 // loop_exit
                _
            $region74: #{generator_conv_forward.12} parent=69 // pred_fallthru
              _
          $region70: #{generator_conv_forward.12} parent=65 // pred_fallthru
            _
          %624 = vnop
        $region66: #{generator_conv_forward.12} parent=57 // pred_fallthru
          _
      $region58: #{generator_conv_forward.12} parent=5 // pred_fallthru
        _
      %p625 = scmp.le.s32.totalorder 2, %s10
      // Predicated region
      $region89: #{generator_conv_forward.12} parent=5 // pred_check
        %p626 = pneg %p625
      $region90: #{generator_conv_forward.12} parent=5 // pred_check_branch
        %628 = sbr.rel (%p626) target = $region92
      $region91: #{generator_conv_forward.12} parent=5 // pred_region
        %s629 = ssub.s32 %s10, 2
        // Predicated region
        $region93: #{generator_conv_forward.12} parent=91 // pred_check
          %p630 = pneg %p128
        $region94: #{generator_conv_forward.12} parent=91 // pred_check_branch
          %632 = sbr.rel (%p630) target = $region96
        $region95: #{generator_conv_forward.12} parent=91 // pred_region
          %s633 = sand.u32 %s113, 1
          %s634 = sand.u32 %s113, 1
          %s635 = smul.addr %s634, 72
          %s636 = scalar_lea.vmem [#allocation3], %s635
        $region96: #{generator_conv_forward.12} parent=91 // pred_fallthru
          _
      $region92: #{generator_conv_forward.12} parent=5 // pred_fallthru
        _
    $region6: #{generator_conv_forward.12} parent=1 // loop_footer
      %s14 = sadd.s32 1, %s10
    $region7: #{generator_conv_forward.12} parent=1 // loop_footer_branch
      %9 = sbr.rel target = $region3
    $region8: #{generator_conv_forward.12} parent=1 // loop_exit
      _

// kernel: generator_conv_forward.13
$region0: #{generator_conv_forward.13}
  #allocation0 [shape = 'u32[]', space=smem, size = 0x4, offset = 0x4, fixed_abs, tag = 'smem constant byte address 0x4 - core index']
  #allocation1 [shape = 'u32[72,128]{1,0:T(1,128)}', space=vmem, size = 0x9000, scoped, tag = 'internal scratch']
  %s0 = inlined_call_operand.vmem [shape: bf16[16,16], index: 0, kind: input, shape index: {}]
  %s1 = inlined_call_operand.vmem [shape: bf16[16,8704], index: 1, kind: input, shape index: {}]
  %s2 = inlined_call_operand.vmem [shape: f32[16,1], index: 2, kind: input, shape index: {}]
  %s3 = inlined_call_operand.vmem [shape: f32[16,1], index: 3, kind: input, shape index: {}]
  %s4 = inlined_call_operand.vmem [shape: f32[16,8704], index: 4, kind: output, shape index: {}]
  %s5 = sld [smem:[#allocation0]]
  $region91: #{generator_conv_forward.13} parent=0
    _
  %s7 = ssub.s32 1, %s5
  %s8 = scalar_select 0, %s7, %s5
  $region1: #{generator_conv_forward.13} parent=0
    #allocation2 [shape = 'u8[278528]{0}', space=vmem, size = 0x44000, scoped, tag = 'input window, operand 1']
    #allocation3 [shape = 'u8[557056]{0}', space=vmem, size = 0x88000, scoped, tag = 'output window, operand 0']
    loop: start=0, step=1, limit=4
    $region2: #{generator_conv_forward.13} parent=1 // loop_pre_header
      _
    $region3: #{generator_conv_forward.13} parent=1 // loop_header
      %s10 = sphi 0, %s14
      %p11 = scmp.ge.s32.totalorder %s10, 4
      %s18 = sphi 0, %s18
      %s20 = sphi 0, %s18
      %s21 = sphi 0, %s20
      %s35 = sphi 0, %s21
      %s41 = sphi 0, %s43
      %s44 = sphi 0, %s41
      %s45 = sphi 0, %s44
      %s61 = sphi 0, %s45
      %s65 = sphi 0, %s65
      %s67 = sphi 0, %s65
      %s68 = sphi 0, %s67
      %s82 = sphi 0, %s68
      %s86 = sphi 0, %s86
      %s88 = sphi 0, %s86
      %s89 = sphi 0, %s88
      %s103 = sphi 0, %s89
      %s109 = sphi 0, %s111
      %s112 = sphi 0, %s109
      %s113 = sphi 0, %s112
      %s129 = sphi 0, %s113
    $region4: #{generator_conv_forward.13} parent=1 // loop_header_branch
      %13 = sbr.rel (%p11) target = $region8
    $region5: #{generator_conv_forward.13} parent=1 // loop_body
      %s15 = ssub.s32 %s10, 1
      %s16 = ssub.s32 %s10, 2
      %s17 = sadd.s32 %s10, 1
      %s19 = sadd.s32 %s18, 1
      %p22 = scmp.eq.s32.totalorder %s10, 1
      %p23 = scmp.ne.s32.totalorder %s18, %s20
      %p24 = scmp.eq.s32.totalorder %s10, 0
      %p25 = por %p23, %p24
      %p26 = scmp.ne.s32.totalorder %s18, %s20
      %p27 = scmp.eq.s32.totalorder %s15, 1
      %p28 = por %p26, %p27
      %p29 = scmp.ne.s32.totalorder %s20, %s21
      %p30 = scmp.eq.s32.totalorder %s15, 0
      %p31 = por %p29, %p30
      %p32 = scmp.ne.s32.totalorder %s20, %s21
      %p33 = scmp.eq.s32.totalorder %s16, 1
      %p34 = por %p32, %p33
      %p36 = scmp.ne.s32.totalorder %s21, %s35
      %p37 = scmp.eq.s32.totalorder %s16, 0
      %p38 = por %p36, %p37
      %s39 = ssub.s32 %s10, %s17
      %p40 = scmp.eq.s32.totalorder %s39, 0
      %s42 = sadd.s32 %s41, 1
      %s43 = scalar_select %p40, %s41, %s42
      %p46 = pneg %p40
      %p47 = scmp.eq.s32.totalorder %s10, 1
      %p48 = por %p46, %p47
      %p49 = scmp.ne.s32.totalorder %s41, %s44
      %p50 = scmp.eq.s32.totalorder %s10, 0
      %p51 = por %p49, %p50
      %p52 = scmp.ne.s32.totalorder %s41, %s44
      %p53 = scmp.eq.s32.totalorder %s15, 1
      %p54 = por %p52, %p53
      %p55 = scmp.ne.s32.totalorder %s44, %s45
      %p56 = scmp.eq.s32.totalorder %s15, 0
      %p57 = por %p55, %p56
      %p58 = scmp.ne.s32.totalorder %s44, %s45
      %p59 = scmp.eq.s32.totalorder %s16, 1
      %p60 = por %p58, %p59
      %p62 = scmp.ne.s32.totalorder %s45, %s61
      %p63 = scmp.eq.s32.totalorder %s16, 0
      %p64 = por %p62, %p63
      %s66 = sadd.s32 %s65, 1
      %p69 = scmp.eq.s32.totalorder %s10, 1
      %p70 = scmp.ne.s32.totalorder %s65, %s67
      %p71 = scmp.eq.s32.totalorder %s10, 0
      %p72 = por %p70, %p71
      %p73 = scmp.ne.s32.totalorder %s65, %s67
      %p74 = scmp.eq.s32.totalorder %s15, 1
      %p75 = por %p73, %p74
      %p76 = scmp.ne.s32.totalorder %s67, %s68
      %p77 = scmp.eq.s32.totalorder %s15, 0
      %p78 = por %p76, %p77
      %p79 = scmp.ne.s32.totalorder %s67, %s68
      %p80 = scmp.eq.s32.totalorder %s16, 1
      %p81 = por %p79, %p80
      %p83 = scmp.ne.s32.totalorder %s68, %s82
      %p84 = scmp.eq.s32.totalorder %s16, 0
      %p85 = por %p83, %p84
      %s87 = sadd.s32 %s86, 1
      %p90 = scmp.eq.s32.totalorder %s10, 1
      %p91 = scmp.ne.s32.totalorder %s86, %s88
      %p92 = scmp.eq.s32.totalorder %s10, 0
      %p93 = por %p91, %p92
      %p94 = scmp.ne.s32.totalorder %s86, %s88
      %p95 = scmp.eq.s32.totalorder %s15, 1
      %p96 = por %p94, %p95
      %p97 = scmp.ne.s32.totalorder %s88, %s89
      %p98 = scmp.eq.s32.totalorder %s15, 0
      %p99 = por %p97, %p98
      %p100 = scmp.ne.s32.totalorder %s88, %s89
      %p101 = scmp.eq.s32.totalorder %s16, 1
      %p102 = por %p100, %p101
      %p104 = scmp.ne.s32.totalorder %s89, %s103
      %p105 = scmp.eq.s32.totalorder %s16, 0
      %p106 = por %p104, %p105
      %s107 = ssub.s32 %s10, %s17
      %p108 = scmp.eq.s32.totalorder %s107, 0
      %s110 = sadd.s32 %s109, 1
      %s111 = scalar_select %p108, %s109, %s110
      %p114 = pneg %p108
      %p115 = scmp.eq.s32.totalorder %s10, 1
      %p116 = por %p114, %p115
      %p117 = scmp.ne.s32.totalorder %s109, %s112
      %p118 = scmp.eq.s32.totalorder %s10, 0
      %p119 = por %p117, %p118
      %p120 = scmp.ne.s32.totalorder %s109, %s112
      %p121 = scmp.eq.s32.totalorder %s15, 1
      %p122 = por %p120, %p121
      %p123 = scmp.ne.s32.totalorder %s112, %s113
      %p124 = scmp.eq.s32.totalorder %s15, 0
      %p125 = por %p123, %p124
      %p126 = scmp.ne.s32.totalorder %s112, %s113
      %p127 = scmp.eq.s32.totalorder %s16, 1
      %p128 = por %p126, %p127
      %p130 = scmp.ne.s32.totalorder %s113, %s129
      %p131 = scmp.eq.s32.totalorder %s16, 0
      %p132 = por %p130, %p131
      %p133 = scmp.le.s32.totalorder 1, %s10
      %p134 = scmp.lt.s32.totalorder %s10, 3
      %p135 = pnand %p133, %p134
      %p136 = pneg %p135
      // Predicated region
      $region9: #{generator_conv_forward.13} parent=5 // pred_check
        _
      $region10: #{generator_conv_forward.13} parent=5 // pred_check_branch
        %138 = sbr.rel (%p135) target = $region12
      $region11: #{generator_conv_forward.13} parent=5 // pred_region
        %s139 = ssub.s32 %s10, 1
        // Predicated region
        $region13: #{generator_conv_forward.13} parent=11 // pred_check
          %p140 = pneg %p31
        $region14: #{generator_conv_forward.13} parent=11 // pred_check_branch
          %142 = sbr.rel (%p140) target = $region16
        $region15: #{generator_conv_forward.13} parent=11 // pred_region
          _
        $region16: #{generator_conv_forward.13} parent=11 // pred_fallthru
          _
        // Predicated region
        $region17: #{generator_conv_forward.13} parent=11 // pred_check
          %p143 = pneg %p78
        $region18: #{generator_conv_forward.13} parent=11 // pred_check_branch
          %145 = sbr.rel (%p143) target = $region20
        $region19: #{generator_conv_forward.13} parent=11 // pred_region
          _
        $region20: #{generator_conv_forward.13} parent=11 // pred_fallthru
          _
        // Predicated region
        $region21: #{generator_conv_forward.13} parent=11 // pred_check
          %p146 = pneg %p99
        $region22: #{generator_conv_forward.13} parent=11 // pred_check_branch
          %148 = sbr.rel (%p146) target = $region24
        $region23: #{generator_conv_forward.13} parent=11 // pred_region
          _
        $region24: #{generator_conv_forward.13} parent=11 // pred_fallthru
          _
      $region12: #{generator_conv_forward.13} parent=5 // pred_fallthru
        _
      %p149 = scmp.lt.s32.totalorder %s10, 2
      // Predicated region
      $region25: #{generator_conv_forward.13} parent=5 // pred_check
        %p150 = pneg %p149
      $region26: #{generator_conv_forward.13} parent=5 // pred_check_branch
        %152 = sbr.rel (%p150) target = $region28
      $region27: #{generator_conv_forward.13} parent=5 // pred_region
        // Predicated region
        $region29: #{generator_conv_forward.13} parent=27 // pred_check
          %p153 = pneg %p51
        $region30: #{generator_conv_forward.13} parent=27 // pred_check_branch
          %155 = sbr.rel (%p153) target = $region32
        $region31: #{generator_conv_forward.13} parent=27 // pred_region
          %s156 = sand.u32 %s41, 1
          %s157 = sand.u32 %s41, 1
          %s158 = smul.addr %s157, 272
          %s159 = scalar_lea.vmem [#allocation2], %s158
          %s160 = smul.u32 34, %s10
          %s161 = smul.addr %s160, 4
          %s162 = scalar_lea.vmem %s1, %s161
          // Predicated region
          $region33: #{generator_conv_forward.13} parent=31 // pred_check
            _
          $region34: #{generator_conv_forward.13} parent=31 // pred_check_branch
            %164 = sbr.rel (0) target = $region36
          $region35: #{generator_conv_forward.13} parent=31 // pred_region
            // Predicated region
            $region37: #{generator_conv_forward.13} parent=35 // pred_check
              _
            $region38: #{generator_conv_forward.13} parent=35 // pred_check_branch
              %166 = sbr.rel (0) target = $region40
            $region39: #{generator_conv_forward.13} parent=35 // pred_region
              loop: start=0, step=1, limit=1
              $region41: #{generator_conv_forward.13} parent=39 // loop_pre_header
                _
              $region42: #{generator_conv_forward.13} parent=39 // loop_header
                %s168 = sphi 0, %s172
                %p169 = scmp.ge.s32.totalorder %s168, 1
                %s173 = sphi %s162, %s162
                %s174 = sphi %s159, %s159
              $region43: #{generator_conv_forward.13} parent=39 // loop_header_branch
                %171 = sbr.rel (%p169) target = $region47
              $region44: #{generator_conv_forward.13} parent=39 // loop_body
                %v175 = vld [vmem:[%s173] sm:$0xff]
                %176 = vst [vmem:[%s174] sm:$0xff] %v175
                %v177 = vld [vmem:[%s173 + $0x8] sm:$0xff]
                %178 = vst [vmem:[%s174 + $0x8] sm:$0xff] %v177
                %v179 = vld [vmem:[%s173 + $0x10] sm:$0xff]
                %180 = vst [vmem:[%s174 + $0x10] sm:$0xff] %v179
                %v181 = vld [vmem:[%s173 + $0x18] sm:$0xff]
                %182 = vst [vmem:[%s174 + $0x18] sm:$0xff] %v181
                %v183 = vld [vmem:[%s173 + $0x20] sm:$0xff]
                %184 = vst [vmem:[%s174 + $0x20] sm:$0xff] %v183
                %v185 = vld [vmem:[%s173 + $0x28] sm:$0xff]
                %186 = vst [vmem:[%s174 + $0x28] sm:$0xff] %v185
                %v187 = vld [vmem:[%s173 + $0x30] sm:$0xff]
                %188 = vst [vmem:[%s174 + $0x30] sm:$0xff] %v187
                %v189 = vld [vmem:[%s173 + $0x38] sm:$0xff]
                %190 = vst [vmem:[%s174 + $0x38] sm:$0xff] %v189
                %v191 = vld [vmem:[%s173 + $0x40] sm:$0xff]
                %192 = vst [vmem:[%s174 + $0x40] sm:$0xff] %v191
                %v193 = vld [vmem:[%s173 + $0x48] sm:$0xff]
                %194 = vst [vmem:[%s174 + $0x48] sm:$0xff] %v193
                %v195 = vld [vmem:[%s173 + $0x50] sm:$0xff]
                %196 = vst [vmem:[%s174 + $0x50] sm:$0xff] %v195
                %v197 = vld [vmem:[%s173 + $0x58] sm:$0xff]
                %198 = vst [vmem:[%s174 + $0x58] sm:$0xff] %v197
                %v199 = vld [vmem:[%s173 + $0x60] sm:$0xff]
                %200 = vst [vmem:[%s174 + $0x60] sm:$0xff] %v199
                %v201 = vld [vmem:[%s173 + $0x68] sm:$0xff]
                %202 = vst [vmem:[%s174 + $0x68] sm:$0xff] %v201
                %v203 = vld [vmem:[%s173 + $0x70] sm:$0xff]
                %204 = vst [vmem:[%s174 + $0x70] sm:$0xff] %v203
                %v205 = vld [vmem:[%s173 + $0x78] sm:$0xff]
                %206 = vst [vmem:[%s174 + $0x78] sm:$0xff] %v205
                %v207 = vld [vmem:[%s173 + $0x80] sm:$0xff]
                %208 = vst [vmem:[%s174 + $0x80] sm:$0xff] %v207
                %v209 = vld [vmem:[%s173 + $0x110] sm:$0xff]
                %210 = vst [vmem:[%s174 + $0x88] sm:$0xff] %v209
                %v211 = vld [vmem:[%s173 + $0x118] sm:$0xff]
                %212 = vst [vmem:[%s174 + $0x90] sm:$0xff] %v211
                %v213 = vld [vmem:[%s173 + $0x120] sm:$0xff]
                %214 = vst [vmem:[%s174 + $0x98] sm:$0xff] %v213
                %v215 = vld [vmem:[%s173 + $0x128] sm:$0xff]
                %216 = vst [vmem:[%s174 + $0xa0] sm:$0xff] %v215
                %v217 = vld [vmem:[%s173 + $0x130] sm:$0xff]
                %218 = vst [vmem:[%s174 + $0xa8] sm:$0xff] %v217
                %v219 = vld [vmem:[%s173 + $0x138] sm:$0xff]
                %220 = vst [vmem:[%s174 + $0xb0] sm:$0xff] %v219
                %v221 = vld [vmem:[%s173 + $0x140] sm:$0xff]
                %222 = vst [vmem:[%s174 + $0xb8] sm:$0xff] %v221
                %v223 = vld [vmem:[%s173 + $0x148] sm:$0xff]
                %224 = vst [vmem:[%s174 + $0xc0] sm:$0xff] %v223
                %v225 = vld [vmem:[%s173 + $0x150] sm:$0xff]
                %226 = vst [vmem:[%s174 + $0xc8] sm:$0xff] %v225
                %v227 = vld [vmem:[%s173 + $0x158] sm:$0xff]
                %228 = vst [vmem:[%s174 + $0xd0] sm:$0xff] %v227
                %v229 = vld [vmem:[%s173 + $0x160] sm:$0xff]
                %230 = vst [vmem:[%s174 + $0xd8] sm:$0xff] %v229
                %v231 = vld [vmem:[%s173 + $0x168] sm:$0xff]
                %232 = vst [vmem:[%s174 + $0xe0] sm:$0xff] %v231
                %v233 = vld [vmem:[%s173 + $0x170] sm:$0xff]
                %234 = vst [vmem:[%s174 + $0xe8] sm:$0xff] %v233
                %v235 = vld [vmem:[%s173 + $0x178] sm:$0xff]
                %236 = vst [vmem:[%s174 + $0xf0] sm:$0xff] %v235
                %v237 = vld [vmem:[%s173 + $0x180] sm:$0xff]
                %238 = vst [vmem:[%s174 + $0xf8] sm:$0xff] %v237
                %v239 = vld [vmem:[%s173 + $0x188] sm:$0xff]
                %240 = vst [vmem:[%s174 + $0x100] sm:$0xff] %v239
                %v241 = vld [vmem:[%s173 + $0x190] sm:$0xff]
                %242 = vst [vmem:[%s174 + $0x108] sm:$0xff] %v241
              $region45: #{generator_conv_forward.13} parent=39 // loop_footer
                %s172 = sadd.s32 1, %s168
              $region46: #{generator_conv_forward.13} parent=39 // loop_footer_branch
                %167 = sbr.rel target = $region42
              $region47: #{generator_conv_forward.13} parent=39 // loop_exit
                _
            $region40: #{generator_conv_forward.13} parent=35 // pred_fallthru
              _
            // Predicated region
            $region48: #{generator_conv_forward.13} parent=35 // pred_check
              _
            $region49: #{generator_conv_forward.13} parent=35 // pred_check_branch
              %244 = sbr.rel target = $region51
            $region50: #{generator_conv_forward.13} parent=35 // pred_region
              _
            $region51: #{generator_conv_forward.13} parent=35 // pred_fallthru
              _
          $region36: #{generator_conv_forward.13} parent=31 // pred_fallthru
            _
          %245 = vnop
        $region32: #{generator_conv_forward.13} parent=27 // pred_fallthru
          _
      $region28: #{generator_conv_forward.13} parent=5 // pred_fallthru
        _
      %p246 = scmp.le.s32.totalorder 1, %s10
      %p247 = scmp.lt.s32.totalorder %s10, 3
      %p248 = pnand %p246, %p247
      %p249 = pneg %p248
      // Predicated region
      $region52: #{generator_conv_forward.13} parent=5 // pred_check
        _
      $region53: #{generator_conv_forward.13} parent=5 // pred_check_branch
        %251 = sbr.rel (%p248) target = $region55
      $region54: #{generator_conv_forward.13} parent=5 // pred_region
        %s252 = ssub.s32 %s10, 1
        %s253 = sand.u32 %s44, 1
        %s254 = sand.u32 %s44, 1
        %s255 = smul.addr %s254, 272
        %s256 = scalar_lea.vmem [#allocation2], %s255
        // Predicated region
        $region56: #{generator_conv_forward.13} parent=54 // pred_check
          %p257 = pneg %p57
        $region57: #{generator_conv_forward.13} parent=54 // pred_check_branch
          %259 = sbr.rel (%p257) target = $region59
        $region58: #{generator_conv_forward.13} parent=54 // pred_region
          _
        $region59: #{generator_conv_forward.13} parent=54 // pred_fallthru
          _
        %p260 = pneg %p31
        %p261 = pneg %p28
        %s262 = sand.u32 %s44, 1
        %s263 = sand.u32 %s44, 1
        %s264 = smul.addr %s263, 272
        %s265 = scalar_lea.vmem [#allocation2], %s264
        %p266 = pneg %p57
        %p267 = pneg %p54
        %p268 = pneg %p78
        %p269 = pneg %p75
        %p270 = pneg %p99
        %p271 = pneg %p96
        %p272 = pneg %p125
        %p273 = pneg %p122
        %s274 = sand.u32 %s112, 1
        %s275 = sand.u32 %s112, 1
        %s276 = smul.addr %s275, 544
        %s277 = scalar_lea.vmem [#allocation3], %s276
        %s278 = smul.u32 34, %s15
        %s279 = smul.u32 34, %s15
        %v281 = vld [vmem:[%s0] sm:$0xf]
        %v282 = vld [vmem:[%s0 + $0x4] sm:$0xf]
        %v283 = vld [vmem:[%s256] sm:$0xff]
        %v284 = vld [vmem:[%s256 + $0x8] sm:$0xff]
        %v285 = vld [vmem:[%s256 + $0x10] sm:$0xff]
        %v286 = vld [vmem:[%s256 + $0x18] sm:$0xff]
        %v287 = vld [vmem:[%s256 + $0x20] sm:$0xff]
        %v288 = vld [vmem:[%s256 + $0x28] sm:$0xff]
        %v289 = vld [vmem:[%s256 + $0x30] sm:$0xff]
        %v290 = vld [vmem:[%s256 + $0x38] sm:$0xff]
        %v291 = vld [vmem:[%s256 + $0x40] sm:$0xff]
        %v292 = vld [vmem:[%s256 + $0x48] sm:$0xff]
        %v293 = vld [vmem:[%s256 + $0x50] sm:$0xff]
        %v294 = vld [vmem:[%s256 + $0x58] sm:$0xff]
        %v295 = vld [vmem:[%s256 + $0x60] sm:$0xff]
        %v296 = vld [vmem:[%s256 + $0x68] sm:$0xff]
        %v297 = vld [vmem:[%s256 + $0x70] sm:$0xff]
        %v298 = vld [vmem:[%s256 + $0x78] sm:$0xff]
        %v299 = vld [vmem:[%s256 + $0x80] sm:$0xff]
        %v300 = vld [vmem:[%s256 + $0x88] sm:$0xff]
        %v301 = vld [vmem:[%s256 + $0x90] sm:$0xff]
        %v302 = vld [vmem:[%s256 + $0x98] sm:$0xff]
        %v303 = vld [vmem:[%s256 + $0xa0] sm:$0xff]
        %v304 = vld [vmem:[%s256 + $0xa8] sm:$0xff]
        %v305 = vld [vmem:[%s256 + $0xb0] sm:$0xff]
        %v306 = vld [vmem:[%s256 + $0xb8] sm:$0xff]
        %v307 = vld [vmem:[%s256 + $0xc0] sm:$0xff]
        %v308 = vld [vmem:[%s256 + $0xc8] sm:$0xff]
        %v309 = vld [vmem:[%s256 + $0xd0] sm:$0xff]
        %v310 = vld [vmem:[%s256 + $0xd8] sm:$0xff]
        %v311 = vld [vmem:[%s256 + $0xe0] sm:$0xff]
        %v312 = vld [vmem:[%s256 + $0xe8] sm:$0xff]
        %v313 = vld [vmem:[%s256 + $0xf0] sm:$0xff]
        %v314 = vld [vmem:[%s256 + $0xf8] sm:$0xff]
        %v315 = vld [vmem:[%s256 + $0x100] sm:$0xff]
        %v316 = vld [vmem:[%s256 + $0x108] sm:$0xff]
        %v319 = vunpack.c.l.b16 %v281
        %v320 = vunpack.c.l.b16 %v282
        %v321 = vpack.c.b16 %v320, %v319
        %v356 = vunpack.c.l.b16 %v283
        %v357 = vunpack.c.h.b16 %v283
        %v358 = vunpack.c.l.b16 %v284
        %v359 = vunpack.c.h.b16 %v284
        %v360 = vunpack.c.l.b16 %v285
        %v361 = vunpack.c.h.b16 %v285
        %v362 = vunpack.c.l.b16 %v286
        %v363 = vunpack.c.h.b16 %v286
        %v364 = vunpack.c.l.b16 %v287
        %v365 = vunpack.c.h.b16 %v287
        %v366 = vunpack.c.l.b16 %v288
        %v367 = vunpack.c.h.b16 %v288
        %v368 = vunpack.c.l.b16 %v289
        %v369 = vunpack.c.h.b16 %v289
        %v370 = vunpack.c.l.b16 %v290
        %v371 = vunpack.c.h.b16 %v290
        %v372 = vunpack.c.l.b16 %v291
        %v373 = vunpack.c.h.b16 %v291
        %v374 = vunpack.c.l.b16 %v292
        %v375 = vunpack.c.h.b16 %v292
        %v376 = vunpack.c.l.b16 %v293
        %v377 = vunpack.c.h.b16 %v293
        %v378 = vunpack.c.l.b16 %v294
        %v379 = vunpack.c.h.b16 %v294
        %v380 = vunpack.c.l.b16 %v295
        %v381 = vunpack.c.h.b16 %v295
        %v382 = vunpack.c.l.b16 %v296
        %v383 = vunpack.c.h.b16 %v296
        %v384 = vunpack.c.l.b16 %v297
        %v385 = vunpack.c.h.b16 %v297
        %v386 = vunpack.c.l.b16 %v298
        %v387 = vunpack.c.h.b16 %v298
        %v388 = vunpack.c.l.b16 %v299
        %v389 = vunpack.c.h.b16 %v299
        %v390 = vunpack.c.l.b16 %v300
        %v391 = vunpack.c.h.b16 %v300
        %v392 = vunpack.c.l.b16 %v301
        %v393 = vunpack.c.h.b16 %v301
        %v394 = vunpack.c.l.b16 %v302
        %v395 = vunpack.c.h.b16 %v302
        %v396 = vunpack.c.l.b16 %v303
        %v397 = vunpack.c.h.b16 %v303
        %v398 = vunpack.c.l.b16 %v304
        %v399 = vunpack.c.h.b16 %v304
        %v400 = vunpack.c.l.b16 %v305
        %v401 = vunpack.c.h.b16 %v305
        %v402 = vunpack.c.l.b16 %v306
        %v403 = vunpack.c.h.b16 %v306
        %v404 = vunpack.c.l.b16 %v307
        %v405 = vunpack.c.h.b16 %v307
        %v406 = vunpack.c.l.b16 %v308
        %v407 = vunpack.c.h.b16 %v308
        %v408 = vunpack.c.l.b16 %v309
        %v409 = vunpack.c.h.b16 %v309
        %v410 = vunpack.c.l.b16 %v310
        %v411 = vunpack.c.h.b16 %v310
        %v412 = vunpack.c.l.b16 %v311
        %v413 = vunpack.c.h.b16 %v311
        %v414 = vunpack.c.l.b16 %v312
        %v415 = vunpack.c.h.b16 %v312
        %v416 = vunpack.c.l.b16 %v313
        %v417 = vunpack.c.h.b16 %v313
        %v418 = vunpack.c.l.b16 %v314
        %v419 = vunpack.c.h.b16 %v314
        %v420 = vunpack.c.l.b16 %v315
        %v421 = vunpack.c.h.b16 %v315
        %v422 = vunpack.c.l.b16 %v316
        %v423 = vunpack.c.h.b16 %v316
        %v424 = vpack.c.b16 %v390, %v356
        %v425 = vpack.c.b16 %v391, %v357
        %v426 = vpack.c.b16 %v392, %v358
        %v427 = vpack.c.b16 %v393, %v359
        %v428 = vpack.c.b16 %v394, %v360
        %v429 = vpack.c.b16 %v395, %v361
        %v430 = vpack.c.b16 %v396, %v362
        %v431 = vpack.c.b16 %v397, %v363
        %v432 = vpack.c.b16 %v398, %v364
        %v433 = vpack.c.b16 %v399, %v365
        %v434 = vpack.c.b16 %v400, %v366
        %v435 = vpack.c.b16 %v401, %v367
        %v436 = vpack.c.b16 %v402, %v368
        %v437 = vpack.c.b16 %v403, %v369
        %v438 = vpack.c.b16 %v404, %v370
        %v439 = vpack.c.b16 %v405, %v371
        %v440 = vpack.c.b16 %v406, %v372
        %v441 = vpack.c.b16 %v407, %v373
        %v442 = vpack.c.b16 %v408, %v374
        %v443 = vpack.c.b16 %v409, %v375
        %v444 = vpack.c.b16 %v410, %v376
        %v445 = vpack.c.b16 %v411, %v377
        %v446 = vpack.c.b16 %v412, %v378
        %v447 = vpack.c.b16 %v413, %v379
        %v448 = vpack.c.b16 %v414, %v380
        %v449 = vpack.c.b16 %v415, %v381
        %v450 = vpack.c.b16 %v416, %v382
        %v451 = vpack.c.b16 %v417, %v383
        %v452 = vpack.c.b16 %v418, %v384
        %v453 = vpack.c.b16 %v419, %v385
        %v454 = vpack.c.b16 %v420, %v386
        %v455 = vpack.c.b16 %v421, %v387
        %v456 = vpack.c.b16 %v422, %v388
        %v457 = vpack.c.b16 %v423, %v389
        %vm492 = vcmask 130048
        %v494 = vsel %vm492, %v321, 0
        %496 = vmatpush.bf16.msra.mxu0 0
        %497 = vmatpush.bf16.msra.mxu0 0
        %498 = vmatpush.bf16.msra.mxu0 0
        %499 = vmatpush.bf16.msra.mxu0 0
        %500 = vmatpush.bf16.msra.mxu0 0
        %501 = vmatpush.bf16.msra.mxu0 0
        %502 = vmatpush.bf16.msra.mxu0 0
        %503 = vmatpush.bf16.msra.mxu0 %v424
        %504 = vmatmul.bf16.gmra.mxu0 %v494
        %v505 = vpop.f32.mrf.mxu0
        %v506 = vadd.f32 0.0, %v505
        %v507 = vpop.f32.mrf.mxu0
        %v508 = vadd.f32 0.0, %v507
        %509 = vdwg.mxu0
        %510 = vmatpush.bf16.msra.mxu0 0
        %511 = vmatpush.bf16.msra.mxu0 0
        %512 = vmatpush.bf16.msra.mxu0 0
        %513 = vmatpush.bf16.msra.mxu0 0
        %514 = vmatpush.bf16.msra.mxu0 0
        %515 = vmatpush.bf16.msra.mxu0 0
        %516 = vmatpush.bf16.msra.mxu0 0
        %517 = vmatpush.bf16.msra.mxu0 %v425
        %518 = vmatmul.bf16.gmra.mxu0 %v494
        %v519 = vpop.f32.mrf.mxu0
        %v520 = vadd.f32 0.0, %v519
        %v521 = vpop.f32.mrf.mxu0
        %v522 = vadd.f32 0.0, %v521
        %523 = vdwg.mxu0
        %524 = vmatpush.bf16.msra.mxu0 0
        %525 = vmatpush.bf16.msra.mxu0 0
        %526 = vmatpush.bf16.msra.mxu0 0
        %527 = vmatpush.bf16.msra.mxu0 0
        %528 = vmatpush.bf16.msra.mxu0 0
        %529 = vmatpush.bf16.msra.mxu0 0
        %530 = vmatpush.bf16.msra.mxu0 0
        %531 = vmatpush.bf16.msra.mxu0 %v426
        %532 = vmatmul.bf16.gmra.mxu0 %v494
        %v533 = vpop.f32.mrf.mxu0
        %v534 = vadd.f32 0.0, %v533
        %v535 = vpop.f32.mrf.mxu0
        %v536 = vadd.f32 0.0, %v535
        %537 = vdwg.mxu0
        %538 = vmatpush.bf16.msra.mxu0 0
        %539 = vmatpush.bf16.msra.mxu0 0
        %540 = vmatpush.bf16.msra.mxu0 0
        %541 = vmatpush.bf16.msra.mxu0 0
        %542 = vmatpush.bf16.msra.mxu0 0
        %543 = vmatpush.bf16.msra.mxu0 0
        %544 = vmatpush.bf16.msra.mxu0 0
        %545 = vmatpush.bf16.msra.mxu0 %v427
        %546 = vmatmul.bf16.gmra.mxu0 %v494
        %v547 = vpop.f32.mrf.mxu0
        %v548 = vadd.f32 0.0, %v547
        %v549 = vpop.f32.mrf.mxu0
        %v550 = vadd.f32 0.0, %v549
        %551 = vdwg.mxu0
        %552 = vmatpush.bf16.msra.mxu0 0
        %553 = vmatpush.bf16.msra.mxu0 0
        %554 = vmatpush.bf16.msra.mxu0 0
        %555 = vmatpush.bf16.msra.mxu0 0
        %556 = vmatpush.bf16.msra.mxu0 0
        %557 = vmatpush.bf16.msra.mxu0 0
        %558 = vmatpush.bf16.msra.mxu0 0
        %559 = vmatpush.bf16.msra.mxu0 %v428
        %560 = vmatmul.bf16.gmra.mxu0 %v494
        %v561 = vpop.f32.mrf.mxu0
        %v562 = vadd.f32 0.0, %v561
        %v563 = vpop.f32.mrf.mxu0
        %v564 = vadd.f32 0.0, %v563
        %565 = vdwg.mxu0
        %566 = vmatpush.bf16.msra.mxu0 0
        %567 = vmatpush.bf16.msra.mxu0 0
        %568 = vmatpush.bf16.msra.mxu0 0
        %569 = vmatpush.bf16.msra.mxu0 0
        %570 = vmatpush.bf16.msra.mxu0 0
        %571 = vmatpush.bf16.msra.mxu0 0
        %572 = vmatpush.bf16.msra.mxu0 0
        %573 = vmatpush.bf16.msra.mxu0 %v429
        %574 = vmatmul.bf16.gmra.mxu0 %v494
        %v575 = vpop.f32.mrf.mxu0
        %v576 = vadd.f32 0.0, %v575
        %v577 = vpop.f32.mrf.mxu0
        %v578 = vadd.f32 0.0, %v577
        %579 = vdwg.mxu0
        %580 = vmatpush.bf16.msra.mxu0 0
        %581 = vmatpush.bf16.msra.mxu0 0
        %582 = vmatpush.bf16.msra.mxu0 0
        %583 = vmatpush.bf16.msra.mxu0 0
        %584 = vmatpush.bf16.msra.mxu0 0
        %585 = vmatpush.bf16.msra.mxu0 0
        %586 = vmatpush.bf16.msra.mxu0 0
        %587 = vmatpush.bf16.msra.mxu0 %v430
        %588 = vmatmul.bf16.gmra.mxu0 %v494
        %v589 = vpop.f32.mrf.mxu0
        %v590 = vadd.f32 0.0, %v589
        %v591 = vpop.f32.mrf.mxu0
        %v592 = vadd.f32 0.0, %v591
        %593 = vdwg.mxu0
        %594 = vmatpush.bf16.msra.mxu0 0
        %595 = vmatpush.bf16.msra.mxu0 0
        %596 = vmatpush.bf16.msra.mxu0 0
        %597 = vmatpush.bf16.msra.mxu0 0
        %598 = vmatpush.bf16.msra.mxu0 0
        %599 = vmatpush.bf16.msra.mxu0 0
        %600 = vmatpush.bf16.msra.mxu0 0
        %601 = vmatpush.bf16.msra.mxu0 %v431
        %602 = vmatmul.bf16.gmra.mxu0 %v494
        %v603 = vpop.f32.mrf.mxu0
        %v604 = vadd.f32 0.0, %v603
        %v605 = vpop.f32.mrf.mxu0
        %v606 = vadd.f32 0.0, %v605
        %607 = vdwg.mxu0
        %608 = vmatpush.bf16.msra.mxu0 0
        %609 = vmatpush.bf16.msra.mxu0 0
        %610 = vmatpush.bf16.msra.mxu0 0
        %611 = vmatpush.bf16.msra.mxu0 0
        %612 = vmatpush.bf16.msra.mxu0 0
        %613 = vmatpush.bf16.msra.mxu0 0
        %614 = vmatpush.bf16.msra.mxu0 0
        %615 = vmatpush.bf16.msra.mxu0 %v432
        %616 = vmatmul.bf16.gmra.mxu0 %v494
        %v617 = vpop.f32.mrf.mxu0
        %v618 = vadd.f32 0.0, %v617
        %v619 = vpop.f32.mrf.mxu0
        %v620 = vadd.f32 0.0, %v619
        %621 = vdwg.mxu0
        %622 = vmatpush.bf16.msra.mxu0 0
        %623 = vmatpush.bf16.msra.mxu0 0
        %624 = vmatpush.bf16.msra.mxu0 0
        %625 = vmatpush.bf16.msra.mxu0 0
        %626 = vmatpush.bf16.msra.mxu0 0
        %627 = vmatpush.bf16.msra.mxu0 0
        %628 = vmatpush.bf16.msra.mxu0 0
        %629 = vmatpush.bf16.msra.mxu0 %v433
        %630 = vmatmul.bf16.gmra.mxu0 %v494
        %v631 = vpop.f32.mrf.mxu0
        %v632 = vadd.f32 0.0, %v631
        %v633 = vpop.f32.mrf.mxu0
        %v634 = vadd.f32 0.0, %v633
        %635 = vdwg.mxu0
        %636 = vmatpush.bf16.msra.mxu0 0
        %637 = vmatpush.bf16.msra.mxu0 0
        %638 = vmatpush.bf16.msra.mxu0 0
        %639 = vmatpush.bf16.msra.mxu0 0
        %640 = vmatpush.bf16.msra.mxu0 0
        %641 = vmatpush.bf16.msra.mxu0 0
        %642 = vmatpush.bf16.msra.mxu0 0
        %643 = vmatpush.bf16.msra.mxu0 %v434
        %644 = vmatmul.bf16.gmra.mxu0 %v494
        %v645 = vpop.f32.mrf.mxu0
        %v646 = vadd.f32 0.0, %v645
        %v647 = vpop.f32.mrf.mxu0
        %v648 = vadd.f32 0.0, %v647
        %649 = vdwg.mxu0
        %650 = vmatpush.bf16.msra.mxu0 0
        %651 = vmatpush.bf16.msra.mxu0 0
        %652 = vmatpush.bf16.msra.mxu0 0
        %653 = vmatpush.bf16.msra.mxu0 0
        %654 = vmatpush.bf16.msra.mxu0 0
        %655 = vmatpush.bf16.msra.mxu0 0
        %656 = vmatpush.bf16.msra.mxu0 0
        %657 = vmatpush.bf16.msra.mxu0 %v435
        %658 = vmatmul.bf16.gmra.mxu0 %v494
        %v659 = vpop.f32.mrf.mxu0
        %v660 = vadd.f32 0.0, %v659
        %v661 = vpop.f32.mrf.mxu0
        %v662 = vadd.f32 0.0, %v661
        %663 = vdwg.mxu0
        %664 = vmatpush.bf16.msra.mxu0 0
        %665 = vmatpush.bf16.msra.mxu0 0
        %666 = vmatpush.bf16.msra.mxu0 0
        %667 = vmatpush.bf16.msra.mxu0 0
        %668 = vmatpush.bf16.msra.mxu0 0
        %669 = vmatpush.bf16.msra.mxu0 0
        %670 = vmatpush.bf16.msra.mxu0 0
        %671 = vmatpush.bf16.msra.mxu0 %v436
        %672 = vmatmul.bf16.gmra.mxu0 %v494
        %v673 = vpop.f32.mrf.mxu0
        %v674 = vadd.f32 0.0, %v673
        %v675 = vpop.f32.mrf.mxu0
        %v676 = vadd.f32 0.0, %v675
        %677 = vdwg.mxu0
        %678 = vmatpush.bf16.msra.mxu0 0
        %679 = vmatpush.bf16.msra.mxu0 0
        %680 = vmatpush.bf16.msra.mxu0 0
        %681 = vmatpush.bf16.msra.mxu0 0
        %682 = vmatpush.bf16.msra.mxu0 0
        %683 = vmatpush.bf16.msra.mxu0 0
        %684 = vmatpush.bf16.msra.mxu0 0
        %685 = vmatpush.bf16.msra.mxu0 %v437
        %686 = vmatmul.bf16.gmra.mxu0 %v494
        %v687 = vpop.f32.mrf.mxu0
        %v688 = vadd.f32 0.0, %v687
        %v689 = vpop.f32.mrf.mxu0
        %v690 = vadd.f32 0.0, %v689
        %691 = vdwg.mxu0
        %692 = vmatpush.bf16.msra.mxu0 0
        %693 = vmatpush.bf16.msra.mxu0 0
        %694 = vmatpush.bf16.msra.mxu0 0
        %695 = vmatpush.bf16.msra.mxu0 0
        %696 = vmatpush.bf16.msra.mxu0 0
        %697 = vmatpush.bf16.msra.mxu0 0
        %698 = vmatpush.bf16.msra.mxu0 0
        %699 = vmatpush.bf16.msra.mxu0 %v438
        %700 = vmatmul.bf16.gmra.mxu0 %v494
        %v701 = vpop.f32.mrf.mxu0
        %v702 = vadd.f32 0.0, %v701
        %v703 = vpop.f32.mrf.mxu0
        %v704 = vadd.f32 0.0, %v703
        %705 = vdwg.mxu0
        %706 = vmatpush.bf16.msra.mxu0 0
        %707 = vmatpush.bf16.msra.mxu0 0
        %708 = vmatpush.bf16.msra.mxu0 0
        %709 = vmatpush.bf16.msra.mxu0 0
        %710 = vmatpush.bf16.msra.mxu0 0
        %711 = vmatpush.bf16.msra.mxu0 0
        %712 = vmatpush.bf16.msra.mxu0 0
        %713 = vmatpush.bf16.msra.mxu0 %v439
        %714 = vmatmul.bf16.gmra.mxu0 %v494
        %v715 = vpop.f32.mrf.mxu0
        %v716 = vadd.f32 0.0, %v715
        %v717 = vpop.f32.mrf.mxu0
        %v718 = vadd.f32 0.0, %v717
        %719 = vdwg.mxu0
        %720 = vmatpush.bf16.msra.mxu0 0
        %721 = vmatpush.bf16.msra.mxu0 0
        %722 = vmatpush.bf16.msra.mxu0 0
        %723 = vmatpush.bf16.msra.mxu0 0
        %724 = vmatpush.bf16.msra.mxu0 0
        %725 = vmatpush.bf16.msra.mxu0 0
        %726 = vmatpush.bf16.msra.mxu0 0
        %727 = vmatpush.bf16.msra.mxu0 %v440
        %728 = vmatmul.bf16.gmra.mxu0 %v494
        %v729 = vpop.f32.mrf.mxu0
        %v730 = vadd.f32 0.0, %v729
        %v731 = vpop.f32.mrf.mxu0
        %v732 = vadd.f32 0.0, %v731
        %733 = vdwg.mxu0
        %734 = vmatpush.bf16.msra.mxu0 0
        %735 = vmatpush.bf16.msra.mxu0 0
        %736 = vmatpush.bf16.msra.mxu0 0
        %737 = vmatpush.bf16.msra.mxu0 0
        %738 = vmatpush.bf16.msra.mxu0 0
        %739 = vmatpush.bf16.msra.mxu0 0
        %740 = vmatpush.bf16.msra.mxu0 0
        %741 = vmatpush.bf16.msra.mxu0 %v441
        %742 = vmatmul.bf16.gmra.mxu0 %v494
        %v743 = vpop.f32.mrf.mxu0
        %v744 = vadd.f32 0.0, %v743
        %v745 = vpop.f32.mrf.mxu0
        %v746 = vadd.f32 0.0, %v745
        %747 = vdwg.mxu0
        %748 = vmatpush.bf16.msra.mxu0 0
        %749 = vmatpush.bf16.msra.mxu0 0
        %750 = vmatpush.bf16.msra.mxu0 0
        %751 = vmatpush.bf16.msra.mxu0 0
        %752 = vmatpush.bf16.msra.mxu0 0
        %753 = vmatpush.bf16.msra.mxu0 0
        %754 = vmatpush.bf16.msra.mxu0 0
        %755 = vmatpush.bf16.msra.mxu0 %v442
        %756 = vmatmul.bf16.gmra.mxu0 %v494
        %v757 = vpop.f32.mrf.mxu0
        %v758 = vadd.f32 0.0, %v757
        %v759 = vpop.f32.mrf.mxu0
        %v760 = vadd.f32 0.0, %v759
        %761 = vdwg.mxu0
        %762 = vmatpush.bf16.msra.mxu0 0
        %763 = vmatpush.bf16.msra.mxu0 0
        %764 = vmatpush.bf16.msra.mxu0 0
        %765 = vmatpush.bf16.msra.mxu0 0
        %766 = vmatpush.bf16.msra.mxu0 0
        %767 = vmatpush.bf16.msra.mxu0 0
        %768 = vmatpush.bf16.msra.mxu0 0
        %769 = vmatpush.bf16.msra.mxu0 %v443
        %770 = vmatmul.bf16.gmra.mxu0 %v494
        %v771 = vpop.f32.mrf.mxu0
        %v772 = vadd.f32 0.0, %v771
        %v773 = vpop.f32.mrf.mxu0
        %v774 = vadd.f32 0.0, %v773
        %775 = vdwg.mxu0
        %776 = vmatpush.bf16.msra.mxu0 0
        %777 = vmatpush.bf16.msra.mxu0 0
        %778 = vmatpush.bf16.msra.mxu0 0
        %779 = vmatpush.bf16.msra.mxu0 0
        %780 = vmatpush.bf16.msra.mxu0 0
        %781 = vmatpush.bf16.msra.mxu0 0
        %782 = vmatpush.bf16.msra.mxu0 0
        %783 = vmatpush.bf16.msra.mxu0 %v444
        %784 = vmatmul.bf16.gmra.mxu0 %v494
        %v785 = vpop.f32.mrf.mxu0
        %v786 = vadd.f32 0.0, %v785
        %v787 = vpop.f32.mrf.mxu0
        %v788 = vadd.f32 0.0, %v787
        %789 = vdwg.mxu0
        %790 = vmatpush.bf16.msra.mxu0 0
        %791 = vmatpush.bf16.msra.mxu0 0
        %792 = vmatpush.bf16.msra.mxu0 0
        %793 = vmatpush.bf16.msra.mxu0 0
        %794 = vmatpush.bf16.msra.mxu0 0
        %795 = vmatpush.bf16.msra.mxu0 0
        %796 = vmatpush.bf16.msra.mxu0 0
        %797 = vmatpush.bf16.msra.mxu0 %v445
        %798 = vmatmul.bf16.gmra.mxu0 %v494
        %v799 = vpop.f32.mrf.mxu0
        %v800 = vadd.f32 0.0, %v799
        %v801 = vpop.f32.mrf.mxu0
        %v802 = vadd.f32 0.0, %v801
        %803 = vdwg.mxu0
        %804 = vmatpush.bf16.msra.mxu0 0
        %805 = vmatpush.bf16.msra.mxu0 0
        %806 = vmatpush.bf16.msra.mxu0 0
        %807 = vmatpush.bf16.msra.mxu0 0
        %808 = vmatpush.bf16.msra.mxu0 0
        %809 = vmatpush.bf16.msra.mxu0 0
        %810 = vmatpush.bf16.msra.mxu0 0
        %811 = vmatpush.bf16.msra.mxu0 %v446
        %812 = vmatmul.bf16.gmra.mxu0 %v494
        %v813 = vpop.f32.mrf.mxu0
        %v814 = vadd.f32 0.0, %v813
        %v815 = vpop.f32.mrf.mxu0
        %v816 = vadd.f32 0.0, %v815
        %817 = vdwg.mxu0
        %818 = vmatpush.bf16.msra.mxu0 0
        %819 = vmatpush.bf16.msra.mxu0 0
        %820 = vmatpush.bf16.msra.mxu0 0
        %821 = vmatpush.bf16.msra.mxu0 0
        %822 = vmatpush.bf16.msra.mxu0 0
        %823 = vmatpush.bf16.msra.mxu0 0
        %824 = vmatpush.bf16.msra.mxu0 0
        %825 = vmatpush.bf16.msra.mxu0 %v447
        %826 = vmatmul.bf16.gmra.mxu0 %v494
        %v827 = vpop.f32.mrf.mxu0
        %v828 = vadd.f32 0.0, %v827
        %v829 = vpop.f32.mrf.mxu0
        %v830 = vadd.f32 0.0, %v829
        %831 = vdwg.mxu0
        %832 = vmatpush.bf16.msra.mxu0 0
        %833 = vmatpush.bf16.msra.mxu0 0
        %834 = vmatpush.bf16.msra.mxu0 0
        %835 = vmatpush.bf16.msra.mxu0 0
        %836 = vmatpush.bf16.msra.mxu0 0
        %837 = vmatpush.bf16.msra.mxu0 0
        %838 = vmatpush.bf16.msra.mxu0 0
        %839 = vmatpush.bf16.msra.mxu0 %v448
        %840 = vmatmul.bf16.gmra.mxu0 %v494
        %v841 = vpop.f32.mrf.mxu0
        %v842 = vadd.f32 0.0, %v841
        %v843 = vpop.f32.mrf.mxu0
        %v844 = vadd.f32 0.0, %v843
        %845 = vdwg.mxu0
        %846 = vmatpush.bf16.msra.mxu0 0
        %847 = vmatpush.bf16.msra.mxu0 0
        %848 = vmatpush.bf16.msra.mxu0 0
        %849 = vmatpush.bf16.msra.mxu0 0
        %850 = vmatpush.bf16.msra.mxu0 0
        %851 = vmatpush.bf16.msra.mxu0 0
        %852 = vmatpush.bf16.msra.mxu0 0
        %853 = vmatpush.bf16.msra.mxu0 %v449
        %854 = vmatmul.bf16.gmra.mxu0 %v494
        %v855 = vpop.f32.mrf.mxu0
        %v856 = vadd.f32 0.0, %v855
        %v857 = vpop.f32.mrf.mxu0
        %v858 = vadd.f32 0.0, %v857
        %859 = vdwg.mxu0
        %860 = vmatpush.bf16.msra.mxu0 0
        %861 = vmatpush.bf16.msra.mxu0 0
        %862 = vmatpush.bf16.msra.mxu0 0
        %863 = vmatpush.bf16.msra.mxu0 0
        %864 = vmatpush.bf16.msra.mxu0 0
        %865 = vmatpush.bf16.msra.mxu0 0
        %866 = vmatpush.bf16.msra.mxu0 0
        %867 = vmatpush.bf16.msra.mxu0 %v450
        %868 = vmatmul.bf16.gmra.mxu0 %v494
        %v869 = vpop.f32.mrf.mxu0
        %v870 = vadd.f32 0.0, %v869
        %v871 = vpop.f32.mrf.mxu0
        %v872 = vadd.f32 0.0, %v871
        %873 = vdwg.mxu0
        %874 = vmatpush.bf16.msra.mxu0 0
        %875 = vmatpush.bf16.msra.mxu0 0
        %876 = vmatpush.bf16.msra.mxu0 0
        %877 = vmatpush.bf16.msra.mxu0 0
        %878 = vmatpush.bf16.msra.mxu0 0
        %879 = vmatpush.bf16.msra.mxu0 0
        %880 = vmatpush.bf16.msra.mxu0 0
        %881 = vmatpush.bf16.msra.mxu0 %v451
        %882 = vmatmul.bf16.gmra.mxu0 %v494
        %v883 = vpop.f32.mrf.mxu0
        %v884 = vadd.f32 0.0, %v883
        %v885 = vpop.f32.mrf.mxu0
        %v886 = vadd.f32 0.0, %v885
        %887 = vdwg.mxu0
        %888 = vmatpush.bf16.msra.mxu0 0
        %889 = vmatpush.bf16.msra.mxu0 0
        %890 = vmatpush.bf16.msra.mxu0 0
        %891 = vmatpush.bf16.msra.mxu0 0
        %892 = vmatpush.bf16.msra.mxu0 0
        %893 = vmatpush.bf16.msra.mxu0 0
        %894 = vmatpush.bf16.msra.mxu0 0
        %895 = vmatpush.bf16.msra.mxu0 %v452
        %896 = vmatmul.bf16.gmra.mxu0 %v494
        %v897 = vpop.f32.mrf.mxu0
        %v898 = vadd.f32 0.0, %v897
        %v899 = vpop.f32.mrf.mxu0
        %v900 = vadd.f32 0.0, %v899
        %901 = vdwg.mxu0
        %902 = vmatpush.bf16.msra.mxu0 0
        %903 = vmatpush.bf16.msra.mxu0 0
        %904 = vmatpush.bf16.msra.mxu0 0
        %905 = vmatpush.bf16.msra.mxu0 0
        %906 = vmatpush.bf16.msra.mxu0 0
        %907 = vmatpush.bf16.msra.mxu0 0
        %908 = vmatpush.bf16.msra.mxu0 0
        %909 = vmatpush.bf16.msra.mxu0 %v453
        %910 = vmatmul.bf16.gmra.mxu0 %v494
        %v911 = vpop.f32.mrf.mxu0
        %v912 = vadd.f32 0.0, %v911
        %v913 = vpop.f32.mrf.mxu0
        %v914 = vadd.f32 0.0, %v913
        %915 = vdwg.mxu0
        %916 = vmatpush.bf16.msra.mxu0 0
        %917 = vmatpush.bf16.msra.mxu0 0
        %918 = vmatpush.bf16.msra.mxu0 0
        %919 = vmatpush.bf16.msra.mxu0 0
        %920 = vmatpush.bf16.msra.mxu0 0
        %921 = vmatpush.bf16.msra.mxu0 0
        %922 = vmatpush.bf16.msra.mxu0 0
        %923 = vmatpush.bf16.msra.mxu0 %v454
        %924 = vmatmul.bf16.gmra.mxu0 %v494
        %v925 = vpop.f32.mrf.mxu0
        %v926 = vadd.f32 0.0, %v925
        %v927 = vpop.f32.mrf.mxu0
        %v928 = vadd.f32 0.0, %v927
        %929 = vdwg.mxu0
        %930 = vmatpush.bf16.msra.mxu0 0
        %931 = vmatpush.bf16.msra.mxu0 0
        %932 = vmatpush.bf16.msra.mxu0 0
        %933 = vmatpush.bf16.msra.mxu0 0
        %934 = vmatpush.bf16.msra.mxu0 0
        %935 = vmatpush.bf16.msra.mxu0 0
        %936 = vmatpush.bf16.msra.mxu0 0
        %937 = vmatpush.bf16.msra.mxu0 %v455
        %938 = vmatmul.bf16.gmra.mxu0 %v494
        %v939 = vpop.f32.mrf.mxu0
        %v940 = vadd.f32 0.0, %v939
        %v941 = vpop.f32.mrf.mxu0
        %v942 = vadd.f32 0.0, %v941
        %943 = vdwg.mxu0
        %944 = vmatpush.bf16.msra.mxu0 0
        %945 = vmatpush.bf16.msra.mxu0 0
        %946 = vmatpush.bf16.msra.mxu0 0
        %947 = vmatpush.bf16.msra.mxu0 0
        %948 = vmatpush.bf16.msra.mxu0 0
        %949 = vmatpush.bf16.msra.mxu0 0
        %950 = vmatpush.bf16.msra.mxu0 0
        %951 = vmatpush.bf16.msra.mxu0 %v456
        %952 = vmatmul.bf16.gmra.mxu0 %v494
        %v953 = vpop.f32.mrf.mxu0
        %v954 = vadd.f32 0.0, %v953
        %v955 = vpop.f32.mrf.mxu0
        %v956 = vadd.f32 0.0, %v955
        %957 = vdwg.mxu0
        %958 = vmatpush.bf16.msra.mxu0 0
        %959 = vmatpush.bf16.msra.mxu0 0
        %960 = vmatpush.bf16.msra.mxu0 0
        %961 = vmatpush.bf16.msra.mxu0 0
        %962 = vmatpush.bf16.msra.mxu0 0
        %963 = vmatpush.bf16.msra.mxu0 0
        %964 = vmatpush.bf16.msra.mxu0 0
        %965 = vmatpush.bf16.msra.mxu0 %v457
        %966 = vmatmul.bf16.gmra.mxu0 %v494
        %v967 = vpop.f32.mrf.mxu0
        %v968 = vadd.f32 0.0, %v967
        %v969 = vpop.f32.mrf.mxu0
        %v970 = vadd.f32 0.0, %v969
        %971 = vdwg.mxu0
        %v972 = vld [vmem:[%s2] sm:$0xff]
        %v973 = vld [vmem:[%s2 + $0x8] sm:$0xff]
        %975 = vset.pattern.permute.xlu0 0
        %976 = vperm.xlu0 %975, %v972
        %v977 = vpop.permute.xlu0 %976
        %980 = vset.pattern.permute.xlu0 0
        %981 = vperm.xlu0 %980, %v973
        %v982 = vpop.permute.xlu0 %981
        %v984 = vmul.f32 %v506, %v977
        %v985 = vmul.f32 %v520, %v977
        %v986 = vmul.f32 %v534, %v977
        %v987 = vmul.f32 %v548, %v977
        %v988 = vmul.f32 %v562, %v977
        %v989 = vmul.f32 %v576, %v977
        %v990 = vmul.f32 %v590, %v977
        %v991 = vmul.f32 %v604, %v977
        %v992 = vmul.f32 %v618, %v977
        %v993 = vmul.f32 %v632, %v977
        %v994 = vmul.f32 %v646, %v977
        %v995 = vmul.f32 %v660, %v977
        %v996 = vmul.f32 %v674, %v977
        %v997 = vmul.f32 %v688, %v977
        %v998 = vmul.f32 %v702, %v977
        %v999 = vmul.f32 %v716, %v977
        %v1000 = vmul.f32 %v730, %v977
        %v1001 = vmul.f32 %v744, %v977
        %v1002 = vmul.f32 %v758, %v977
        %v1003 = vmul.f32 %v772, %v977
        %v1004 = vmul.f32 %v786, %v977
        %v1005 = vmul.f32 %v800, %v977
        %v1006 = vmul.f32 %v814, %v977
        %v1007 = vmul.f32 %v828, %v977
        %v1008 = vmul.f32 %v842, %v977
        %v1009 = vmul.f32 %v856, %v977
        %v1010 = vmul.f32 %v870, %v977
        %v1011 = vmul.f32 %v884, %v977
        %v1012 = vmul.f32 %v898, %v977
        %v1013 = vmul.f32 %v912, %v977
        %v1014 = vmul.f32 %v926, %v977
        %v1015 = vmul.f32 %v940, %v977
        %v1016 = vmul.f32 %v954, %v977
        %v1017 = vmul.f32 %v968, %v977
        %v1018 = vmul.f32 %v508, %v982
        %v1019 = vmul.f32 %v522, %v982
        %v1020 = vmul.f32 %v536, %v982
        %v1021 = vmul.f32 %v550, %v982
        %v1022 = vmul.f32 %v564, %v982
        %v1023 = vmul.f32 %v578, %v982
        %v1024 = vmul.f32 %v592, %v982
        %v1025 = vmul.f32 %v606, %v982
        %v1026 = vmul.f32 %v620, %v982
        %v1027 = vmul.f32 %v634, %v982
        %v1028 = vmul.f32 %v648, %v982
        %v1029 = vmul.f32 %v662, %v982
        %v1030 = vmul.f32 %v676, %v982
        %v1031 = vmul.f32 %v690, %v982
        %v1032 = vmul.f32 %v704, %v982
        %v1033 = vmul.f32 %v718, %v982
        %v1034 = vmul.f32 %v732, %v982
        %v1035 = vmul.f32 %v746, %v982
        %v1036 = vmul.f32 %v760, %v982
        %v1037 = vmul.f32 %v774, %v982
        %v1038 = vmul.f32 %v788, %v982
        %v1039 = vmul.f32 %v802, %v982
        %v1040 = vmul.f32 %v816, %v982
        %v1041 = vmul.f32 %v830, %v982
        %v1042 = vmul.f32 %v844, %v982
        %v1043 = vmul.f32 %v858, %v982
        %v1044 = vmul.f32 %v872, %v982
        %v1045 = vmul.f32 %v886, %v982
        %v1046 = vmul.f32 %v900, %v982
        %v1047 = vmul.f32 %v914, %v982
        %v1048 = vmul.f32 %v928, %v982
        %v1049 = vmul.f32 %v942, %v982
        %v1050 = vmul.f32 %v956, %v982
        %v1051 = vmul.f32 %v970, %v982
        %v1052 = vld [vmem:[%s3] sm:$0xff]
        %v1053 = vld [vmem:[%s3 + $0x8] sm:$0xff]
        %1055 = vset.pattern.permute.xlu0 0
        %1056 = vperm.xlu0 %1055, %v1052
        %v1057 = vpop.permute.xlu0 %1056
        %1060 = vset.pattern.permute.xlu0 0
        %1061 = vperm.xlu0 %1060, %v1053
        %v1062 = vpop.permute.xlu0 %1061
        %v1064 = vadd.f32 %v984, %v1057
        %v1065 = vadd.f32 %v985, %v1057
        %v1066 = vadd.f32 %v986, %v1057
        %v1067 = vadd.f32 %v987, %v1057
        %v1068 = vadd.f32 %v988, %v1057
        %v1069 = vadd.f32 %v989, %v1057
        %v1070 = vadd.f32 %v990, %v1057
        %v1071 = vadd.f32 %v991, %v1057
        %v1072 = vadd.f32 %v992, %v1057
        %v1073 = vadd.f32 %v993, %v1057
        %v1074 = vadd.f32 %v994, %v1057
        %v1075 = vadd.f32 %v995, %v1057
        %v1076 = vadd.f32 %v996, %v1057
        %v1077 = vadd.f32 %v997, %v1057
        %v1078 = vadd.f32 %v998, %v1057
        %v1079 = vadd.f32 %v999, %v1057
        %v1080 = vadd.f32 %v1000, %v1057
        %v1081 = vadd.f32 %v1001, %v1057
        %v1082 = vadd.f32 %v1002, %v1057
        %v1083 = vadd.f32 %v1003, %v1057
        %v1084 = vadd.f32 %v1004, %v1057
        %v1085 = vadd.f32 %v1005, %v1057
        %v1086 = vadd.f32 %v1006, %v1057
        %v1087 = vadd.f32 %v1007, %v1057
        %v1088 = vadd.f32 %v1008, %v1057
        %v1089 = vadd.f32 %v1009, %v1057
        %v1090 = vadd.f32 %v1010, %v1057
        %v1091 = vadd.f32 %v1011, %v1057
        %v1092 = vadd.f32 %v1012, %v1057
        %v1093 = vadd.f32 %v1013, %v1057
        %v1094 = vadd.f32 %v1014, %v1057
        %v1095 = vadd.f32 %v1015, %v1057
        %v1096 = vadd.f32 %v1016, %v1057
        %v1097 = vadd.f32 %v1017, %v1057
        %v1098 = vadd.f32 %v1018, %v1062
        %v1099 = vadd.f32 %v1019, %v1062
        %v1100 = vadd.f32 %v1020, %v1062
        %v1101 = vadd.f32 %v1021, %v1062
        %v1102 = vadd.f32 %v1022, %v1062
        %v1103 = vadd.f32 %v1023, %v1062
        %v1104 = vadd.f32 %v1024, %v1062
        %v1105 = vadd.f32 %v1025, %v1062
        %v1106 = vadd.f32 %v1026, %v1062
        %v1107 = vadd.f32 %v1027, %v1062
        %v1108 = vadd.f32 %v1028, %v1062
        %v1109 = vadd.f32 %v1029, %v1062
        %v1110 = vadd.f32 %v1030, %v1062
        %v1111 = vadd.f32 %v1031, %v1062
        %v1112 = vadd.f32 %v1032, %v1062
        %v1113 = vadd.f32 %v1033, %v1062
        %v1114 = vadd.f32 %v1034, %v1062
        %v1115 = vadd.f32 %v1035, %v1062
        %v1116 = vadd.f32 %v1036, %v1062
        %v1117 = vadd.f32 %v1037, %v1062
        %v1118 = vadd.f32 %v1038, %v1062
        %v1119 = vadd.f32 %v1039, %v1062
        %v1120 = vadd.f32 %v1040, %v1062
        %v1121 = vadd.f32 %v1041, %v1062
        %v1122 = vadd.f32 %v1042, %v1062
        %v1123 = vadd.f32 %v1043, %v1062
        %v1124 = vadd.f32 %v1044, %v1062
        %v1125 = vadd.f32 %v1045, %v1062
        %v1126 = vadd.f32 %v1046, %v1062
        %v1127 = vadd.f32 %v1047, %v1062
        %v1128 = vadd.f32 %v1048, %v1062
        %v1129 = vadd.f32 %v1049, %v1062
        %v1130 = vadd.f32 %v1050, %v1062
        %v1131 = vadd.f32 %v1051, %v1062
        %v1132 = vtanh.pop %v1064
        %v1133 = vtanh.pop %v1065
        %v1134 = vtanh.pop %v1066
        %v1135 = vtanh.pop %v1067
        %v1136 = vtanh.pop %v1068
        %v1137 = vtanh.pop %v1069
        %v1138 = vtanh.pop %v1070
        %v1139 = vtanh.pop %v1071
        %v1140 = vtanh.pop %v1072
        %v1141 = vtanh.pop %v1073
        %v1142 = vtanh.pop %v1074
        %v1143 = vtanh.pop %v1075
        %v1144 = vtanh.pop %v1076
        %v1145 = vtanh.pop %v1077
        %v1146 = vtanh.pop %v1078
        %v1147 = vtanh.pop %v1079
        %v1148 = vtanh.pop %v1080
        %v1149 = vtanh.pop %v1081
        %v1150 = vtanh.pop %v1082
        %v1151 = vtanh.pop %v1083
        %v1152 = vtanh.pop %v1084
        %v1153 = vtanh.pop %v1085
        %v1154 = vtanh.pop %v1086
        %v1155 = vtanh.pop %v1087
        %v1156 = vtanh.pop %v1088
        %v1157 = vtanh.pop %v1089
        %v1158 = vtanh.pop %v1090
        %v1159 = vtanh.pop %v1091
        %v1160 = vtanh.pop %v1092
        %v1161 = vtanh.pop %v1093
        %v1162 = vtanh.pop %v1094
        %v1163 = vtanh.pop %v1095
        %v1164 = vtanh.pop %v1096
        %v1165 = vtanh.pop %v1097
        %v1166 = vtanh.pop %v1098
        %v1167 = vtanh.pop %v1099
        %v1168 = vtanh.pop %v1100
        %v1169 = vtanh.pop %v1101
        %v1170 = vtanh.pop %v1102
        %v1171 = vtanh.pop %v1103
        %v1172 = vtanh.pop %v1104
        %v1173 = vtanh.pop %v1105
        %v1174 = vtanh.pop %v1106
        %v1175 = vtanh.pop %v1107
        %v1176 = vtanh.pop %v1108
        %v1177 = vtanh.pop %v1109
        %v1178 = vtanh.pop %v1110
        %v1179 = vtanh.pop %v1111
        %v1180 = vtanh.pop %v1112
        %v1181 = vtanh.pop %v1113
        %v1182 = vtanh.pop %v1114
        %v1183 = vtanh.pop %v1115
        %v1184 = vtanh.pop %v1116
        %v1185 = vtanh.pop %v1117
        %v1186 = vtanh.pop %v1118
        %v1187 = vtanh.pop %v1119
        %v1188 = vtanh.pop %v1120
        %v1189 = vtanh.pop %v1121
        %v1190 = vtanh.pop %v1122
        %v1191 = vtanh.pop %v1123
        %v1192 = vtanh.pop %v1124
        %v1193 = vtanh.pop %v1125
        %v1194 = vtanh.pop %v1126
        %v1195 = vtanh.pop %v1127
        %v1196 = vtanh.pop %v1128
        %v1197 = vtanh.pop %v1129
        %v1198 = vtanh.pop %v1130
        %v1199 = vtanh.pop %v1131
        %1200 = vst [vmem:[%s277] sm:$0xff] %v1132
        %1201 = vst [vmem:[%s277 + $0x8] sm:$0xff] %v1133
        %1202 = vst [vmem:[%s277 + $0x10] sm:$0xff] %v1134
        %1203 = vst [vmem:[%s277 + $0x18] sm:$0xff] %v1135
        %1204 = vst [vmem:[%s277 + $0x20] sm:$0xff] %v1136
        %1205 = vst [vmem:[%s277 + $0x28] sm:$0xff] %v1137
        %1206 = vst [vmem:[%s277 + $0x30] sm:$0xff] %v1138
        %1207 = vst [vmem:[%s277 + $0x38] sm:$0xff] %v1139
        %1208 = vst [vmem:[%s277 + $0x40] sm:$0xff] %v1140
        %1209 = vst [vmem:[%s277 + $0x48] sm:$0xff] %v1141
        %1210 = vst [vmem:[%s277 + $0x50] sm:$0xff] %v1142
        %1211 = vst [vmem:[%s277 + $0x58] sm:$0xff] %v1143
        %1212 = vst [vmem:[%s277 + $0x60] sm:$0xff] %v1144
        %1213 = vst [vmem:[%s277 + $0x68] sm:$0xff] %v1145
        %1214 = vst [vmem:[%s277 + $0x70] sm:$0xff] %v1146
        %1215 = vst [vmem:[%s277 + $0x78] sm:$0xff] %v1147
        %1216 = vst [vmem:[%s277 + $0x80] sm:$0xff] %v1148
        %1217 = vst [vmem:[%s277 + $0x88] sm:$0xff] %v1149
        %1218 = vst [vmem:[%s277 + $0x90] sm:$0xff] %v1150
        %1219 = vst [vmem:[%s277 + $0x98] sm:$0xff] %v1151
        %1220 = vst [vmem:[%s277 + $0xa0] sm:$0xff] %v1152
        %1221 = vst [vmem:[%s277 + $0xa8] sm:$0xff] %v1153
        %1222 = vst [vmem:[%s277 + $0xb0] sm:$0xff] %v1154
        %1223 = vst [vmem:[%s277 + $0xb8] sm:$0xff] %v1155
        %1224 = vst [vmem:[%s277 + $0xc0] sm:$0xff] %v1156
        %1225 = vst [vmem:[%s277 + $0xc8] sm:$0xff] %v1157
        %1226 = vst [vmem:[%s277 + $0xd0] sm:$0xff] %v1158
        %1227 = vst [vmem:[%s277 + $0xd8] sm:$0xff] %v1159
        %1228 = vst [vmem:[%s277 + $0xe0] sm:$0xff] %v1160
        %1229 = vst [vmem:[%s277 + $0xe8] sm:$0xff] %v1161
        %1230 = vst [vmem:[%s277 + $0xf0] sm:$0xff] %v1162
        %1231 = vst [vmem:[%s277 + $0xf8] sm:$0xff] %v1163
        %1232 = vst [vmem:[%s277 + $0x100] sm:$0xff] %v1164
        %1233 = vst [vmem:[%s277 + $0x108] sm:$0xff] %v1165
        %1234 = vst [vmem:[%s277 + $0x110] sm:$0xff] %v1166
        %1235 = vst [vmem:[%s277 + $0x118] sm:$0xff] %v1167
        %1236 = vst [vmem:[%s277 + $0x120] sm:$0xff] %v1168
        %1237 = vst [vmem:[%s277 + $0x128] sm:$0xff] %v1169
        %1238 = vst [vmem:[%s277 + $0x130] sm:$0xff] %v1170
        %1239 = vst [vmem:[%s277 + $0x138] sm:$0xff] %v1171
        %1240 = vst [vmem:[%s277 + $0x140] sm:$0xff] %v1172
        %1241 = vst [vmem:[%s277 + $0x148] sm:$0xff] %v1173
        %1242 = vst [vmem:[%s277 + $0x150] sm:$0xff] %v1174
        %1243 = vst [vmem:[%s277 + $0x158] sm:$0xff] %v1175
        %1244 = vst [vmem:[%s277 + $0x160] sm:$0xff] %v1176
        %1245 = vst [vmem:[%s277 + $0x168] sm:$0xff] %v1177
        %1246 = vst [vmem:[%s277 + $0x170] sm:$0xff] %v1178
        %1247 = vst [vmem:[%s277 + $0x178] sm:$0xff] %v1179
        %1248 = vst [vmem:[%s277 + $0x180] sm:$0xff] %v1180
        %1249 = vst [vmem:[%s277 + $0x188] sm:$0xff] %v1181
        %1250 = vst [vmem:[%s277 + $0x190] sm:$0xff] %v1182
        %1251 = vst [vmem:[%s277 + $0x198] sm:$0xff] %v1183
        %1252 = vst [vmem:[%s277 + $0x1a0] sm:$0xff] %v1184
        %1253 = vst [vmem:[%s277 + $0x1a8] sm:$0xff] %v1185
        %1254 = vst [vmem:[%s277 + $0x1b0] sm:$0xff] %v1186
        %1255 = vst [vmem:[%s277 + $0x1b8] sm:$0xff] %v1187
        %1256 = vst [vmem:[%s277 + $0x1c0] sm:$0xff] %v1188
        %1257 = vst [vmem:[%s277 + $0x1c8] sm:$0xff] %v1189
        %1258 = vst [vmem:[%s277 + $0x1d0] sm:$0xff] %v1190
        %1259 = vst [vmem:[%s277 + $0x1d8] sm:$0xff] %v1191
        %1260 = vst [vmem:[%s277 + $0x1e0] sm:$0xff] %v1192
        %1261 = vst [vmem:[%s277 + $0x1e8] sm:$0xff] %v1193
        %1262 = vst [vmem:[%s277 + $0x1f0] sm:$0xff] %v1194
        %1263 = vst [vmem:[%s277 + $0x1f8] sm:$0xff] %v1195
        %1264 = vst [vmem:[%s277 + $0x200] sm:$0xff] %v1196
        %1265 = vst [vmem:[%s277 + $0x208] sm:$0xff] %v1197
        %1266 = vst [vmem:[%s277 + $0x210] sm:$0xff] %v1198
        %1267 = vst [vmem:[%s277 + $0x218] sm:$0xff] %v1199
        %s1268 = sand.u32 %s112, 1
        %s1269 = sand.u32 %s112, 1
        %s1270 = smul.addr %s1269, 544
        %s1271 = scalar_lea.vmem [#allocation3], %s1270
        // Predicated region
        $region60: #{generator_conv_forward.13} parent=54 // pred_check
          %p1272 = pneg %p122
        $region61: #{generator_conv_forward.13} parent=54 // pred_check_branch
          %1274 = sbr.rel (%p1272) target = $region63
        $region62: #{generator_conv_forward.13} parent=54 // pred_region
          %s1275 = smul.u32 34, %s15
          %s1276 = smul.addr %s1275, 8
          %s1277 = scalar_lea.vmem %s4, %s1276
          // Predicated region
          $region64: #{generator_conv_forward.13} parent=62 // pred_check
            _
          $region65: #{generator_conv_forward.13} parent=62 // pred_check_branch
            %1279 = sbr.rel (0) target = $region67
          $region66: #{generator_conv_forward.13} parent=62 // pred_region
            // Predicated region
            $region68: #{generator_conv_forward.13} parent=66 // pred_check
              _
            $region69: #{generator_conv_forward.13} parent=66 // pred_check_branch
              %1281 = sbr.rel (0) target = $region71
            $region70: #{generator_conv_forward.13} parent=66 // pred_region
              loop: start=0, step=1, limit=1
              $region72: #{generator_conv_forward.13} parent=70 // loop_pre_header
                _
              $region73: #{generator_conv_forward.13} parent=70 // loop_header
                %s1283 = sphi 0, %s1287
                %p1284 = scmp.ge.s32.totalorder %s1283, 1
                %s1288 = sphi %s1271, %s1271
                %s1289 = sphi %s1277, %s1277
              $region74: #{generator_conv_forward.13} parent=70 // loop_header_branch
                %1286 = sbr.rel (%p1284) target = $region78
              $region75: #{generator_conv_forward.13} parent=70 // loop_body
                %v1290 = vld [vmem:[%s1288] sm:$0xff]
                %1291 = vst [vmem:[%s1289] sm:$0xff] %v1290
                %v1292 = vld [vmem:[%s1288 + $0x8] sm:$0xff]
                %1293 = vst [vmem:[%s1289 + $0x8] sm:$0xff] %v1292
                %v1294 = vld [vmem:[%s1288 + $0x10] sm:$0xff]
                %1295 = vst [vmem:[%s1289 + $0x10] sm:$0xff] %v1294
                %v1296 = vld [vmem:[%s1288 + $0x18] sm:$0xff]
                %1297 = vst [vmem:[%s1289 + $0x18] sm:$0xff] %v1296
                %v1298 = vld [vmem:[%s1288 + $0x20] sm:$0xff]
                %1299 = vst [vmem:[%s1289 + $0x20] sm:$0xff] %v1298
                %v1300 = vld [vmem:[%s1288 + $0x28] sm:$0xff]
                %1301 = vst [vmem:[%s1289 + $0x28] sm:$0xff] %v1300
                %v1302 = vld [vmem:[%s1288 + $0x30] sm:$0xff]
                %1303 = vst [vmem:[%s1289 + $0x30] sm:$0xff] %v1302
                %v1304 = vld [vmem:[%s1288 + $0x38] sm:$0xff]
                %1305 = vst [vmem:[%s1289 + $0x38] sm:$0xff] %v1304
                %v1306 = vld [vmem:[%s1288 + $0x40] sm:$0xff]
                %1307 = vst [vmem:[%s1289 + $0x40] sm:$0xff] %v1306
                %v1308 = vld [vmem:[%s1288 + $0x48] sm:$0xff]
                %1309 = vst [vmem:[%s1289 + $0x48] sm:$0xff] %v1308
                %v1310 = vld [vmem:[%s1288 + $0x50] sm:$0xff]
                %1311 = vst [vmem:[%s1289 + $0x50] sm:$0xff] %v1310
                %v1312 = vld [vmem:[%s1288 + $0x58] sm:$0xff]
                %1313 = vst [vmem:[%s1289 + $0x58] sm:$0xff] %v1312
                %v1314 = vld [vmem:[%s1288 + $0x60] sm:$0xff]
                %1315 = vst [vmem:[%s1289 + $0x60] sm:$0xff] %v1314
                %v1316 = vld [vmem:[%s1288 + $0x68] sm:$0xff]
                %1317 = vst [vmem:[%s1289 + $0x68] sm:$0xff] %v1316
                %v1318 = vld [vmem:[%s1288 + $0x70] sm:$0xff]
                %1319 = vst [vmem:[%s1289 + $0x70] sm:$0xff] %v1318
                %v1320 = vld [vmem:[%s1288 + $0x78] sm:$0xff]
                %1321 = vst [vmem:[%s1289 + $0x78] sm:$0xff] %v1320
                %v1322 = vld [vmem:[%s1288 + $0x80] sm:$0xff]
                %1323 = vst [vmem:[%s1289 + $0x80] sm:$0xff] %v1322
                %v1324 = vld [vmem:[%s1288 + $0x88] sm:$0xff]
                %1325 = vst [vmem:[%s1289 + $0x88] sm:$0xff] %v1324
                %v1326 = vld [vmem:[%s1288 + $0x90] sm:$0xff]
                %1327 = vst [vmem:[%s1289 + $0x90] sm:$0xff] %v1326
                %v1328 = vld [vmem:[%s1288 + $0x98] sm:$0xff]
                %1329 = vst [vmem:[%s1289 + $0x98] sm:$0xff] %v1328
                %v1330 = vld [vmem:[%s1288 + $0xa0] sm:$0xff]
                %1331 = vst [vmem:[%s1289 + $0xa0] sm:$0xff] %v1330
                %v1332 = vld [vmem:[%s1288 + $0xa8] sm:$0xff]
                %1333 = vst [vmem:[%s1289 + $0xa8] sm:$0xff] %v1332
                %v1334 = vld [vmem:[%s1288 + $0xb0] sm:$0xff]
                %1335 = vst [vmem:[%s1289 + $0xb0] sm:$0xff] %v1334
                %v1336 = vld [vmem:[%s1288 + $0xb8] sm:$0xff]
                %1337 = vst [vmem:[%s1289 + $0xb8] sm:$0xff] %v1336
                %v1338 = vld [vmem:[%s1288 + $0xc0] sm:$0xff]
                %1339 = vst [vmem:[%s1289 + $0xc0] sm:$0xff] %v1338
                %v1340 = vld [vmem:[%s1288 + $0xc8] sm:$0xff]
                %1341 = vst [vmem:[%s1289 + $0xc8] sm:$0xff] %v1340
                %v1342 = vld [vmem:[%s1288 + $0xd0] sm:$0xff]
                %1343 = vst [vmem:[%s1289 + $0xd0] sm:$0xff] %v1342
                %v1344 = vld [vmem:[%s1288 + $0xd8] sm:$0xff]
                %1345 = vst [vmem:[%s1289 + $0xd8] sm:$0xff] %v1344
                %v1346 = vld [vmem:[%s1288 + $0xe0] sm:$0xff]
                %1347 = vst [vmem:[%s1289 + $0xe0] sm:$0xff] %v1346
                %v1348 = vld [vmem:[%s1288 + $0xe8] sm:$0xff]
                %1349 = vst [vmem:[%s1289 + $0xe8] sm:$0xff] %v1348
                %v1350 = vld [vmem:[%s1288 + $0xf0] sm:$0xff]
                %1351 = vst [vmem:[%s1289 + $0xf0] sm:$0xff] %v1350
                %v1352 = vld [vmem:[%s1288 + $0xf8] sm:$0xff]
                %1353 = vst [vmem:[%s1289 + $0xf8] sm:$0xff] %v1352
                %v1354 = vld [vmem:[%s1288 + $0x100] sm:$0xff]
                %1355 = vst [vmem:[%s1289 + $0x100] sm:$0xff] %v1354
                %v1356 = vld [vmem:[%s1288 + $0x108] sm:$0xff]
                %1357 = vst [vmem:[%s1289 + $0x108] sm:$0xff] %v1356
                %v1358 = vld [vmem:[%s1288 + $0x110] sm:$0xff]
                %1359 = vst [vmem:[%s1289 + $0x220] sm:$0xff] %v1358
                %v1360 = vld [vmem:[%s1288 + $0x118] sm:$0xff]
                %1361 = vst [vmem:[%s1289 + $0x228] sm:$0xff] %v1360
                %v1362 = vld [vmem:[%s1288 + $0x120] sm:$0xff]
                %1363 = vst [vmem:[%s1289 + $0x230] sm:$0xff] %v1362
                %v1364 = vld [vmem:[%s1288 + $0x128] sm:$0xff]
                %1365 = vst [vmem:[%s1289 + $0x238] sm:$0xff] %v1364
                %v1366 = vld [vmem:[%s1288 + $0x130] sm:$0xff]
                %1367 = vst [vmem:[%s1289 + $0x240] sm:$0xff] %v1366
                %v1368 = vld [vmem:[%s1288 + $0x138] sm:$0xff]
                %1369 = vst [vmem:[%s1289 + $0x248] sm:$0xff] %v1368
                %v1370 = vld [vmem:[%s1288 + $0x140] sm:$0xff]
                %1371 = vst [vmem:[%s1289 + $0x250] sm:$0xff] %v1370
                %v1372 = vld [vmem:[%s1288 + $0x148] sm:$0xff]
                %1373 = vst [vmem:[%s1289 + $0x258] sm:$0xff] %v1372
                %v1374 = vld [vmem:[%s1288 + $0x150] sm:$0xff]
                %1375 = vst [vmem:[%s1289 + $0x260] sm:$0xff] %v1374
                %v1376 = vld [vmem:[%s1288 + $0x158] sm:$0xff]
                %1377 = vst [vmem:[%s1289 + $0x268] sm:$0xff] %v1376
                %v1378 = vld [vmem:[%s1288 + $0x160] sm:$0xff]
                %1379 = vst [vmem:[%s1289 + $0x270] sm:$0xff] %v1378
                %v1380 = vld [vmem:[%s1288 + $0x168] sm:$0xff]
                %1381 = vst [vmem:[%s1289 + $0x278] sm:$0xff] %v1380
                %v1382 = vld [vmem:[%s1288 + $0x170] sm:$0xff]
                %1383 = vst [vmem:[%s1289 + $0x280] sm:$0xff] %v1382
                %v1384 = vld [vmem:[%s1288 + $0x178] sm:$0xff]
                %1385 = vst [vmem:[%s1289 + $0x288] sm:$0xff] %v1384
                %v1386 = vld [vmem:[%s1288 + $0x180] sm:$0xff]
                %1387 = vst [vmem:[%s1289 + $0x290] sm:$0xff] %v1386
                %v1388 = vld [vmem:[%s1288 + $0x188] sm:$0xff]
                %1389 = vst [vmem:[%s1289 + $0x298] sm:$0xff] %v1388
                %v1390 = vld [vmem:[%s1288 + $0x190] sm:$0xff]
                %1391 = vst [vmem:[%s1289 + $0x2a0] sm:$0xff] %v1390
                %v1392 = vld [vmem:[%s1288 + $0x198] sm:$0xff]
                %1393 = vst [vmem:[%s1289 + $0x2a8] sm:$0xff] %v1392
                %v1394 = vld [vmem:[%s1288 + $0x1a0] sm:$0xff]
                %1395 = vst [vmem:[%s1289 + $0x2b0] sm:$0xff] %v1394
                %v1396 = vld [vmem:[%s1288 + $0x1a8] sm:$0xff]
                %1397 = vst [vmem:[%s1289 + $0x2b8] sm:$0xff] %v1396
                %v1398 = vld [vmem:[%s1288 + $0x1b0] sm:$0xff]
                %1399 = vst [vmem:[%s1289 + $0x2c0] sm:$0xff] %v1398
                %v1400 = vld [vmem:[%s1288 + $0x1b8] sm:$0xff]
                %1401 = vst [vmem:[%s1289 + $0x2c8] sm:$0xff] %v1400
                %v1402 = vld [vmem:[%s1288 + $0x1c0] sm:$0xff]
                %1403 = vst [vmem:[%s1289 + $0x2d0] sm:$0xff] %v1402
                %v1404 = vld [vmem:[%s1288 + $0x1c8] sm:$0xff]
                %1405 = vst [vmem:[%s1289 + $0x2d8] sm:$0xff] %v1404
                %v1406 = vld [vmem:[%s1288 + $0x1d0] sm:$0xff]
                %1407 = vst [vmem:[%s1289 + $0x2e0] sm:$0xff] %v1406
                %v1408 = vld [vmem:[%s1288 + $0x1d8] sm:$0xff]
                %1409 = vst [vmem:[%s1289 + $0x2e8] sm:$0xff] %v1408
                %v1410 = vld [vmem:[%s1288 + $0x1e0] sm:$0xff]
                %1411 = vst [vmem:[%s1289 + $0x2f0] sm:$0xff] %v1410
                %v1412 = vld [vmem:[%s1288 + $0x1e8] sm:$0xff]
                %1413 = vst [vmem:[%s1289 + $0x2f8] sm:$0xff] %v1412
                %v1414 = vld [vmem:[%s1288 + $0x1f0] sm:$0xff]
                %1415 = vst [vmem:[%s1289 + $0x300] sm:$0xff] %v1414
                %v1416 = vld [vmem:[%s1288 + $0x1f8] sm:$0xff]
                %1417 = vst [vmem:[%s1289 + $0x308] sm:$0xff] %v1416
                %v1418 = vld [vmem:[%s1288 + $0x200] sm:$0xff]
                %1419 = vst [vmem:[%s1289 + $0x310] sm:$0xff] %v1418
                %v1420 = vld [vmem:[%s1288 + $0x208] sm:$0xff]
                %1421 = vst [vmem:[%s1289 + $0x318] sm:$0xff] %v1420
                %v1422 = vld [vmem:[%s1288 + $0x210] sm:$0xff]
                %1423 = vst [vmem:[%s1289 + $0x320] sm:$0xff] %v1422
                %v1424 = vld [vmem:[%s1288 + $0x218] sm:$0xff]
                %1425 = vst [vmem:[%s1289 + $0x328] sm:$0xff] %v1424
              $region76: #{generator_conv_forward.13} parent=70 // loop_footer
                %s1287 = sadd.s32 1, %s1283
              $region77: #{generator_conv_forward.13} parent=70 // loop_footer_branch
                %1282 = sbr.rel target = $region73
              $region78: #{generator_conv_forward.13} parent=70 // loop_exit
                _
            $region71: #{generator_conv_forward.13} parent=66 // pred_fallthru
              _
            // Predicated region
            $region79: #{generator_conv_forward.13} parent=66 // pred_check
              _
            $region80: #{generator_conv_forward.13} parent=66 // pred_check_branch
              %1427 = sbr.rel target = $region82
            $region81: #{generator_conv_forward.13} parent=66 // pred_region
              _
            $region82: #{generator_conv_forward.13} parent=66 // pred_fallthru
              _
          $region67: #{generator_conv_forward.13} parent=62 // pred_fallthru
            _
          %1428 = vnop
        $region63: #{generator_conv_forward.13} parent=54 // pred_fallthru
          _
      $region55: #{generator_conv_forward.13} parent=5 // pred_fallthru
        _
      %p1429 = scmp.le.s32.totalorder 2, %s10
      // Predicated region
      $region83: #{generator_conv_forward.13} parent=5 // pred_check
        %p1430 = pneg %p1429
      $region84: #{generator_conv_forward.13} parent=5 // pred_check_branch
        %1432 = sbr.rel (%p1430) target = $region86
      $region85: #{generator_conv_forward.13} parent=5 // pred_region
        %s1433 = ssub.s32 %s10, 2
        // Predicated region
        $region87: #{generator_conv_forward.13} parent=85 // pred_check
          %p1434 = pneg %p128
        $region88: #{generator_conv_forward.13} parent=85 // pred_check_branch
          %1436 = sbr.rel (%p1434) target = $region90
        $region89: #{generator_conv_forward.13} parent=85 // pred_region
          %s1437 = sand.u32 %s113, 1
          %s1438 = sand.u32 %s113, 1
          %s1439 = smul.addr %s1438, 544
          %s1440 = scalar_lea.vmem [#allocation3], %s1439
        $region90: #{generator_conv_forward.13} parent=85 // pred_fallthru
          _
      $region86: #{generator_conv_forward.13} parent=5 // pred_fallthru
        _
    $region6: #{generator_conv_forward.13} parent=1 // loop_footer
      %s14 = sadd.s32 1, %s10
    $region7: #{generator_conv_forward.13} parent=1 // loop_footer_branch
      %9 = sbr.rel target = $region3
    $region8: #{generator_conv_forward.13} parent=1 // loop_exit
      _

</llo_original>
